<compile_context>
chip_gen: v7x
topology: tpu7x:2x2x1
jax: 0.10.0
libtpu: 0.0.40
codegen_flags: <defaults>
</compile_context>

<pallas_src>
import functools
import math

import jax
import jax.numpy as jnp
from jax.experimental import pallas as pl
from jax.experimental.pallas import tpu as pltpu


_PACK_ORDER = ("wqkv_x", "wqkv_p", "bqkv", "wo", "bo",
               "w1", "b1", "w2", "b2", "ln1w", "ln1b", "ln2w", "ln2b")


def _round_up(x, m):
    return ((x + m - 1) // m) * m


# ----------------------------- Pallas kernel --------------------------------

def _encoder_stack_kernel(src_ref, pos_ref, mask_ref,
                          wqkv_x_ref, wqkv_p_ref, bqkv_ref, wo_ref, bo_ref,
                          w1_ref, b1_ref, w2_ref, b2_ref,
                          ln1w_ref, ln1b_ref, ln2w_ref, ln2b_ref,
                          o_ref, *, num_layers, nhead, d_model, head_dim):
    """Full post-norm encoder stack for one batch element."""
    L = src_ref.shape[1]
    hd = head_dim
    inv_d = 1.0 / d_model

    x = src_ref[0]                    # (L, DP)  f32, padded lanes are exactly 0
    pos = pos_ref[0]                  # (L, DP)

    # Additive key-padding bias (0 valid / -1e30 pad), built once; (1, L)
    # broadcasts over score rows for every head and layer.
    bias = jnp.where(mask_ref[0] > 0.5, 0.0, -1e30).astype(jnp.float32)  # (1, L)

    def layer_norm(y, gamma, beta):
        # Padded lanes of y are exactly 0 (packing invariants), so sums over
        # the padded lane dim equal sums over the real d_model lanes; gamma /
        # beta are zero-padded so the output's padded lanes stay 0.
        mu = jnp.sum(y, axis=-1, keepdims=True) * inv_d
        var = jnp.sum(y * y, axis=-1, keepdims=True) * inv_d - mu * mu
        return (y - mu) * jax.lax.rsqrt(var + 1e-5) * gamma + beta

    # Static unroll over layers: all weights stay VMEM-resident.
    for l in range(num_layers):
        # Fused Q|K|V projection for all heads in two fat matmuls:
        #   q = k = (x + pos) @ W{q,k},  v = x @ Wv
        # split into an x-part and a pos-part so v never sees pos.
        # Wq / bq are pre-scaled by 1/sqrt(head_dim) on the host.
        qkv = (jnp.dot(x, wqkv_x_ref[l], preferred_element_type=jnp.float32)
               + jnp.dot(pos, wqkv_p_ref[l], preferred_element_type=jnp.float32)
               + bqkv_ref[l])                                   # (L, 3*d_model)

        wo_l = wo_ref[l]                                        # (nhead, hd, DP)
        attn = None
        for h in range(nhead):
            q_h = qkv[:, h * hd:(h + 1) * hd]                             # (L, hd)
            k_h = qkv[:, d_model + h * hd:d_model + (h + 1) * hd]
            v_h = qkv[:, 2 * d_model + h * hd:2 * d_model + (h + 1) * hd]

            s = jax.lax.dot_general(q_h, k_h, (((1,), (1,)), ((), ())),
                                    preferred_element_type=jnp.float32)   # (L, L)
            s = s + bias
            s = s - jnp.max(s, axis=-1, keepdims=True)
            p = jnp.exp(s)
            r = jnp.sum(p, axis=-1, keepdims=True)                         # (L, 1)

            o_h = jnp.dot(p, v_h, preferred_element_type=jnp.float32)      # (L, hd)
            # Deferred softmax normalization: scale the (L, hd) output, not
            # the (L, L) probability tile.
            o_h = o_h * pl.reciprocal(r, approx=True)

            c = jnp.dot(o_h, wo_l[h], preferred_element_type=jnp.float32)  # (L, DP)
            attn = c if attn is None else attn + c
        attn = attn + bo_ref[l]

        # residual + LayerNorm1  (eps = 1e-5, PyTorch default)
        x1 = layer_norm(x + attn, ln1w_ref[l], ln1b_ref[l])

        # FFN: linear1 -> relu -> linear2 (weights pre-transposed / padded)
        h1 = jnp.maximum(
            jnp.dot(x1, w1_ref[l], preferred_element_type=jnp.float32)
            + b1_ref[l], 0.0)
        h2 = jnp.dot(h1, w2_ref[l],
                     preferred_element_type=jnp.float32) + b2_ref[l]

        # residual + LayerNorm2
        x = layer_norm(x1 + h2, ln2w_ref[l], ln2b_ref[l])

    o_ref[0] = x.astype(o_ref.dtype)      # lane-dense (L, DP) store


def encoder_stack_pallas(src, pos, mask, packed, *, nhead, d_model):
    """src, pos: (B, L, DP) zero-padded; mask: (B, 1, L) float (1=valid)."""
    B, L, DP = src.shape
    num_layers = packed["wqkv_x"].shape[0]
    head_dim = d_model // nhead
    FP = packed["w1"].shape[2]

    def _full_spec(arr):
        n = arr.ndim
        return pl.BlockSpec(arr.shape, lambda b, n=n: (0,) * n)

    in_specs = [
        pl.BlockSpec((1, L, DP), lambda b: (b, 0, 0)),   # src
        pl.BlockSpec((1, L, DP), lambda b: (b, 0, 0)),   # pos
        pl.BlockSpec((1, 1, L), lambda b: (b, 0, 0)),    # key-padding mask
    ] + [_full_spec(packed[k]) for k in _PACK_ORDER]     # stacked layer weights

    # Advisory cost estimate so XLA schedules the surrounding ops sensibly.
    flops = B * num_layers * (
        2 * 2 * L * DP * 3 * d_model                      # fused qkv projections
        + nhead * (2 * 2 * L * L * head_dim               # scores + p@v
                   + 2 * L * head_dim * DP)               # out projection
        + 2 * L * DP * FP + 2 * L * FP * DP)              # FFN
    transcendentals = B * num_layers * (nhead * L * L + 4 * L)
    weight_bytes = sum(packed[k].nbytes for k in _PACK_ORDER)
    bytes_accessed = (src.nbytes + pos.nbytes + mask.nbytes
                      + B * L * DP * 4 + weight_bytes)

    # VMEM guard: full weight residency + double-buffered activation blocks,
    # clamped to what is physically available on every generation (<=64 MiB).
    block_bytes = (3 * L * DP + L) * 4
    est = 2 * (weight_bytes + block_bytes) + (1 << 20)
    vmem_limit = int(min(64 * 2**20, max(32 * 2**20, est)))

    return pl.pallas_call(
        functools.partial(_encoder_stack_kernel, num_layers=num_layers,
                          nhead=nhead, d_model=d_model, head_dim=head_dim),
        out_shape=jax.ShapeDtypeStruct((B, L, DP), src.dtype),
        grid_spec=pltpu.PrefetchScalarGridSpec(
            num_scalar_prefetch=0,
            grid=(B,),
            in_specs=in_specs,
            out_specs=pl.BlockSpec((1, L, DP), lambda b: (b, 0, 0)),
        ),
        compiler_params=pltpu.CompilerParams(
            dimension_semantics=("parallel",),
            vmem_limit_bytes=vmem_limit),
        cost_estimate=pl.CostEstimate(flops=int(flops),
                                      transcendentals=int(transcendentals),
                                      bytes_accessed=int(bytes_accessed)),
    )(src, pos, mask, *[packed[k] for k in _PACK_ORDER])


# --------------------------- parameter construction --------------------------

def _xavier(key, shape):
    fan_out, fan_in = shape
    bound = math.sqrt(6.0 / (fan_in + fan_out))
    return jax.random.uniform(key, shape, jnp.float32, -bound, bound)


def make_layer_params(key, d_model, nhead, dim_feedforward):
    """PyTorch-layout parameters of one TransformerEncoderLayer."""
    ks = jax.random.split(key, 4)
    return {
        "in_w": _xavier(ks[0], (3 * d_model, d_model)),   # in_proj_weight
        "in_b": jnp.zeros((3 * d_model,), jnp.float32),
        "out_w": _xavier(ks[1], (d_model, d_model)),      # out_proj.weight
        "out_b": jnp.zeros((d_model,), jnp.float32),
        "lin1_w": _xavier(ks[2], (dim_feedforward, d_model)),
        "lin1_b": jnp.zeros((dim_feedforward,), jnp.float32),
        "lin2_w": _xavier(ks[3], (d_model, dim_feedforward)),
        "lin2_b": jnp.zeros((d_model,), jnp.float32),
        "ln1_w": jnp.ones((d_model,), jnp.float32),
        "ln1_b": jnp.zeros((d_model,), jnp.float32),
        "ln2_w": jnp.ones((d_model,), jnp.float32),
        "ln2_b": jnp.zeros((d_model,), jnp.float32),
    }


def pack_layer_params(layer_params, d_model, nhead, dim_feedforward):
    """Host-side one-time transform: fuse QKV, fold the query scale, transpose,
    zero-pad to lane-dense shapes and stack along a leading layer axis."""
    hd = d_model // nhead
    DP = _round_up(d_model, 128)
    FP = _round_up(dim_feedforward, 128)
    scale = 1.0 / math.sqrt(hd)

    def pad_vec(v, n):
        return jnp.pad(v, (0, n - v.shape[0]))

    per = {k: [] for k in _PACK_ORDER}
    for p in layer_params:
        # q / k / v projection weights (PyTorch: y = x @ W^T + b), query
        # weight/bias pre-scaled by 1/sqrt(head_dim).
        wq_t = p["in_w"][:d_model].T * scale               # (d, d)
        wk_t = p["in_w"][d_model:2 * d_model].T
        wv_t = p["in_w"][2 * d_model:].T
        bq = p["in_b"][:d_model] * scale
        bk = p["in_b"][d_model:2 * d_model]
        bv = p["in_b"][2 * d_model:]

        # Fused QKV weight, split into the x-part (q,k,v) and pos-part (q,k,0)
        # so v = x @ Wv while q = k = (x + pos) @ W{q,k}.
        wx = jnp.concatenate([wq_t, wk_t, wv_t], axis=1)                 # (d, 3d)
        wp = jnp.concatenate([wq_t, wk_t, jnp.zeros_like(wv_t)], axis=1)
        per["wqkv_x"].append(jnp.pad(wx, ((0, DP - d_model), (0, 0))))   # (DP, 3d)
        per["wqkv_p"].append(jnp.pad(wp, ((0, DP - d_model), (0, 0))))
        per["bqkv"].append(jnp.concatenate([bq, bk, bv]).reshape(1, 3 * d_model))

        # Output projection: per head (hd, DP); padded output columns are zero.
        wo_t = jnp.pad(p["out_w"].T, ((0, 0), (0, DP - d_model)))        # (d, DP)
        per["wo"].append(wo_t.reshape(nhead, hd, DP))
        per["bo"].append(pad_vec(p["out_b"], DP).reshape(1, DP))

        # FFN weights, pre-transposed and padded (padded rows/cols are zero).
        per["w1"].append(jnp.pad(p["lin1_w"].T,
                                 ((0, DP - d_model), (0, FP - dim_feedforward))))
        per["b1"].append(pad_vec(p["lin1_b"], FP).reshape(1, FP))
        per["w2"].append(jnp.pad(p["lin2_w"].T,
                                 ((0, FP - dim_feedforward), (0, DP - d_model))))
        per["b2"].append(pad_vec(p["lin2_b"], DP).reshape(1, DP))

        # LayerNorm gamma/beta zero-padded so padded lanes stay exactly 0.
        per["ln1w"].append(pad_vec(p["ln1_w"], DP).reshape(1, DP))
        per["ln1b"].append(pad_vec(p["ln1_b"], DP).reshape(1, DP))
        per["ln2w"].append(pad_vec(p["ln2_w"], DP).reshape(1, DP))
        per["ln2b"].append(pad_vec(p["ln2_b"], DP).reshape(1, DP))

    return {k: jnp.stack(v) for k, v in per.items()}


# ------------------------------ module wrapper -------------------------------

def cross_self_attention_forward(packed_params, src_vid, mask_vid, src_txt,
                                 mask_txt, vid_pos, txt_pos, *, nhead, d_model):
    """forward_self_first semantics (cross_first=False, eval mode)."""
    L_vid = src_vid.shape[1]
    DP = packed_params["wqkv_x"].shape[1]

    # concat vid/txt tokens, positions and masks along the sequence axis
    mask = jnp.concatenate([mask_vid, mask_txt], axis=1)[:, None, :]  # (B,1,L)
    src = jnp.concatenate([src_vid, src_txt], axis=1)                 # (B, L, D)
    pos = jnp.concatenate([vid_pos, txt_pos], axis=1)

    pad = DP - src.shape[-1]
    if pad:
        src = jnp.pad(src, ((0, 0), (0, 0), (0, pad)))
        pos = jnp.pad(pos, ((0, 0), (0, 0), (0, pad)))

    out = encoder_stack_pallas(src, pos, mask.astype(jnp.float32),
                               packed_params, nhead=nhead, d_model=d_model)
    out = out[:, :, :d_model]

    vid_out = out[:, :L_vid]
    txt_out = out[:, L_vid:]
    # TODO(synk): cross_encoder (BertConnectionLayer) source not provided;
    # pass-through of the encoder outputs here.
    return vid_out, txt_out


# ------------------------- pure-JAX reference (check) ------------------------

def _reference_encoder(layer_params, src, pos, mask, nhead):
    """Faithful port of TransformerEncoder(forward_post) in plain JAX."""
    B, L, d = src.shape
    hd = d // nhead

    def ln(y, g, b):
        mu = y.mean(-1, keepdims=True)
        var = ((y - mu) ** 2).mean(-1, keepdims=True)
        return (y - mu) / jnp.sqrt(var + 1e-5) * g + b

    bias = jnp.where(mask > 0.5, 0.0, -1e30)[:, None, None, :]   # (B,1,1,L)
    x = src
    for p in layer_params:
        xq = x + pos
        q = xq @ p["in_w"][:d].T + p["in_b"][:d]
        k = xq @ p["in_w"][d:2 * d].T + p["in_b"][d:2 * d]
        v = x @ p["in_w"][2 * d:].T + p["in_b"][2 * d:]

        def split(t):
            return t.reshape(B, L, nhead, hd).transpose(0, 2, 1, 3)

        qh = split(q) / math.sqrt(hd)
        kh, vh = split(k), split(v)
        s = jnp.einsum("bhqd,bhkd->bhqk", qh, kh) + bias
        pa = jax.nn.softmax(s, axis=-1)
        o = jnp.einsum("bhqk,bhkd->bhqd", pa, vh)
        o = o.transpose(0, 2, 1, 3).reshape(B, L, d)
        attn = o @ p["out_w"].T + p["out_b"]

        x = ln(x + attn, p["ln1_w"], p["ln1_b"])
        h = jnp.maximum(x @ p["lin1_w"].T + p["lin1_b"], 0.0)
        h2 = h @ p["lin2_w"].T + p["lin2_b"]
        x = ln(x + h2, p["ln2_w"], p["ln2_b"])
    return x


# ----------------------------------- main ------------------------------------

if __name__ == "__main__":
    B = 2
    L_VID, L_TXT = 16, 8
    D_MODEL, NHEAD, DIM_FF = 32, 4, 64
    NUM_LAYERS = 2

    key = jax.random.PRNGKey(0)
    k_vid, k_txt, k_pv, k_pt, k_params = jax.random.split(key, 5)

    src_vid = jax.random.normal(k_vid, (B, L_VID, D_MODEL), jnp.float32)
    src_txt = jax.random.normal(k_txt, (B, L_TXT, D_MODEL), jnp.float32)
    vid_pos = jax.random.normal(k_pv, (B, L_VID, D_MODEL), jnp.float32) * 0.1
    txt_pos = jax.random.normal(k_pt, (B, L_TXT, D_MODEL), jnp.float32) * 0.1

    # masks: 1.0 = valid token, 0.0 = padding (as in the PyTorch module)
    mask_vid = jnp.ones((B, L_VID), jnp.float32).at[1, 12:].set(0.0)
    mask_txt = jnp.ones((B, L_TXT), jnp.float32).at[1, 6:].set(0.0)

    layer_keys = jax.random.split(k_params, NUM_LAYERS)
    layer_params = [make_layer_params(k, D_MODEL, NHEAD, DIM_FF)
                    for k in layer_keys]
    packed = pack_layer_params(layer_params, D_MODEL, NHEAD, DIM_FF)

    fwd = jax.jit(functools.partial(cross_self_attention_forward,
                                    nhead=NHEAD, d_model=D_MODEL))
    vid_out, txt_out = fwd(packed, src_vid, mask_vid, src_txt, mask_txt,
                           vid_pos, txt_pos)
    jax.block_until_ready((vid_out, txt_out))

    assert vid_out.shape == (B, L_VID, D_MODEL)
    assert txt_out.shape == (B, L_TXT, D_MODEL)
    assert bool(jnp.all(jnp.isfinite(vid_out)))
    assert bool(jnp.all(jnp.isfinite(txt_out)))

    # Numerical check against a faithful pure-JAX port of the PyTorch module
    # (loose tolerance covers the approximate softmax reciprocal).
    ref = _reference_encoder(
        layer_params,
        jnp.concatenate([src_vid, src_txt], axis=1),
        jnp.concatenate([vid_pos, txt_pos], axis=1),
        jnp.concatenate([mask_vid, mask_txt], axis=1), NHEAD)
    ref_vid, ref_txt = ref[:, :L_VID], ref[:, L_VID:]
    assert float(jnp.max(jnp.abs(vid_out - ref_vid))) < 5e-2
    assert float(jnp.max(jnp.abs(txt_out - ref_txt))) < 5e-2

    print("KERNEL_OK")
</pallas_src>

<mosaic_0001>
module attributes {stable_mosaic.version = 11 : i64} {
  func.func @_encoder_stack_kernel(%arg0: i32, %arg1: memref<1x24x128xf32, #tpu.memory_space<vmem>>, %arg2: memref<1x24x128xf32, #tpu.memory_space<vmem>>, %arg3: memref<1x1x24xf32, #tpu.memory_space<vmem>>, %arg4: memref<2x128x96xf32, #tpu.memory_space<vmem>>, %arg5: memref<2x128x96xf32, #tpu.memory_space<vmem>>, %arg6: memref<2x1x96xf32, #tpu.memory_space<vmem>>, %arg7: memref<2x4x8x128xf32, #tpu.memory_space<vmem>>, %arg8: memref<2x1x128xf32, #tpu.memory_space<vmem>>, %arg9: memref<2x128x128xf32, #tpu.memory_space<vmem>>, %arg10: memref<2x1x128xf32, #tpu.memory_space<vmem>>, %arg11: memref<2x128x128xf32, #tpu.memory_space<vmem>>, %arg12: memref<2x1x128xf32, #tpu.memory_space<vmem>>, %arg13: memref<2x1x128xf32, #tpu.memory_space<vmem>>, %arg14: memref<2x1x128xf32, #tpu.memory_space<vmem>>, %arg15: memref<2x1x128xf32, #tpu.memory_space<vmem>>, %arg16: memref<2x1x128xf32, #tpu.memory_space<vmem>>, %arg17: memref<1x24x128xf32, #tpu.memory_space<vmem>>) attributes {dimension_semantics = [#tpu.dimension_semantics<parallel>], iteration_bounds = array<i64: 2>, scalar_prefetch = 0 : i64, scratch_operands = 0 : i64, tpu.core_type = #tpu.core_type<tc>, window_params = [{transform_indices = @transform_0, window_bounds = array<i64: 1, 24, 128>}, {transform_indices = @transform_1, window_bounds = array<i64: 1, 24, 128>}, {transform_indices = @transform_2, window_bounds = array<i64: 1, 1, 24>}, {pipeline_mode = #tpu.pipeline_mode<synchronous>, transform_indices = @transform_3, window_bounds = array<i64: 2, 128, 96>}, {pipeline_mode = #tpu.pipeline_mode<synchronous>, transform_indices = @transform_4, window_bounds = array<i64: 2, 128, 96>}, {pipeline_mode = #tpu.pipeline_mode<synchronous>, transform_indices = @transform_5, window_bounds = array<i64: 2, 1, 96>}, {pipeline_mode = #tpu.pipeline_mode<synchronous>, transform_indices = @transform_6, window_bounds = array<i64: 2, 4, 8, 128>}, {pipeline_mode = #tpu.pipeline_mode<synchronous>, transform_indices = @transform_7, window_bounds = array<i64: 2, 1, 128>}, {pipeline_mode = #tpu.pipeline_mode<synchronous>, transform_indices = @transform_8, window_bounds = array<i64: 2, 128, 128>}, {pipeline_mode = #tpu.pipeline_mode<synchronous>, transform_indices = @transform_9, window_bounds = array<i64: 2, 1, 128>}, {pipeline_mode = #tpu.pipeline_mode<synchronous>, transform_indices = @transform_10, window_bounds = array<i64: 2, 128, 128>}, {pipeline_mode = #tpu.pipeline_mode<synchronous>, transform_indices = @transform_11, window_bounds = array<i64: 2, 1, 128>}, {pipeline_mode = #tpu.pipeline_mode<synchronous>, transform_indices = @transform_12, window_bounds = array<i64: 2, 1, 128>}, {pipeline_mode = #tpu.pipeline_mode<synchronous>, transform_indices = @transform_13, window_bounds = array<i64: 2, 1, 128>}, {pipeline_mode = #tpu.pipeline_mode<synchronous>, transform_indices = @transform_14, window_bounds = array<i64: 2, 1, 128>}, {pipeline_mode = #tpu.pipeline_mode<synchronous>, transform_indices = @transform_15, window_bounds = array<i64: 2, 1, 128>}, {transform_indices = @transform_16, window_bounds = array<i64: 1, 24, 128>}]} {
    %c0 = arith.constant 0 : index
    %c0_0 = arith.constant 0 : index
    %c0_1 = arith.constant 0 : index
    %0 = vector.load %arg1[%c0, %c0_0, %c0_1] : memref<1x24x128xf32, #tpu.memory_space<vmem>>, vector<1x24x128xf32>
    %1 = vector.shape_cast %0 : vector<1x24x128xf32> to vector<24x128xf32>
    %c0_2 = arith.constant 0 : index
    %c0_3 = arith.constant 0 : index
    %c0_4 = arith.constant 0 : index
    %2 = vector.load %arg2[%c0_2, %c0_3, %c0_4] : memref<1x24x128xf32, #tpu.memory_space<vmem>>, vector<1x24x128xf32>
    %3 = vector.shape_cast %2 : vector<1x24x128xf32> to vector<24x128xf32>
    %c0_5 = arith.constant 0 : index
    %c0_6 = arith.constant 0 : index
    %c0_7 = arith.constant 0 : index
    %4 = vector.load %arg3[%c0_5, %c0_6, %c0_7] : memref<1x1x24xf32, #tpu.memory_space<vmem>>, vector<1x1x24xf32>
    %5 = vector.shape_cast %4 : vector<1x1x24xf32> to vector<1x24xf32>
    %cst = arith.constant 5.000000e-01 : f32
    %6 = vector.broadcast %cst : f32 to vector<1x24xf32>
    %7 = arith.cmpf ogt, %5, %6 : vector<1x24xf32>
    %cst_8 = arith.constant 0.000000e+00 : f32
    %cst_9 = arith.constant -1.000000e+30 : f32
    %8 = vector.broadcast %cst_8 : f32 to vector<1x24xf32>
    %9 = vector.broadcast %cst_9 : f32 to vector<1x24xf32>
    %10 = arith.select %7, %8, %9 : vector<1x24xi1>, vector<1x24xf32>
    %c0_10 = arith.constant 0 : index
    %c0_11 = arith.constant 0 : index
    %c0_12 = arith.constant 0 : index
    %11 = vector.load %arg4[%c0_10, %c0_11, %c0_12] : memref<2x128x96xf32, #tpu.memory_space<vmem>>, vector<1x128x96xf32>
    %12 = vector.shape_cast %11 : vector<1x128x96xf32> to vector<128x96xf32>
    %cst_13 = arith.constant dense<0.000000e+00> : vector<24x96xf32>
    %13 = tpu.matmul %1, %12, %cst_13 {dimension_numbers = #tpu.dot_dimension_numbers<[1], [0], [0], [1], [0, 0, 1, 1], [], []>} : vector<24x128xf32>, vector<128x96xf32>, vector<24x96xf32> -> vector<24x96xf32>
    %c0_14 = arith.constant 0 : index
    %c0_15 = arith.constant 0 : index
    %c0_16 = arith.constant 0 : index
    %14 = vector.load %arg5[%c0_14, %c0_15, %c0_16] : memref<2x128x96xf32, #tpu.memory_space<vmem>>, vector<1x128x96xf32>
    %15 = vector.shape_cast %14 : vector<1x128x96xf32> to vector<128x96xf32>
    %cst_17 = arith.constant dense<0.000000e+00> : vector<24x96xf32>
    %16 = tpu.matmul %3, %15, %cst_17 {dimension_numbers = #tpu.dot_dimension_numbers<[1], [0], [0], [1], [0, 0, 1, 1], [], []>} : vector<24x128xf32>, vector<128x96xf32>, vector<24x96xf32> -> vector<24x96xf32>
    %17 = arith.addf %13, %16 : vector<24x96xf32>
    %c0_18 = arith.constant 0 : index
    %c0_19 = arith.constant 0 : index
    %c0_20 = arith.constant 0 : index
    %18 = vector.load %arg6[%c0_18, %c0_19, %c0_20] : memref<2x1x96xf32, #tpu.memory_space<vmem>>, vector<1x1x96xf32>
    %19 = vector.shape_cast %18 : vector<1x1x96xf32> to vector<1x96xf32>
    %20 = vector.broadcast %19 : vector<1x96xf32> to vector<24x96xf32>
    %21 = arith.addf %17, %20 : vector<24x96xf32>
    %c0_21 = arith.constant 0 : index
    %c0_22 = arith.constant 0 : index
    %c0_23 = arith.constant 0 : index
    %c0_24 = arith.constant 0 : index
    %22 = vector.load %arg7[%c0_21, %c0_22, %c0_23, %c0_24] : memref<2x4x8x128xf32, #tpu.memory_space<vmem>>, vector<1x4x8x128xf32>
    %23 = vector.shape_cast %22 : vector<1x4x8x128xf32> to vector<4x8x128xf32>
    %24 = vector.extract_strided_slice %21 {offsets = [0, 0], sizes = [24, 8], strides = [1, 1]} : vector<24x96xf32> to vector<24x8xf32>
    %25 = vector.extract_strided_slice %21 {offsets = [0, 32], sizes = [24, 8], strides = [1, 1]} : vector<24x96xf32> to vector<24x8xf32>
    %26 = vector.extract_strided_slice %21 {offsets = [0, 64], sizes = [24, 8], strides = [1, 1]} : vector<24x96xf32> to vector<24x8xf32>
    %cst_25 = arith.constant dense<0.000000e+00> : vector<24x24xf32>
    %27 = tpu.matmul %24, %25, %cst_25 {dimension_numbers = #tpu.dot_dimension_numbers<[1], [1], [0], [0], [0, 0, 1, 0], [], []>} : vector<24x8xf32>, vector<24x8xf32>, vector<24x24xf32> -> vector<24x24xf32>
    %28 = vector.broadcast %10 : vector<1x24xf32> to vector<24x24xf32>
    %29 = arith.addf %27, %28 : vector<24x24xf32>
    %cst_26 = arith.constant dense<0xFF800000> : vector<24xf32>
    %30 = vector.multi_reduction <maximumf>, %29, %cst_26 [1] : vector<24x24xf32> to vector<24xf32>
    %31 = vector.shape_cast %30 : vector<24xf32> to vector<24x1xf32>
    %32 = vector.broadcast %31 : vector<24x1xf32> to vector<24x24xf32>
    %33 = arith.subf %29, %32 : vector<24x24xf32>
    %34 = math.exp %33 : vector<24x24xf32>
    %cst_27 = arith.constant dense<0.000000e+00> : vector<24xf32>
    %35 = vector.multi_reduction <add>, %34, %cst_27 [1] : vector<24x24xf32> to vector<24xf32>
    %36 = vector.shape_cast %35 : vector<24xf32> to vector<24x1xf32>
    %cst_28 = arith.constant dense<0.000000e+00> : vector<24x8xf32>
    %37 = tpu.matmul %34, %26, %cst_28 {dimension_numbers = #tpu.dot_dimension_numbers<[1], [0], [0], [1], [0, 0, 1, 1], [], []>} : vector<24x24xf32>, vector<24x8xf32>, vector<24x8xf32> -> vector<24x8xf32>
    %38 = tpu.reciprocal %36 {approx = true} : vector<24x1xf32> -> vector<24x1xf32>
    %39 = vector.broadcast %38 : vector<24x1xf32> to vector<24x8xf32>
    %40 = arith.mulf %37, %39 : vector<24x8xf32>
    %41 = vector.extract_strided_slice %23 {offsets = [0, 0, 0], sizes = [1, 8, 128], strides = [1, 1, 1]} : vector<4x8x128xf32> to vector<1x8x128xf32>
    %42 = vector.shape_cast %41 : vector<1x8x128xf32> to vector<8x128xf32>
    %cst_29 = arith.constant dense<0.000000e+00> : vector<24x128xf32>
    %43 = tpu.matmul %40, %42, %cst_29 {dimension_numbers = #tpu.dot_dimension_numbers<[1], [0], [0], [1], [0, 0, 1, 1], [], []>} : vector<24x8xf32>, vector<8x128xf32>, vector<24x128xf32> -> vector<24x128xf32>
    %44 = vector.extract_strided_slice %21 {offsets = [0, 8], sizes = [24, 8], strides = [1, 1]} : vector<24x96xf32> to vector<24x8xf32>
    %45 = vector.extract_strided_slice %21 {offsets = [0, 40], sizes = [24, 8], strides = [1, 1]} : vector<24x96xf32> to vector<24x8xf32>
    %46 = vector.extract_strided_slice %21 {offsets = [0, 72], sizes = [24, 8], strides = [1, 1]} : vector<24x96xf32> to vector<24x8xf32>
    %cst_30 = arith.constant dense<0.000000e+00> : vector<24x24xf32>
    %47 = tpu.matmul %44, %45, %cst_30 {dimension_numbers = #tpu.dot_dimension_numbers<[1], [1], [0], [0], [0, 0, 1, 0], [], []>} : vector<24x8xf32>, vector<24x8xf32>, vector<24x24xf32> -> vector<24x24xf32>
    %48 = vector.broadcast %10 : vector<1x24xf32> to vector<24x24xf32>
    %49 = arith.addf %47, %48 : vector<24x24xf32>
    %cst_31 = arith.constant dense<0xFF800000> : vector<24xf32>
    %50 = vector.multi_reduction <maximumf>, %49, %cst_31 [1] : vector<24x24xf32> to vector<24xf32>
    %51 = vector.shape_cast %50 : vector<24xf32> to vector<24x1xf32>
    %52 = vector.broadcast %51 : vector<24x1xf32> to vector<24x24xf32>
    %53 = arith.subf %49, %52 : vector<24x24xf32>
    %54 = math.exp %53 : vector<24x24xf32>
    %cst_32 = arith.constant dense<0.000000e+00> : vector<24xf32>
    %55 = vector.multi_reduction <add>, %54, %cst_32 [1] : vector<24x24xf32> to vector<24xf32>
    %56 = vector.shape_cast %55 : vector<24xf32> to vector<24x1xf32>
    %cst_33 = arith.constant dense<0.000000e+00> : vector<24x8xf32>
    %57 = tpu.matmul %54, %46, %cst_33 {dimension_numbers = #tpu.dot_dimension_numbers<[1], [0], [0], [1], [0, 0, 1, 1], [], []>} : vector<24x24xf32>, vector<24x8xf32>, vector<24x8xf32> -> vector<24x8xf32>
    %58 = tpu.reciprocal %56 {approx = true} : vector<24x1xf32> -> vector<24x1xf32>
    %59 = vector.broadcast %58 : vector<24x1xf32> to vector<24x8xf32>
    %60 = arith.mulf %57, %59 : vector<24x8xf32>
    %61 = vector.extract_strided_slice %23 {offsets = [1, 0, 0], sizes = [1, 8, 128], strides = [1, 1, 1]} : vector<4x8x128xf32> to vector<1x8x128xf32>
    %62 = vector.shape_cast %61 : vector<1x8x128xf32> to vector<8x128xf32>
    %cst_34 = arith.constant dense<0.000000e+00> : vector<24x128xf32>
    %63 = tpu.matmul %60, %62, %cst_34 {dimension_numbers = #tpu.dot_dimension_numbers<[1], [0], [0], [1], [0, 0, 1, 1], [], []>} : vector<24x8xf32>, vector<8x128xf32>, vector<24x128xf32> -> vector<24x128xf32>
    %64 = arith.addf %43, %63 : vector<24x128xf32>
    %65 = vector.extract_strided_slice %21 {offsets = [0, 16], sizes = [24, 8], strides = [1, 1]} : vector<24x96xf32> to vector<24x8xf32>
    %66 = vector.extract_strided_slice %21 {offsets = [0, 48], sizes = [24, 8], strides = [1, 1]} : vector<24x96xf32> to vector<24x8xf32>
    %67 = vector.extract_strided_slice %21 {offsets = [0, 80], sizes = [24, 8], strides = [1, 1]} : vector<24x96xf32> to vector<24x8xf32>
    %cst_35 = arith.constant dense<0.000000e+00> : vector<24x24xf32>
    %68 = tpu.matmul %65, %66, %cst_35 {dimension_numbers = #tpu.dot_dimension_numbers<[1], [1], [0], [0], [0, 0, 1, 0], [], []>} : vector<24x8xf32>, vector<24x8xf32>, vector<24x24xf32> -> vector<24x24xf32>
    %69 = vector.broadcast %10 : vector<1x24xf32> to vector<24x24xf32>
    %70 = arith.addf %68, %69 : vector<24x24xf32>
    %cst_36 = arith.constant dense<0xFF800000> : vector<24xf32>
    %71 = vector.multi_reduction <maximumf>, %70, %cst_36 [1] : vector<24x24xf32> to vector<24xf32>
    %72 = vector.shape_cast %71 : vector<24xf32> to vector<24x1xf32>
    %73 = vector.broadcast %72 : vector<24x1xf32> to vector<24x24xf32>
    %74 = arith.subf %70, %73 : vector<24x24xf32>
    %75 = math.exp %74 : vector<24x24xf32>
    %cst_37 = arith.constant dense<0.000000e+00> : vector<24xf32>
    %76 = vector.multi_reduction <add>, %75, %cst_37 [1] : vector<24x24xf32> to vector<24xf32>
    %77 = vector.shape_cast %76 : vector<24xf32> to vector<24x1xf32>
    %cst_38 = arith.constant dense<0.000000e+00> : vector<24x8xf32>
    %78 = tpu.matmul %75, %67, %cst_38 {dimension_numbers = #tpu.dot_dimension_numbers<[1], [0], [0], [1], [0, 0, 1, 1], [], []>} : vector<24x24xf32>, vector<24x8xf32>, vector<24x8xf32> -> vector<24x8xf32>
    %79 = tpu.reciprocal %77 {approx = true} : vector<24x1xf32> -> vector<24x1xf32>
    %80 = vector.broadcast %79 : vector<24x1xf32> to vector<24x8xf32>
    %81 = arith.mulf %78, %80 : vector<24x8xf32>
    %82 = vector.extract_strided_slice %23 {offsets = [2, 0, 0], sizes = [1, 8, 128], strides = [1, 1, 1]} : vector<4x8x128xf32> to vector<1x8x128xf32>
    %83 = vector.shape_cast %82 : vector<1x8x128xf32> to vector<8x128xf32>
    %cst_39 = arith.constant dense<0.000000e+00> : vector<24x128xf32>
    %84 = tpu.matmul %81, %83, %cst_39 {dimension_numbers = #tpu.dot_dimension_numbers<[1], [0], [0], [1], [0, 0, 1, 1], [], []>} : vector<24x8xf32>, vector<8x128xf32>, vector<24x128xf32> -> vector<24x128xf32>
    %85 = arith.addf %64, %84 : vector<24x128xf32>
    %86 = vector.extract_strided_slice %21 {offsets = [0, 24], sizes = [24, 8], strides = [1, 1]} : vector<24x96xf32> to vector<24x8xf32>
    %87 = vector.extract_strided_slice %21 {offsets = [0, 56], sizes = [24, 8], strides = [1, 1]} : vector<24x96xf32> to vector<24x8xf32>
    %88 = vector.extract_strided_slice %21 {offsets = [0, 88], sizes = [24, 8], strides = [1, 1]} : vector<24x96xf32> to vector<24x8xf32>
    %cst_40 = arith.constant dense<0.000000e+00> : vector<24x24xf32>
    %89 = tpu.matmul %86, %87, %cst_40 {dimension_numbers = #tpu.dot_dimension_numbers<[1], [1], [0], [0], [0, 0, 1, 0], [], []>} : vector<24x8xf32>, vector<24x8xf32>, vector<24x24xf32> -> vector<24x24xf32>
    %90 = vector.broadcast %10 : vector<1x24xf32> to vector<24x24xf32>
    %91 = arith.addf %89, %90 : vector<24x24xf32>
    %cst_41 = arith.constant dense<0xFF800000> : vector<24xf32>
    %92 = vector.multi_reduction <maximumf>, %91, %cst_41 [1] : vector<24x24xf32> to vector<24xf32>
    %93 = vector.shape_cast %92 : vector<24xf32> to vector<24x1xf32>
    %94 = vector.broadcast %93 : vector<24x1xf32> to vector<24x24xf32>
    %95 = arith.subf %91, %94 : vector<24x24xf32>
    %96 = math.exp %95 : vector<24x24xf32>
    %cst_42 = arith.constant dense<0.000000e+00> : vector<24xf32>
    %97 = vector.multi_reduction <add>, %96, %cst_42 [1] : vector<24x24xf32> to vector<24xf32>
    %98 = vector.shape_cast %97 : vector<24xf32> to vector<24x1xf32>
    %cst_43 = arith.constant dense<0.000000e+00> : vector<24x8xf32>
    %99 = tpu.matmul %96, %88, %cst_43 {dimension_numbers = #tpu.dot_dimension_numbers<[1], [0], [0], [1], [0, 0, 1, 1], [], []>} : vector<24x24xf32>, vector<24x8xf32>, vector<24x8xf32> -> vector<24x8xf32>
    %100 = tpu.reciprocal %98 {approx = true} : vector<24x1xf32> -> vector<24x1xf32>
    %101 = vector.broadcast %100 : vector<24x1xf32> to vector<24x8xf32>
    %102 = arith.mulf %99, %101 : vector<24x8xf32>
    %103 = vector.extract_strided_slice %23 {offsets = [3, 0, 0], sizes = [1, 8, 128], strides = [1, 1, 1]} : vector<4x8x128xf32> to vector<1x8x128xf32>
    %104 = vector.shape_cast %103 : vector<1x8x128xf32> to vector<8x128xf32>
    %cst_44 = arith.constant dense<0.000000e+00> : vector<24x128xf32>
    %105 = tpu.matmul %102, %104, %cst_44 {dimension_numbers = #tpu.dot_dimension_numbers<[1], [0], [0], [1], [0, 0, 1, 1], [], []>} : vector<24x8xf32>, vector<8x128xf32>, vector<24x128xf32> -> vector<24x128xf32>
    %106 = arith.addf %85, %105 : vector<24x128xf32>
    %c0_45 = arith.constant 0 : index
    %c0_46 = arith.constant 0 : index
    %c0_47 = arith.constant 0 : index
    %107 = vector.load %arg8[%c0_45, %c0_46, %c0_47] : memref<2x1x128xf32, #tpu.memory_space<vmem>>, vector<1x1x128xf32>
    %108 = vector.shape_cast %107 : vector<1x1x128xf32> to vector<1x128xf32>
    %109 = vector.broadcast %108 : vector<1x128xf32> to vector<24x128xf32>
    %110 = arith.addf %106, %109 : vector<24x128xf32>
    %111 = arith.addf %1, %110 : vector<24x128xf32>
    %c0_48 = arith.constant 0 : index
    %c0_49 = arith.constant 0 : index
    %c0_50 = arith.constant 0 : index
    %112 = vector.load %arg13[%c0_48, %c0_49, %c0_50] : memref<2x1x128xf32, #tpu.memory_space<vmem>>, vector<1x1x128xf32>
    %113 = vector.shape_cast %112 : vector<1x1x128xf32> to vector<1x128xf32>
    %c0_51 = arith.constant 0 : index
    %c0_52 = arith.constant 0 : index
    %c0_53 = arith.constant 0 : index
    %114 = vector.load %arg14[%c0_51, %c0_52, %c0_53] : memref<2x1x128xf32, #tpu.memory_space<vmem>>, vector<1x1x128xf32>
    %115 = vector.shape_cast %114 : vector<1x1x128xf32> to vector<1x128xf32>
    %cst_54 = arith.constant dense<0.000000e+00> : vector<24xf32>
    %116 = vector.multi_reduction <add>, %111, %cst_54 [1] : vector<24x128xf32> to vector<24xf32>
    %117 = vector.shape_cast %116 : vector<24xf32> to vector<24x1xf32>
    %cst_55 = arith.constant 3.125000e-02 : f32
    %118 = vector.broadcast %cst_55 : f32 to vector<24x1xf32>
    %119 = arith.mulf %117, %118 : vector<24x1xf32>
    %120 = arith.mulf %111, %111 : vector<24x128xf32>
    %cst_56 = arith.constant dense<0.000000e+00> : vector<24xf32>
    %121 = vector.multi_reduction <add>, %120, %cst_56 [1] : vector<24x128xf32> to vector<24xf32>
    %122 = vector.shape_cast %121 : vector<24xf32> to vector<24x1xf32>
    %cst_57 = arith.constant 3.125000e-02 : f32
    %123 = vector.broadcast %cst_57 : f32 to vector<24x1xf32>
    %124 = arith.mulf %122, %123 : vector<24x1xf32>
    %125 = arith.mulf %119, %119 : vector<24x1xf32>
    %126 = arith.subf %124, %125 : vector<24x1xf32>
    %127 = vector.broadcast %119 : vector<24x1xf32> to vector<24x128xf32>
    %128 = arith.subf %111, %127 : vector<24x128xf32>
    %cst_58 = arith.constant 9.99999974E-6 : f32
    %129 = vector.broadcast %cst_58 : f32 to vector<24x1xf32>
    %130 = arith.addf %126, %129 : vector<24x1xf32>
    %131 = math.rsqrt %130 : vector<24x1xf32>
    %132 = vector.broadcast %131 : vector<24x1xf32> to vector<24x128xf32>
    %133 = arith.mulf %128, %132 : vector<24x128xf32>
    %134 = vector.broadcast %113 : vector<1x128xf32> to vector<24x128xf32>
    %135 = arith.mulf %133, %134 : vector<24x128xf32>
    %136 = vector.broadcast %115 : vector<1x128xf32> to vector<24x128xf32>
    %137 = arith.addf %135, %136 : vector<24x128xf32>
    %c0_59 = arith.constant 0 : index
    %c0_60 = arith.constant 0 : index
    %c0_61 = arith.constant 0 : index
    %138 = vector.load %arg9[%c0_59, %c0_60, %c0_61] : memref<2x128x128xf32, #tpu.memory_space<vmem>>, vector<1x128x128xf32>
    %139 = vector.shape_cast %138 : vector<1x128x128xf32> to vector<128x128xf32>
    %cst_62 = arith.constant dense<0.000000e+00> : vector<24x128xf32>
    %140 = tpu.matmul %137, %139, %cst_62 {dimension_numbers = #tpu.dot_dimension_numbers<[1], [0], [0], [1], [0, 0, 1, 1], [], []>} : vector<24x128xf32>, vector<128x128xf32>, vector<24x128xf32> -> vector<24x128xf32>
    %c0_63 = arith.constant 0 : index
    %c0_64 = arith.constant 0 : index
    %c0_65 = arith.constant 0 : index
    %141 = vector.load %arg10[%c0_63, %c0_64, %c0_65] : memref<2x1x128xf32, #tpu.memory_space<vmem>>, vector<1x1x128xf32>
    %142 = vector.shape_cast %141 : vector<1x1x128xf32> to vector<1x128xf32>
    %143 = vector.broadcast %142 : vector<1x128xf32> to vector<24x128xf32>
    %144 = arith.addf %140, %143 : vector<24x128xf32>
    %cst_66 = arith.constant 0.000000e+00 : f32
    %145 = vector.broadcast %cst_66 : f32 to vector<24x128xf32>
    %146 = arith.maximumf %144, %145 : vector<24x128xf32>
    %c0_67 = arith.constant 0 : index
    %c0_68 = arith.constant 0 : index
    %c0_69 = arith.constant 0 : index
    %147 = vector.load %arg11[%c0_67, %c0_68, %c0_69] : memref<2x128x128xf32, #tpu.memory_space<vmem>>, vector<1x128x128xf32>
    %148 = vector.shape_cast %147 : vector<1x128x128xf32> to vector<128x128xf32>
    %cst_70 = arith.constant dense<0.000000e+00> : vector<24x128xf32>
    %149 = tpu.matmul %146, %148, %cst_70 {dimension_numbers = #tpu.dot_dimension_numbers<[1], [0], [0], [1], [0, 0, 1, 1], [], []>} : vector<24x128xf32>, vector<128x128xf32>, vector<24x128xf32> -> vector<24x128xf32>
    %c0_71 = arith.constant 0 : index
    %c0_72 = arith.constant 0 : index
    %c0_73 = arith.constant 0 : index
    %150 = vector.load %arg12[%c0_71, %c0_72, %c0_73] : memref<2x1x128xf32, #tpu.memory_space<vmem>>, vector<1x1x128xf32>
    %151 = vector.shape_cast %150 : vector<1x1x128xf32> to vector<1x128xf32>
    %152 = vector.broadcast %151 : vector<1x128xf32> to vector<24x128xf32>
    %153 = arith.addf %149, %152 : vector<24x128xf32>
    %154 = arith.addf %137, %153 : vector<24x128xf32>
    %c0_74 = arith.constant 0 : index
    %c0_75 = arith.constant 0 : index
    %c0_76 = arith.constant 0 : index
    %155 = vector.load %arg15[%c0_74, %c0_75, %c0_76] : memref<2x1x128xf32, #tpu.memory_space<vmem>>, vector<1x1x128xf32>
    %156 = vector.shape_cast %155 : vector<1x1x128xf32> to vector<1x128xf32>
    %c0_77 = arith.constant 0 : index
    %c0_78 = arith.constant 0 : index
    %c0_79 = arith.constant 0 : index
    %157 = vector.load %arg16[%c0_77, %c0_78, %c0_79] : memref<2x1x128xf32, #tpu.memory_space<vmem>>, vector<1x1x128xf32>
    %158 = vector.shape_cast %157 : vector<1x1x128xf32> to vector<1x128xf32>
    %cst_80 = arith.constant dense<0.000000e+00> : vector<24xf32>
    %159 = vector.multi_reduction <add>, %154, %cst_80 [1] : vector<24x128xf32> to vector<24xf32>
    %160 = vector.shape_cast %159 : vector<24xf32> to vector<24x1xf32>
    %cst_81 = arith.constant 3.125000e-02 : f32
    %161 = vector.broadcast %cst_81 : f32 to vector<24x1xf32>
    %162 = arith.mulf %160, %161 : vector<24x1xf32>
    %163 = arith.mulf %154, %154 : vector<24x128xf32>
    %cst_82 = arith.constant dense<0.000000e+00> : vector<24xf32>
    %164 = vector.multi_reduction <add>, %163, %cst_82 [1] : vector<24x128xf32> to vector<24xf32>
    %165 = vector.shape_cast %164 : vector<24xf32> to vector<24x1xf32>
    %cst_83 = arith.constant 3.125000e-02 : f32
    %166 = vector.broadcast %cst_83 : f32 to vector<24x1xf32>
    %167 = arith.mulf %165, %166 : vector<24x1xf32>
    %168 = arith.mulf %162, %162 : vector<24x1xf32>
    %169 = arith.subf %167, %168 : vector<24x1xf32>
    %170 = vector.broadcast %162 : vector<24x1xf32> to vector<24x128xf32>
    %171 = arith.subf %154, %170 : vector<24x128xf32>
    %cst_84 = arith.constant 9.99999974E-6 : f32
    %172 = vector.broadcast %cst_84 : f32 to vector<24x1xf32>
    %173 = arith.addf %169, %172 : vector<24x1xf32>
    %174 = math.rsqrt %173 : vector<24x1xf32>
    %175 = vector.broadcast %174 : vector<24x1xf32> to vector<24x128xf32>
    %176 = arith.mulf %171, %175 : vector<24x128xf32>
    %177 = vector.broadcast %156 : vector<1x128xf32> to vector<24x128xf32>
    %178 = arith.mulf %176, %177 : vector<24x128xf32>
    %179 = vector.broadcast %158 : vector<1x128xf32> to vector<24x128xf32>
    %180 = arith.addf %178, %179 : vector<24x128xf32>
    %c1 = arith.constant 1 : index
    %c0_85 = arith.constant 0 : index
    %c0_86 = arith.constant 0 : index
    %181 = vector.load %arg4[%c1, %c0_85, %c0_86] : memref<2x128x96xf32, #tpu.memory_space<vmem>>, vector<1x128x96xf32>
    %182 = vector.shape_cast %181 : vector<1x128x96xf32> to vector<128x96xf32>
    %cst_87 = arith.constant dense<0.000000e+00> : vector<24x96xf32>
    %183 = tpu.matmul %180, %182, %cst_87 {dimension_numbers = #tpu.dot_dimension_numbers<[1], [0], [0], [1], [0, 0, 1, 1], [], []>} : vector<24x128xf32>, vector<128x96xf32>, vector<24x96xf32> -> vector<24x96xf32>
    %c1_88 = arith.constant 1 : index
    %c0_89 = arith.constant 0 : index
    %c0_90 = arith.constant 0 : index
    %184 = vector.load %arg5[%c1_88, %c0_89, %c0_90] : memref<2x128x96xf32, #tpu.memory_space<vmem>>, vector<1x128x96xf32>
    %185 = vector.shape_cast %184 : vector<1x128x96xf32> to vector<128x96xf32>
    %cst_91 = arith.constant dense<0.000000e+00> : vector<24x96xf32>
    %186 = tpu.matmul %3, %185, %cst_91 {dimension_numbers = #tpu.dot_dimension_numbers<[1], [0], [0], [1], [0, 0, 1, 1], [], []>} : vector<24x128xf32>, vector<128x96xf32>, vector<24x96xf32> -> vector<24x96xf32>
    %187 = arith.addf %183, %186 : vector<24x96xf32>
    %c1_92 = arith.constant 1 : index
    %c0_93 = arith.constant 0 : index
    %c0_94 = arith.constant 0 : index
    %188 = vector.load %arg6[%c1_92, %c0_93, %c0_94] : memref<2x1x96xf32, #tpu.memory_space<vmem>>, vector<1x1x96xf32>
    %189 = vector.shape_cast %188 : vector<1x1x96xf32> to vector<1x96xf32>
    %190 = vector.broadcast %189 : vector<1x96xf32> to vector<24x96xf32>
    %191 = arith.addf %187, %190 : vector<24x96xf32>
    %c1_95 = arith.constant 1 : index
    %c0_96 = arith.constant 0 : index
    %c0_97 = arith.constant 0 : index
    %c0_98 = arith.constant 0 : index
    %192 = vector.load %arg7[%c1_95, %c0_96, %c0_97, %c0_98] : memref<2x4x8x128xf32, #tpu.memory_space<vmem>>, vector<1x4x8x128xf32>
    %193 = vector.shape_cast %192 : vector<1x4x8x128xf32> to vector<4x8x128xf32>
    %194 = vector.extract_strided_slice %191 {offsets = [0, 0], sizes = [24, 8], strides = [1, 1]} : vector<24x96xf32> to vector<24x8xf32>
    %195 = vector.extract_strided_slice %191 {offsets = [0, 32], sizes = [24, 8], strides = [1, 1]} : vector<24x96xf32> to vector<24x8xf32>
    %196 = vector.extract_strided_slice %191 {offsets = [0, 64], sizes = [24, 8], strides = [1, 1]} : vector<24x96xf32> to vector<24x8xf32>
    %cst_99 = arith.constant dense<0.000000e+00> : vector<24x24xf32>
    %197 = tpu.matmul %194, %195, %cst_99 {dimension_numbers = #tpu.dot_dimension_numbers<[1], [1], [0], [0], [0, 0, 1, 0], [], []>} : vector<24x8xf32>, vector<24x8xf32>, vector<24x24xf32> -> vector<24x24xf32>
    %198 = vector.broadcast %10 : vector<1x24xf32> to vector<24x24xf32>
    %199 = arith.addf %197, %198 : vector<24x24xf32>
    %cst_100 = arith.constant dense<0xFF800000> : vector<24xf32>
    %200 = vector.multi_reduction <maximumf>, %199, %cst_100 [1] : vector<24x24xf32> to vector<24xf32>
    %201 = vector.shape_cast %200 : vector<24xf32> to vector<24x1xf32>
    %202 = vector.broadcast %201 : vector<24x1xf32> to vector<24x24xf32>
    %203 = arith.subf %199, %202 : vector<24x24xf32>
    %204 = math.exp %203 : vector<24x24xf32>
    %cst_101 = arith.constant dense<0.000000e+00> : vector<24xf32>
    %205 = vector.multi_reduction <add>, %204, %cst_101 [1] : vector<24x24xf32> to vector<24xf32>
    %206 = vector.shape_cast %205 : vector<24xf32> to vector<24x1xf32>
    %cst_102 = arith.constant dense<0.000000e+00> : vector<24x8xf32>
    %207 = tpu.matmul %204, %196, %cst_102 {dimension_numbers = #tpu.dot_dimension_numbers<[1], [0], [0], [1], [0, 0, 1, 1], [], []>} : vector<24x24xf32>, vector<24x8xf32>, vector<24x8xf32> -> vector<24x8xf32>
    %208 = tpu.reciprocal %206 {approx = true} : vector<24x1xf32> -> vector<24x1xf32>
    %209 = vector.broadcast %208 : vector<24x1xf32> to vector<24x8xf32>
    %210 = arith.mulf %207, %209 : vector<24x8xf32>
    %211 = vector.extract_strided_slice %193 {offsets = [0, 0, 0], sizes = [1, 8, 128], strides = [1, 1, 1]} : vector<4x8x128xf32> to vector<1x8x128xf32>
    %212 = vector.shape_cast %211 : vector<1x8x128xf32> to vector<8x128xf32>
    %cst_103 = arith.constant dense<0.000000e+00> : vector<24x128xf32>
    %213 = tpu.matmul %210, %212, %cst_103 {dimension_numbers = #tpu.dot_dimension_numbers<[1], [0], [0], [1], [0, 0, 1, 1], [], []>} : vector<24x8xf32>, vector<8x128xf32>, vector<24x128xf32> -> vector<24x128xf32>
    %214 = vector.extract_strided_slice %191 {offsets = [0, 8], sizes = [24, 8], strides = [1, 1]} : vector<24x96xf32> to vector<24x8xf32>
    %215 = vector.extract_strided_slice %191 {offsets = [0, 40], sizes = [24, 8], strides = [1, 1]} : vector<24x96xf32> to vector<24x8xf32>
    %216 = vector.extract_strided_slice %191 {offsets = [0, 72], sizes = [24, 8], strides = [1, 1]} : vector<24x96xf32> to vector<24x8xf32>
    %cst_104 = arith.constant dense<0.000000e+00> : vector<24x24xf32>
    %217 = tpu.matmul %214, %215, %cst_104 {dimension_numbers = #tpu.dot_dimension_numbers<[1], [1], [0], [0], [0, 0, 1, 0], [], []>} : vector<24x8xf32>, vector<24x8xf32>, vector<24x24xf32> -> vector<24x24xf32>
    %218 = vector.broadcast %10 : vector<1x24xf32> to vector<24x24xf32>
    %219 = arith.addf %217, %218 : vector<24x24xf32>
    %cst_105 = arith.constant dense<0xFF800000> : vector<24xf32>
    %220 = vector.multi_reduction <maximumf>, %219, %cst_105 [1] : vector<24x24xf32> to vector<24xf32>
    %221 = vector.shape_cast %220 : vector<24xf32> to vector<24x1xf32>
    %222 = vector.broadcast %221 : vector<24x1xf32> to vector<24x24xf32>
    %223 = arith.subf %219, %222 : vector<24x24xf32>
    %224 = math.exp %223 : vector<24x24xf32>
    %cst_106 = arith.constant dense<0.000000e+00> : vector<24xf32>
    %225 = vector.multi_reduction <add>, %224, %cst_106 [1] : vector<24x24xf32> to vector<24xf32>
    %226 = vector.shape_cast %225 : vector<24xf32> to vector<24x1xf32>
    %cst_107 = arith.constant dense<0.000000e+00> : vector<24x8xf32>
    %227 = tpu.matmul %224, %216, %cst_107 {dimension_numbers = #tpu.dot_dimension_numbers<[1], [0], [0], [1], [0, 0, 1, 1], [], []>} : vector<24x24xf32>, vector<24x8xf32>, vector<24x8xf32> -> vector<24x8xf32>
    %228 = tpu.reciprocal %226 {approx = true} : vector<24x1xf32> -> vector<24x1xf32>
    %229 = vector.broadcast %228 : vector<24x1xf32> to vector<24x8xf32>
    %230 = arith.mulf %227, %229 : vector<24x8xf32>
    %231 = vector.extract_strided_slice %193 {offsets = [1, 0, 0], sizes = [1, 8, 128], strides = [1, 1, 1]} : vector<4x8x128xf32> to vector<1x8x128xf32>
    %232 = vector.shape_cast %231 : vector<1x8x128xf32> to vector<8x128xf32>
    %cst_108 = arith.constant dense<0.000000e+00> : vector<24x128xf32>
    %233 = tpu.matmul %230, %232, %cst_108 {dimension_numbers = #tpu.dot_dimension_numbers<[1], [0], [0], [1], [0, 0, 1, 1], [], []>} : vector<24x8xf32>, vector<8x128xf32>, vector<24x128xf32> -> vector<24x128xf32>
    %234 = arith.addf %213, %233 : vector<24x128xf32>
    %235 = vector.extract_strided_slice %191 {offsets = [0, 16], sizes = [24, 8], strides = [1, 1]} : vector<24x96xf32> to vector<24x8xf32>
    %236 = vector.extract_strided_slice %191 {offsets = [0, 48], sizes = [24, 8], strides = [1, 1]} : vector<24x96xf32> to vector<24x8xf32>
    %237 = vector.extract_strided_slice %191 {offsets = [0, 80], sizes = [24, 8], strides = [1, 1]} : vector<24x96xf32> to vector<24x8xf32>
    %cst_109 = arith.constant dense<0.000000e+00> : vector<24x24xf32>
    %238 = tpu.matmul %235, %236, %cst_109 {dimension_numbers = #tpu.dot_dimension_numbers<[1], [1], [0], [0], [0, 0, 1, 0], [], []>} : vector<24x8xf32>, vector<24x8xf32>, vector<24x24xf32> -> vector<24x24xf32>
    %239 = vector.broadcast %10 : vector<1x24xf32> to vector<24x24xf32>
    %240 = arith.addf %238, %239 : vector<24x24xf32>
    %cst_110 = arith.constant dense<0xFF800000> : vector<24xf32>
    %241 = vector.multi_reduction <maximumf>, %240, %cst_110 [1] : vector<24x24xf32> to vector<24xf32>
    %242 = vector.shape_cast %241 : vector<24xf32> to vector<24x1xf32>
    %243 = vector.broadcast %242 : vector<24x1xf32> to vector<24x24xf32>
    %244 = arith.subf %240, %243 : vector<24x24xf32>
    %245 = math.exp %244 : vector<24x24xf32>
    %cst_111 = arith.constant dense<0.000000e+00> : vector<24xf32>
    %246 = vector.multi_reduction <add>, %245, %cst_111 [1] : vector<24x24xf32> to vector<24xf32>
    %247 = vector.shape_cast %246 : vector<24xf32> to vector<24x1xf32>
    %cst_112 = arith.constant dense<0.000000e+00> : vector<24x8xf32>
    %248 = tpu.matmul %245, %237, %cst_112 {dimension_numbers = #tpu.dot_dimension_numbers<[1], [0], [0], [1], [0, 0, 1, 1], [], []>} : vector<24x24xf32>, vector<24x8xf32>, vector<24x8xf32> -> vector<24x8xf32>
    %249 = tpu.reciprocal %247 {approx = true} : vector<24x1xf32> -> vector<24x1xf32>
    %250 = vector.broadcast %249 : vector<24x1xf32> to vector<24x8xf32>
    %251 = arith.mulf %248, %250 : vector<24x8xf32>
    %252 = vector.extract_strided_slice %193 {offsets = [2, 0, 0], sizes = [1, 8, 128], strides = [1, 1, 1]} : vector<4x8x128xf32> to vector<1x8x128xf32>
    %253 = vector.shape_cast %252 : vector<1x8x128xf32> to vector<8x128xf32>
    %cst_113 = arith.constant dense<0.000000e+00> : vector<24x128xf32>
    %254 = tpu.matmul %251, %253, %cst_113 {dimension_numbers = #tpu.dot_dimension_numbers<[1], [0], [0], [1], [0, 0, 1, 1], [], []>} : vector<24x8xf32>, vector<8x128xf32>, vector<24x128xf32> -> vector<24x128xf32>
    %255 = arith.addf %234, %254 : vector<24x128xf32>
    %256 = vector.extract_strided_slice %191 {offsets = [0, 24], sizes = [24, 8], strides = [1, 1]} : vector<24x96xf32> to vector<24x8xf32>
    %257 = vector.extract_strided_slice %191 {offsets = [0, 56], sizes = [24, 8], strides = [1, 1]} : vector<24x96xf32> to vector<24x8xf32>
    %258 = vector.extract_strided_slice %191 {offsets = [0, 88], sizes = [24, 8], strides = [1, 1]} : vector<24x96xf32> to vector<24x8xf32>
    %cst_114 = arith.constant dense<0.000000e+00> : vector<24x24xf32>
    %259 = tpu.matmul %256, %257, %cst_114 {dimension_numbers = #tpu.dot_dimension_numbers<[1], [1], [0], [0], [0, 0, 1, 0], [], []>} : vector<24x8xf32>, vector<24x8xf32>, vector<24x24xf32> -> vector<24x24xf32>
    %260 = vector.broadcast %10 : vector<1x24xf32> to vector<24x24xf32>
    %261 = arith.addf %259, %260 : vector<24x24xf32>
    %cst_115 = arith.constant dense<0xFF800000> : vector<24xf32>
    %262 = vector.multi_reduction <maximumf>, %261, %cst_115 [1] : vector<24x24xf32> to vector<24xf32>
    %263 = vector.shape_cast %262 : vector<24xf32> to vector<24x1xf32>
    %264 = vector.broadcast %263 : vector<24x1xf32> to vector<24x24xf32>
    %265 = arith.subf %261, %264 : vector<24x24xf32>
    %266 = math.exp %265 : vector<24x24xf32>
    %cst_116 = arith.constant dense<0.000000e+00> : vector<24xf32>
    %267 = vector.multi_reduction <add>, %266, %cst_116 [1] : vector<24x24xf32> to vector<24xf32>
    %268 = vector.shape_cast %267 : vector<24xf32> to vector<24x1xf32>
    %cst_117 = arith.constant dense<0.000000e+00> : vector<24x8xf32>
    %269 = tpu.matmul %266, %258, %cst_117 {dimension_numbers = #tpu.dot_dimension_numbers<[1], [0], [0], [1], [0, 0, 1, 1], [], []>} : vector<24x24xf32>, vector<24x8xf32>, vector<24x8xf32> -> vector<24x8xf32>
    %270 = tpu.reciprocal %268 {approx = true} : vector<24x1xf32> -> vector<24x1xf32>
    %271 = vector.broadcast %270 : vector<24x1xf32> to vector<24x8xf32>
    %272 = arith.mulf %269, %271 : vector<24x8xf32>
    %273 = vector.extract_strided_slice %193 {offsets = [3, 0, 0], sizes = [1, 8, 128], strides = [1, 1, 1]} : vector<4x8x128xf32> to vector<1x8x128xf32>
    %274 = vector.shape_cast %273 : vector<1x8x128xf32> to vector<8x128xf32>
    %cst_118 = arith.constant dense<0.000000e+00> : vector<24x128xf32>
    %275 = tpu.matmul %272, %274, %cst_118 {dimension_numbers = #tpu.dot_dimension_numbers<[1], [0], [0], [1], [0, 0, 1, 1], [], []>} : vector<24x8xf32>, vector<8x128xf32>, vector<24x128xf32> -> vector<24x128xf32>
    %276 = arith.addf %255, %275 : vector<24x128xf32>
    %c1_119 = arith.constant 1 : index
    %c0_120 = arith.constant 0 : index
    %c0_121 = arith.constant 0 : index
    %277 = vector.load %arg8[%c1_119, %c0_120, %c0_121] : memref<2x1x128xf32, #tpu.memory_space<vmem>>, vector<1x1x128xf32>
    %278 = vector.shape_cast %277 : vector<1x1x128xf32> to vector<1x128xf32>
    %279 = vector.broadcast %278 : vector<1x128xf32> to vector<24x128xf32>
    %280 = arith.addf %276, %279 : vector<24x128xf32>
    %281 = arith.addf %180, %280 : vector<24x128xf32>
    %c1_122 = arith.constant 1 : index
    %c0_123 = arith.constant 0 : index
    %c0_124 = arith.constant 0 : index
    %282 = vector.load %arg13[%c1_122, %c0_123, %c0_124] : memref<2x1x128xf32, #tpu.memory_space<vmem>>, vector<1x1x128xf32>
    %283 = vector.shape_cast %282 : vector<1x1x128xf32> to vector<1x128xf32>
    %c1_125 = arith.constant 1 : index
    %c0_126 = arith.constant 0 : index
    %c0_127 = arith.constant 0 : index
    %284 = vector.load %arg14[%c1_125, %c0_126, %c0_127] : memref<2x1x128xf32, #tpu.memory_space<vmem>>, vector<1x1x128xf32>
    %285 = vector.shape_cast %284 : vector<1x1x128xf32> to vector<1x128xf32>
    %cst_128 = arith.constant dense<0.000000e+00> : vector<24xf32>
    %286 = vector.multi_reduction <add>, %281, %cst_128 [1] : vector<24x128xf32> to vector<24xf32>
    %287 = vector.shape_cast %286 : vector<24xf32> to vector<24x1xf32>
    %cst_129 = arith.constant 3.125000e-02 : f32
    %288 = vector.broadcast %cst_129 : f32 to vector<24x1xf32>
    %289 = arith.mulf %287, %288 : vector<24x1xf32>
    %290 = arith.mulf %281, %281 : vector<24x128xf32>
    %cst_130 = arith.constant dense<0.000000e+00> : vector<24xf32>
    %291 = vector.multi_reduction <add>, %290, %cst_130 [1] : vector<24x128xf32> to vector<24xf32>
    %292 = vector.shape_cast %291 : vector<24xf32> to vector<24x1xf32>
    %cst_131 = arith.constant 3.125000e-02 : f32
    %293 = vector.broadcast %cst_131 : f32 to vector<24x1xf32>
    %294 = arith.mulf %292, %293 : vector<24x1xf32>
    %295 = arith.mulf %289, %289 : vector<24x1xf32>
    %296 = arith.subf %294, %295 : vector<24x1xf32>
    %297 = vector.broadcast %289 : vector<24x1xf32> to vector<24x128xf32>
    %298 = arith.subf %281, %297 : vector<24x128xf32>
    %cst_132 = arith.constant 9.99999974E-6 : f32
    %299 = vector.broadcast %cst_132 : f32 to vector<24x1xf32>
    %300 = arith.addf %296, %299 : vector<24x1xf32>
    %301 = math.rsqrt %300 : vector<24x1xf32>
    %302 = vector.broadcast %301 : vector<24x1xf32> to vector<24x128xf32>
    %303 = arith.mulf %298, %302 : vector<24x128xf32>
    %304 = vector.broadcast %283 : vector<1x128xf32> to vector<24x128xf32>
    %305 = arith.mulf %303, %304 : vector<24x128xf32>
    %306 = vector.broadcast %285 : vector<1x128xf32> to vector<24x128xf32>
    %307 = arith.addf %305, %306 : vector<24x128xf32>
    %c1_133 = arith.constant 1 : index
    %c0_134 = arith.constant 0 : index
    %c0_135 = arith.constant 0 : index
    %308 = vector.load %arg9[%c1_133, %c0_134, %c0_135] : memref<2x128x128xf32, #tpu.memory_space<vmem>>, vector<1x128x128xf32>
    %309 = vector.shape_cast %308 : vector<1x128x128xf32> to vector<128x128xf32>
    %cst_136 = arith.constant dense<0.000000e+00> : vector<24x128xf32>
    %310 = tpu.matmul %307, %309, %cst_136 {dimension_numbers = #tpu.dot_dimension_numbers<[1], [0], [0], [1], [0, 0, 1, 1], [], []>} : vector<24x128xf32>, vector<128x128xf32>, vector<24x128xf32> -> vector<24x128xf32>
    %c1_137 = arith.constant 1 : index
    %c0_138 = arith.constant 0 : index
    %c0_139 = arith.constant 0 : index
    %311 = vector.load %arg10[%c1_137, %c0_138, %c0_139] : memref<2x1x128xf32, #tpu.memory_space<vmem>>, vector<1x1x128xf32>
    %312 = vector.shape_cast %311 : vector<1x1x128xf32> to vector<1x128xf32>
    %313 = vector.broadcast %312 : vector<1x128xf32> to vector<24x128xf32>
    %314 = arith.addf %310, %313 : vector<24x128xf32>
    %cst_140 = arith.constant 0.000000e+00 : f32
    %315 = vector.broadcast %cst_140 : f32 to vector<24x128xf32>
    %316 = arith.maximumf %314, %315 : vector<24x128xf32>
    %c1_141 = arith.constant 1 : index
    %c0_142 = arith.constant 0 : index
    %c0_143 = arith.constant 0 : index
    %317 = vector.load %arg11[%c1_141, %c0_142, %c0_143] : memref<2x128x128xf32, #tpu.memory_space<vmem>>, vector<1x128x128xf32>
    %318 = vector.shape_cast %317 : vector<1x128x128xf32> to vector<128x128xf32>
    %cst_144 = arith.constant dense<0.000000e+00> : vector<24x128xf32>
    %319 = tpu.matmul %316, %318, %cst_144 {dimension_numbers = #tpu.dot_dimension_numbers<[1], [0], [0], [1], [0, 0, 1, 1], [], []>} : vector<24x128xf32>, vector<128x128xf32>, vector<24x128xf32> -> vector<24x128xf32>
    %c1_145 = arith.constant 1 : index
    %c0_146 = arith.constant 0 : index
    %c0_147 = arith.constant 0 : index
    %320 = vector.load %arg12[%c1_145, %c0_146, %c0_147] : memref<2x1x128xf32, #tpu.memory_space<vmem>>, vector<1x1x128xf32>
    %321 = vector.shape_cast %320 : vector<1x1x128xf32> to vector<1x128xf32>
    %322 = vector.broadcast %321 : vector<1x128xf32> to vector<24x128xf32>
    %323 = arith.addf %319, %322 : vector<24x128xf32>
    %324 = arith.addf %307, %323 : vector<24x128xf32>
    %c1_148 = arith.constant 1 : index
    %c0_149 = arith.constant 0 : index
    %c0_150 = arith.constant 0 : index
    %325 = vector.load %arg15[%c1_148, %c0_149, %c0_150] : memref<2x1x128xf32, #tpu.memory_space<vmem>>, vector<1x1x128xf32>
    %326 = vector.shape_cast %325 : vector<1x1x128xf32> to vector<1x128xf32>
    %c1_151 = arith.constant 1 : index
    %c0_152 = arith.constant 0 : index
    %c0_153 = arith.constant 0 : index
    %327 = vector.load %arg16[%c1_151, %c0_152, %c0_153] : memref<2x1x128xf32, #tpu.memory_space<vmem>>, vector<1x1x128xf32>
    %328 = vector.shape_cast %327 : vector<1x1x128xf32> to vector<1x128xf32>
    %cst_154 = arith.constant dense<0.000000e+00> : vector<24xf32>
    %329 = vector.multi_reduction <add>, %324, %cst_154 [1] : vector<24x128xf32> to vector<24xf32>
    %330 = vector.shape_cast %329 : vector<24xf32> to vector<24x1xf32>
    %cst_155 = arith.constant 3.125000e-02 : f32
    %331 = vector.broadcast %cst_155 : f32 to vector<24x1xf32>
    %332 = arith.mulf %330, %331 : vector<24x1xf32>
    %333 = arith.mulf %324, %324 : vector<24x128xf32>
    %cst_156 = arith.constant dense<0.000000e+00> : vector<24xf32>
    %334 = vector.multi_reduction <add>, %333, %cst_156 [1] : vector<24x128xf32> to vector<24xf32>
    %335 = vector.shape_cast %334 : vector<24xf32> to vector<24x1xf32>
    %cst_157 = arith.constant 3.125000e-02 : f32
    %336 = vector.broadcast %cst_157 : f32 to vector<24x1xf32>
    %337 = arith.mulf %335, %336 : vector<24x1xf32>
    %338 = arith.mulf %332, %332 : vector<24x1xf32>
    %339 = arith.subf %337, %338 : vector<24x1xf32>
    %340 = vector.broadcast %332 : vector<24x1xf32> to vector<24x128xf32>
    %341 = arith.subf %324, %340 : vector<24x128xf32>
    %cst_158 = arith.constant 9.99999974E-6 : f32
    %342 = vector.broadcast %cst_158 : f32 to vector<24x1xf32>
    %343 = arith.addf %339, %342 : vector<24x1xf32>
    %344 = math.rsqrt %343 : vector<24x1xf32>
    %345 = vector.broadcast %344 : vector<24x1xf32> to vector<24x128xf32>
    %346 = arith.mulf %341, %345 : vector<24x128xf32>
    %347 = vector.broadcast %326 : vector<1x128xf32> to vector<24x128xf32>
    %348 = arith.mulf %346, %347 : vector<24x128xf32>
    %349 = vector.broadcast %328 : vector<1x128xf32> to vector<24x128xf32>
    %350 = arith.addf %348, %349 : vector<24x128xf32>
    %c0_159 = arith.constant 0 : index
    %c0_160 = arith.constant 0 : index
    %c0_161 = arith.constant 0 : index
    %351 = vector.load %arg17[%c0_159, %c0_160, %c0_161] : memref<1x24x128xf32, #tpu.memory_space<vmem>>, vector<1x24x128xf32>
    %352 = vector.shape_cast %351 : vector<1x24x128xf32> to vector<24x128xf32>
    %353 = vector.shape_cast %350 : vector<24x128xf32> to vector<1x24x128xf32>
    tpu.vector_store %arg17[%c0_159, %c0_160, %c0_161], %353 {strides = array<i32>} : memref<1x24x128xf32, #tpu.memory_space<vmem>>, vector<1x24x128xf32>,
    return
  }
  func.func @transform_0(%arg0: i32) -> (i32, i32, i32) {
    %c0_i32 = arith.constant 0 : i32
    %c0_i32_0 = arith.constant 0 : i32
    %c0_i32_1 = arith.constant 0 : i32
    return %arg0, %c0_i32, %c0_i32_0 : i32, i32, i32
  }
  func.func @transform_1(%arg0: i32) -> (i32, i32, i32) {
    %c0_i32 = arith.constant 0 : i32
    %c0_i32_0 = arith.constant 0 : i32
    %c0_i32_1 = arith.constant 0 : i32
    return %arg0, %c0_i32, %c0_i32_0 : i32, i32, i32
  }
  func.func @transform_2(%arg0: i32) -> (i32, i32, i32) {
    %c0_i32 = arith.constant 0 : i32
    %c0_i32_0 = arith.constant 0 : i32
    %c0_i32_1 = arith.constant 0 : i32
    return %arg0, %c0_i32, %c0_i32_0 : i32, i32, i32
  }
  func.func @transform_3(%arg0: i32) -> (i32, i32, i32) {
    %c0_i32 = arith.constant 0 : i32
    %c0_i32_0 = arith.constant 0 : i32
    %c0_i32_1 = arith.constant 0 : i32
    %c0_i32_2 = arith.constant 0 : i32
    return %c0_i32, %c0_i32_0, %c0_i32_1 : i32, i32, i32
  }
  func.func @transform_4(%arg0: i32) -> (i32, i32, i32) {
    %c0_i32 = arith.constant 0 : i32
    %c0_i32_0 = arith.constant 0 : i32
    %c0_i32_1 = arith.constant 0 : i32
    %c0_i32_2 = arith.constant 0 : i32
    return %c0_i32, %c0_i32_0, %c0_i32_1 : i32, i32, i32
  }
  func.func @transform_5(%arg0: i32) -> (i32, i32, i32) {
    %c0_i32 = arith.constant 0 : i32
    %c0_i32_0 = arith.constant 0 : i32
    %c0_i32_1 = arith.constant 0 : i32
    %c0_i32_2 = arith.constant 0 : i32
    return %c0_i32, %c0_i32_0, %c0_i32_1 : i32, i32, i32
  }
  func.func @transform_6(%arg0: i32) -> (i32, i32, i32, i32) {
    %c0_i32 = arith.constant 0 : i32
    %c0_i32_0 = arith.constant 0 : i32
    %c0_i32_1 = arith.constant 0 : i32
    %c0_i32_2 = arith.constant 0 : i32
    %c0_i32_3 = arith.constant 0 : i32
    return %c0_i32, %c0_i32_0, %c0_i32_1, %c0_i32_2 : i32, i32, i32, i32
  }
  func.func @transform_7(%arg0: i32) -> (i32, i32, i32) {
    %c0_i32 = arith.constant 0 : i32
    %c0_i32_0 = arith.constant 0 : i32
    %c0_i32_1 = arith.constant 0 : i32
    %c0_i32_2 = arith.constant 0 : i32
    return %c0_i32, %c0_i32_0, %c0_i32_1 : i32, i32, i32
  }
  func.func @transform_8(%arg0: i32) -> (i32, i32, i32) {
    %c0_i32 = arith.constant 0 : i32
    %c0_i32_0 = arith.constant 0 : i32
    %c0_i32_1 = arith.constant 0 : i32
    %c0_i32_2 = arith.constant 0 : i32
    return %c0_i32, %c0_i32_0, %c0_i32_1 : i32, i32, i32
  }
  func.func @transform_9(%arg0: i32) -> (i32, i32, i32) {
    %c0_i32 = arith.constant 0 : i32
    %c0_i32_0 = arith.constant 0 : i32
    %c0_i32_1 = arith.constant 0 : i32
    %c0_i32_2 = arith.constant 0 : i32
    return %c0_i32, %c0_i32_0, %c0_i32_1 : i32, i32, i32
  }
  func.func @transform_10(%arg0: i32) -> (i32, i32, i32) {
    %c0_i32 = arith.constant 0 : i32
    %c0_i32_0 = arith.constant 0 : i32
    %c0_i32_1 = arith.constant 0 : i32
    %c0_i32_2 = arith.constant 0 : i32
    return %c0_i32, %c0_i32_0, %c0_i32_1 : i32, i32, i32
  }
  func.func @transform_11(%arg0: i32) -> (i32, i32, i32) {
    %c0_i32 = arith.constant 0 : i32
    %c0_i32_0 = arith.constant 0 : i32
    %c0_i32_1 = arith.constant 0 : i32
    %c0_i32_2 = arith.constant 0 : i32
    return %c0_i32, %c0_i32_0, %c0_i32_1 : i32, i32, i32
  }
  func.func @transform_12(%arg0: i32) -> (i32, i32, i32) {
    %c0_i32 = arith.constant 0 : i32
    %c0_i32_0 = arith.constant 0 : i32
    %c0_i32_1 = arith.constant 0 : i32
    %c0_i32_2 = arith.constant 0 : i32
    return %c0_i32, %c0_i32_0, %c0_i32_1 : i32, i32, i32
  }
  func.func @transform_13(%arg0: i32) -> (i32, i32, i32) {
    %c0_i32 = arith.constant 0 : i32
    %c0_i32_0 = arith.constant 0 : i32
    %c0_i32_1 = arith.constant 0 : i32
    %c0_i32_2 = arith.constant 0 : i32
    return %c0_i32, %c0_i32_0, %c0_i32_1 : i32, i32, i32
  }
  func.func @transform_14(%arg0: i32) -> (i32, i32, i32) {
    %c0_i32 = arith.constant 0 : i32
    %c0_i32_0 = arith.constant 0 : i32
    %c0_i32_1 = arith.constant 0 : i32
    %c0_i32_2 = arith.constant 0 : i32
    return %c0_i32, %c0_i32_0, %c0_i32_1 : i32, i32, i32
  }
  func.func @transform_15(%arg0: i32) -> (i32, i32, i32) {
    %c0_i32 = arith.constant 0 : i32
    %c0_i32_0 = arith.constant 0 : i32
    %c0_i32_1 = arith.constant 0 : i32
    %c0_i32_2 = arith.constant 0 : i32
    return %c0_i32, %c0_i32_0, %c0_i32_1 : i32, i32, i32
  }
  func.func @transform_16(%arg0: i32) -> (i32, i32, i32) {
    %c0_i32 = arith.constant 0 : i32
    %c0_i32_0 = arith.constant 0 : i32
    %c0_i32_1 = arith.constant 0 : i32
    return %arg0, %c0_i32, %c0_i32_0 : i32, i32, i32
  }
}

</mosaic_0001>

<llo_original>
// kernel: cross_self_attention_forward.1
$region0: #{cross_self_attention_forward.1}
  #allocation0 [shape = 'u32[]', space=smem, size = 0x4, offset = 0x4, fixed_abs, tag = 'smem constant byte address 0x4 - core index']
  #allocation1 [shape = 'u32[144,128]{1,0:T(1,128)}', space=vmem, size = 0x12000, scoped, tag = 'internal scratch']
  %s0 = inlined_call_operand.vmem [shape: f32[2,24,128], index: 0, kind: input, shape index: {}]
  %s1 = inlined_call_operand.vmem [shape: f32[2,24,128], index: 1, kind: input, shape index: {}]
  %s2 = inlined_call_operand.vmem [shape: f32[2,1,24], index: 2, kind: input, shape index: {}]
  %s3 = inlined_call_operand.vmem [shape: f32[2,128,96], index: 3, kind: input, shape index: {}]
  %s4 = inlined_call_operand.vmem [shape: f32[2,128,96], index: 4, kind: input, shape index: {}]
  %s5 = inlined_call_operand.vmem [shape: f32[2,1,96], index: 5, kind: input, shape index: {}]
  %s6 = inlined_call_operand.vmem [shape: f32[2,4,8,128], index: 6, kind: input, shape index: {}]
  %s7 = inlined_call_operand.vmem [shape: f32[2,1,128], index: 7, kind: input, shape index: {}]
  %s8 = inlined_call_operand.vmem [shape: f32[2,128,128], index: 8, kind: input, shape index: {}]
  %s9 = inlined_call_operand.vmem [shape: f32[2,1,128], index: 9, kind: input, shape index: {}]
  %s10 = inlined_call_operand.vmem [shape: f32[2,128,128], index: 10, kind: input, shape index: {}]
  %s11 = inlined_call_operand.vmem [shape: f32[2,1,128], index: 11, kind: input, shape index: {}]
  %s12 = inlined_call_operand.vmem [shape: f32[2,1,128], index: 12, kind: input, shape index: {}]
  %s13 = inlined_call_operand.vmem [shape: f32[2,1,128], index: 13, kind: input, shape index: {}]
  %s14 = inlined_call_operand.vmem [shape: f32[2,1,128], index: 14, kind: input, shape index: {}]
  %s15 = inlined_call_operand.vmem [shape: f32[2,1,128], index: 15, kind: input, shape index: {}]
  %s16 = inlined_call_operand.vmem [shape: f32[2,24,128], index: 16, kind: output, shape index: {}]
  %s17 = sld [smem:[#allocation0]]
  $region97: #{cross_self_attention_forward.1} parent=0
    _
  %s19 = ssub.s32 1, %s17
  %s20 = scalar_select 0, %s19, %s17
  loop: start=0, step=1, limit=4
  $region2: #{cross_self_attention_forward.1} parent=0 // loop_pre_header
    _
  $region3: #{cross_self_attention_forward.1} parent=0 // loop_header
    %s22 = sphi 0, %s26
    %p23 = scmp.ge.s32.totalorder %s22, 4
    %s32 = sphi 0, %s34
    %s35 = sphi 0, %s32
    %s36 = sphi 0, %s35
    %s52 = sphi 0, %s36
    %s58 = sphi 0, %s60
    %s61 = sphi 0, %s58
    %s62 = sphi 0, %s61
    %s78 = sphi 0, %s62
    %s84 = sphi 0, %s86
    %s87 = sphi 0, %s84
    %s88 = sphi 0, %s87
    %s104 = sphi 0, %s88
    %s108 = sphi 0, %s108
    %s110 = sphi 0, %s108
    %s111 = sphi 0, %s110
    %s125 = sphi 0, %s111
    %s129 = sphi 0, %s129
    %s131 = sphi 0, %s129
    %s132 = sphi 0, %s131
    %s146 = sphi 0, %s132
    %s150 = sphi 0, %s150
    %s152 = sphi 0, %s150
    %s153 = sphi 0, %s152
    %s167 = sphi 0, %s153
    %s171 = sphi 0, %s171
    %s173 = sphi 0, %s171
    %s174 = sphi 0, %s173
    %s188 = sphi 0, %s174
    %s192 = sphi 0, %s192
    %s194 = sphi 0, %s192
    %s195 = sphi 0, %s194
    %s209 = sphi 0, %s195
    %s213 = sphi 0, %s213
    %s215 = sphi 0, %s213
    %s216 = sphi 0, %s215
    %s230 = sphi 0, %s216
    %s234 = sphi 0, %s234
    %s236 = sphi 0, %s234
    %s237 = sphi 0, %s236
    %s251 = sphi 0, %s237
    %s255 = sphi 0, %s255
    %s257 = sphi 0, %s255
    %s258 = sphi 0, %s257
    %s272 = sphi 0, %s258
    %s276 = sphi 0, %s276
    %s278 = sphi 0, %s276
    %s279 = sphi 0, %s278
    %s293 = sphi 0, %s279
    %s297 = sphi 0, %s297
    %s299 = sphi 0, %s297
    %s300 = sphi 0, %s299
    %s314 = sphi 0, %s300
    %s318 = sphi 0, %s318
    %s320 = sphi 0, %s318
    %s321 = sphi 0, %s320
    %s335 = sphi 0, %s321
    %s339 = sphi 0, %s339
    %s341 = sphi 0, %s339
    %s342 = sphi 0, %s341
    %s356 = sphi 0, %s342
    %s360 = sphi 0, %s360
    %s362 = sphi 0, %s360
    %s363 = sphi 0, %s362
    %s377 = sphi 0, %s363
    %s383 = sphi 0, %s385
    %s386 = sphi 0, %s383
    %s387 = sphi 0, %s386
    %s403 = sphi 0, %s387
  $region4: #{cross_self_attention_forward.1} parent=0 // loop_header_branch
    %25 = sbr.rel (%p23) target = $region8
  $region5: #{cross_self_attention_forward.1} parent=0 // loop_body
    %s27 = ssub.s32 %s22, 1
    %s28 = ssub.s32 %s22, 2
    %s29 = sadd.s32 %s22, 1
    %s30 = ssub.s32 %s22, %s29
    %p31 = scmp.eq.s32.totalorder %s30, 0
    %s33 = sadd.s32 %s32, 1
    %s34 = scalar_select %p31, %s32, %s33
    %p37 = pneg %p31
    %p38 = scmp.eq.s32.totalorder %s22, 1
    %p39 = por %p37, %p38
    %p40 = scmp.ne.s32.totalorder %s32, %s35
    %p41 = scmp.eq.s32.totalorder %s22, 0
    %p42 = por %p40, %p41
    %p43 = scmp.ne.s32.totalorder %s32, %s35
    %p44 = scmp.eq.s32.totalorder %s27, 1
    %p45 = por %p43, %p44
    %p46 = scmp.ne.s32.totalorder %s35, %s36
    %p47 = scmp.eq.s32.totalorder %s27, 0
    %p48 = por %p46, %p47
    %p49 = scmp.ne.s32.totalorder %s35, %s36
    %p50 = scmp.eq.s32.totalorder %s28, 1
    %p51 = por %p49, %p50
    %p53 = scmp.ne.s32.totalorder %s36, %s52
    %p54 = scmp.eq.s32.totalorder %s28, 0
    %p55 = por %p53, %p54
    %s56 = ssub.s32 %s22, %s29
    %p57 = scmp.eq.s32.totalorder %s56, 0
    %s59 = sadd.s32 %s58, 1
    %s60 = scalar_select %p57, %s58, %s59
    %p63 = pneg %p57
    %p64 = scmp.eq.s32.totalorder %s22, 1
    %p65 = por %p63, %p64
    %p66 = scmp.ne.s32.totalorder %s58, %s61
    %p67 = scmp.eq.s32.totalorder %s22, 0
    %p68 = por %p66, %p67
    %p69 = scmp.ne.s32.totalorder %s58, %s61
    %p70 = scmp.eq.s32.totalorder %s27, 1
    %p71 = por %p69, %p70
    %p72 = scmp.ne.s32.totalorder %s61, %s62
    %p73 = scmp.eq.s32.totalorder %s27, 0
    %p74 = por %p72, %p73
    %p75 = scmp.ne.s32.totalorder %s61, %s62
    %p76 = scmp.eq.s32.totalorder %s28, 1
    %p77 = por %p75, %p76
    %p79 = scmp.ne.s32.totalorder %s62, %s78
    %p80 = scmp.eq.s32.totalorder %s28, 0
    %p81 = por %p79, %p80
    %s82 = ssub.s32 %s22, %s29
    %p83 = scmp.eq.s32.totalorder %s82, 0
    %s85 = sadd.s32 %s84, 1
    %s86 = scalar_select %p83, %s84, %s85
    %p89 = pneg %p83
    %p90 = scmp.eq.s32.totalorder %s22, 1
    %p91 = por %p89, %p90
    %p92 = scmp.ne.s32.totalorder %s84, %s87
    %p93 = scmp.eq.s32.totalorder %s22, 0
    %p94 = por %p92, %p93
    %p95 = scmp.ne.s32.totalorder %s84, %s87
    %p96 = scmp.eq.s32.totalorder %s27, 1
    %p97 = por %p95, %p96
    %p98 = scmp.ne.s32.totalorder %s87, %s88
    %p99 = scmp.eq.s32.totalorder %s27, 0
    %p100 = por %p98, %p99
    %p101 = scmp.ne.s32.totalorder %s87, %s88
    %p102 = scmp.eq.s32.totalorder %s28, 1
    %p103 = por %p101, %p102
    %p105 = scmp.ne.s32.totalorder %s88, %s104
    %p106 = scmp.eq.s32.totalorder %s28, 0
    %p107 = por %p105, %p106
    %s109 = sadd.s32 %s108, 1
    %p112 = scmp.eq.s32.totalorder %s22, 1
    %p113 = scmp.ne.s32.totalorder %s108, %s110
    %p114 = scmp.eq.s32.totalorder %s22, 0
    %p115 = por %p113, %p114
    %p116 = scmp.ne.s32.totalorder %s108, %s110
    %p117 = scmp.eq.s32.totalorder %s27, 1
    %p118 = por %p116, %p117
    %p119 = scmp.ne.s32.totalorder %s110, %s111
    %p120 = scmp.eq.s32.totalorder %s27, 0
    %p121 = por %p119, %p120
    %p122 = scmp.ne.s32.totalorder %s110, %s111
    %p123 = scmp.eq.s32.totalorder %s28, 1
    %p124 = por %p122, %p123
    %p126 = scmp.ne.s32.totalorder %s111, %s125
    %p127 = scmp.eq.s32.totalorder %s28, 0
    %p128 = por %p126, %p127
    %s130 = sadd.s32 %s129, 1
    %p133 = scmp.eq.s32.totalorder %s22, 1
    %p134 = scmp.ne.s32.totalorder %s129, %s131
    %p135 = scmp.eq.s32.totalorder %s22, 0
    %p136 = por %p134, %p135
    %p137 = scmp.ne.s32.totalorder %s129, %s131
    %p138 = scmp.eq.s32.totalorder %s27, 1
    %p139 = por %p137, %p138
    %p140 = scmp.ne.s32.totalorder %s131, %s132
    %p141 = scmp.eq.s32.totalorder %s27, 0
    %p142 = por %p140, %p141
    %p143 = scmp.ne.s32.totalorder %s131, %s132
    %p144 = scmp.eq.s32.totalorder %s28, 1
    %p145 = por %p143, %p144
    %p147 = scmp.ne.s32.totalorder %s132, %s146
    %p148 = scmp.eq.s32.totalorder %s28, 0
    %p149 = por %p147, %p148
    %s151 = sadd.s32 %s150, 1
    %p154 = scmp.eq.s32.totalorder %s22, 1
    %p155 = scmp.ne.s32.totalorder %s150, %s152
    %p156 = scmp.eq.s32.totalorder %s22, 0
    %p157 = por %p155, %p156
    %p158 = scmp.ne.s32.totalorder %s150, %s152
    %p159 = scmp.eq.s32.totalorder %s27, 1
    %p160 = por %p158, %p159
    %p161 = scmp.ne.s32.totalorder %s152, %s153
    %p162 = scmp.eq.s32.totalorder %s27, 0
    %p163 = por %p161, %p162
    %p164 = scmp.ne.s32.totalorder %s152, %s153
    %p165 = scmp.eq.s32.totalorder %s28, 1
    %p166 = por %p164, %p165
    %p168 = scmp.ne.s32.totalorder %s153, %s167
    %p169 = scmp.eq.s32.totalorder %s28, 0
    %p170 = por %p168, %p169
    %s172 = sadd.s32 %s171, 1
    %p175 = scmp.eq.s32.totalorder %s22, 1
    %p176 = scmp.ne.s32.totalorder %s171, %s173
    %p177 = scmp.eq.s32.totalorder %s22, 0
    %p178 = por %p176, %p177
    %p179 = scmp.ne.s32.totalorder %s171, %s173
    %p180 = scmp.eq.s32.totalorder %s27, 1
    %p181 = por %p179, %p180
    %p182 = scmp.ne.s32.totalorder %s173, %s174
    %p183 = scmp.eq.s32.totalorder %s27, 0
    %p184 = por %p182, %p183
    %p185 = scmp.ne.s32.totalorder %s173, %s174
    %p186 = scmp.eq.s32.totalorder %s28, 1
    %p187 = por %p185, %p186
    %p189 = scmp.ne.s32.totalorder %s174, %s188
    %p190 = scmp.eq.s32.totalorder %s28, 0
    %p191 = por %p189, %p190
    %s193 = sadd.s32 %s192, 1
    %p196 = scmp.eq.s32.totalorder %s22, 1
    %p197 = scmp.ne.s32.totalorder %s192, %s194
    %p198 = scmp.eq.s32.totalorder %s22, 0
    %p199 = por %p197, %p198
    %p200 = scmp.ne.s32.totalorder %s192, %s194
    %p201 = scmp.eq.s32.totalorder %s27, 1
    %p202 = por %p200, %p201
    %p203 = scmp.ne.s32.totalorder %s194, %s195
    %p204 = scmp.eq.s32.totalorder %s27, 0
    %p205 = por %p203, %p204
    %p206 = scmp.ne.s32.totalorder %s194, %s195
    %p207 = scmp.eq.s32.totalorder %s28, 1
    %p208 = por %p206, %p207
    %p210 = scmp.ne.s32.totalorder %s195, %s209
    %p211 = scmp.eq.s32.totalorder %s28, 0
    %p212 = por %p210, %p211
    %s214 = sadd.s32 %s213, 1
    %p217 = scmp.eq.s32.totalorder %s22, 1
    %p218 = scmp.ne.s32.totalorder %s213, %s215
    %p219 = scmp.eq.s32.totalorder %s22, 0
    %p220 = por %p218, %p219
    %p221 = scmp.ne.s32.totalorder %s213, %s215
    %p222 = scmp.eq.s32.totalorder %s27, 1
    %p223 = por %p221, %p222
    %p224 = scmp.ne.s32.totalorder %s215, %s216
    %p225 = scmp.eq.s32.totalorder %s27, 0
    %p226 = por %p224, %p225
    %p227 = scmp.ne.s32.totalorder %s215, %s216
    %p228 = scmp.eq.s32.totalorder %s28, 1
    %p229 = por %p227, %p228
    %p231 = scmp.ne.s32.totalorder %s216, %s230
    %p232 = scmp.eq.s32.totalorder %s28, 0
    %p233 = por %p231, %p232
    %s235 = sadd.s32 %s234, 1
    %p238 = scmp.eq.s32.totalorder %s22, 1
    %p239 = scmp.ne.s32.totalorder %s234, %s236
    %p240 = scmp.eq.s32.totalorder %s22, 0
    %p241 = por %p239, %p240
    %p242 = scmp.ne.s32.totalorder %s234, %s236
    %p243 = scmp.eq.s32.totalorder %s27, 1
    %p244 = por %p242, %p243
    %p245 = scmp.ne.s32.totalorder %s236, %s237
    %p246 = scmp.eq.s32.totalorder %s27, 0
    %p247 = por %p245, %p246
    %p248 = scmp.ne.s32.totalorder %s236, %s237
    %p249 = scmp.eq.s32.totalorder %s28, 1
    %p250 = por %p248, %p249
    %p252 = scmp.ne.s32.totalorder %s237, %s251
    %p253 = scmp.eq.s32.totalorder %s28, 0
    %p254 = por %p252, %p253
    %s256 = sadd.s32 %s255, 1
    %p259 = scmp.eq.s32.totalorder %s22, 1
    %p260 = scmp.ne.s32.totalorder %s255, %s257
    %p261 = scmp.eq.s32.totalorder %s22, 0
    %p262 = por %p260, %p261
    %p263 = scmp.ne.s32.totalorder %s255, %s257
    %p264 = scmp.eq.s32.totalorder %s27, 1
    %p265 = por %p263, %p264
    %p266 = scmp.ne.s32.totalorder %s257, %s258
    %p267 = scmp.eq.s32.totalorder %s27, 0
    %p268 = por %p266, %p267
    %p269 = scmp.ne.s32.totalorder %s257, %s258
    %p270 = scmp.eq.s32.totalorder %s28, 1
    %p271 = por %p269, %p270
    %p273 = scmp.ne.s32.totalorder %s258, %s272
    %p274 = scmp.eq.s32.totalorder %s28, 0
    %p275 = por %p273, %p274
    %s277 = sadd.s32 %s276, 1
    %p280 = scmp.eq.s32.totalorder %s22, 1
    %p281 = scmp.ne.s32.totalorder %s276, %s278
    %p282 = scmp.eq.s32.totalorder %s22, 0
    %p283 = por %p281, %p282
    %p284 = scmp.ne.s32.totalorder %s276, %s278
    %p285 = scmp.eq.s32.totalorder %s27, 1
    %p286 = por %p284, %p285
    %p287 = scmp.ne.s32.totalorder %s278, %s279
    %p288 = scmp.eq.s32.totalorder %s27, 0
    %p289 = por %p287, %p288
    %p290 = scmp.ne.s32.totalorder %s278, %s279
    %p291 = scmp.eq.s32.totalorder %s28, 1
    %p292 = por %p290, %p291
    %p294 = scmp.ne.s32.totalorder %s279, %s293
    %p295 = scmp.eq.s32.totalorder %s28, 0
    %p296 = por %p294, %p295
    %s298 = sadd.s32 %s297, 1
    %p301 = scmp.eq.s32.totalorder %s22, 1
    %p302 = scmp.ne.s32.totalorder %s297, %s299
    %p303 = scmp.eq.s32.totalorder %s22, 0
    %p304 = por %p302, %p303
    %p305 = scmp.ne.s32.totalorder %s297, %s299
    %p306 = scmp.eq.s32.totalorder %s27, 1
    %p307 = por %p305, %p306
    %p308 = scmp.ne.s32.totalorder %s299, %s300
    %p309 = scmp.eq.s32.totalorder %s27, 0
    %p310 = por %p308, %p309
    %p311 = scmp.ne.s32.totalorder %s299, %s300
    %p312 = scmp.eq.s32.totalorder %s28, 1
    %p313 = por %p311, %p312
    %p315 = scmp.ne.s32.totalorder %s300, %s314
    %p316 = scmp.eq.s32.totalorder %s28, 0
    %p317 = por %p315, %p316
    %s319 = sadd.s32 %s318, 1
    %p322 = scmp.eq.s32.totalorder %s22, 1
    %p323 = scmp.ne.s32.totalorder %s318, %s320
    %p324 = scmp.eq.s32.totalorder %s22, 0
    %p325 = por %p323, %p324
    %p326 = scmp.ne.s32.totalorder %s318, %s320
    %p327 = scmp.eq.s32.totalorder %s27, 1
    %p328 = por %p326, %p327
    %p329 = scmp.ne.s32.totalorder %s320, %s321
    %p330 = scmp.eq.s32.totalorder %s27, 0
    %p331 = por %p329, %p330
    %p332 = scmp.ne.s32.totalorder %s320, %s321
    %p333 = scmp.eq.s32.totalorder %s28, 1
    %p334 = por %p332, %p333
    %p336 = scmp.ne.s32.totalorder %s321, %s335
    %p337 = scmp.eq.s32.totalorder %s28, 0
    %p338 = por %p336, %p337
    %s340 = sadd.s32 %s339, 1
    %p343 = scmp.eq.s32.totalorder %s22, 1
    %p344 = scmp.ne.s32.totalorder %s339, %s341
    %p345 = scmp.eq.s32.totalorder %s22, 0
    %p346 = por %p344, %p345
    %p347 = scmp.ne.s32.totalorder %s339, %s341
    %p348 = scmp.eq.s32.totalorder %s27, 1
    %p349 = por %p347, %p348
    %p350 = scmp.ne.s32.totalorder %s341, %s342
    %p351 = scmp.eq.s32.totalorder %s27, 0
    %p352 = por %p350, %p351
    %p353 = scmp.ne.s32.totalorder %s341, %s342
    %p354 = scmp.eq.s32.totalorder %s28, 1
    %p355 = por %p353, %p354
    %p357 = scmp.ne.s32.totalorder %s342, %s356
    %p358 = scmp.eq.s32.totalorder %s28, 0
    %p359 = por %p357, %p358
    %s361 = sadd.s32 %s360, 1
    %p364 = scmp.eq.s32.totalorder %s22, 1
    %p365 = scmp.ne.s32.totalorder %s360, %s362
    %p366 = scmp.eq.s32.totalorder %s22, 0
    %p367 = por %p365, %p366
    %p368 = scmp.ne.s32.totalorder %s360, %s362
    %p369 = scmp.eq.s32.totalorder %s27, 1
    %p370 = por %p368, %p369
    %p371 = scmp.ne.s32.totalorder %s362, %s363
    %p372 = scmp.eq.s32.totalorder %s27, 0
    %p373 = por %p371, %p372
    %p374 = scmp.ne.s32.totalorder %s362, %s363
    %p375 = scmp.eq.s32.totalorder %s28, 1
    %p376 = por %p374, %p375
    %p378 = scmp.ne.s32.totalorder %s363, %s377
    %p379 = scmp.eq.s32.totalorder %s28, 0
    %p380 = por %p378, %p379
    %s381 = ssub.s32 %s22, %s29
    %p382 = scmp.eq.s32.totalorder %s381, 0
    %s384 = sadd.s32 %s383, 1
    %s385 = scalar_select %p382, %s383, %s384
    %p388 = pneg %p382
    %p389 = scmp.eq.s32.totalorder %s22, 1
    %p390 = por %p388, %p389
    %p391 = scmp.ne.s32.totalorder %s383, %s386
    %p392 = scmp.eq.s32.totalorder %s22, 0
    %p393 = por %p391, %p392
    %p394 = scmp.ne.s32.totalorder %s383, %s386
    %p395 = scmp.eq.s32.totalorder %s27, 1
    %p396 = por %p394, %p395
    %p397 = scmp.ne.s32.totalorder %s386, %s387
    %p398 = scmp.eq.s32.totalorder %s27, 0
    %p399 = por %p397, %p398
    %p400 = scmp.ne.s32.totalorder %s386, %s387
    %p401 = scmp.eq.s32.totalorder %s28, 1
    %p402 = por %p400, %p401
    %p404 = scmp.ne.s32.totalorder %s387, %s403
    %p405 = scmp.eq.s32.totalorder %s28, 0
    %p406 = por %p404, %p405
    %p407 = scmp.le.s32.totalorder 1, %s22
    %p408 = scmp.lt.s32.totalorder %s22, 3
    %p409 = pnand %p407, %p408
    %p410 = pneg %p409
    // Predicated region
    $region9: #{cross_self_attention_forward.1} parent=5 // pred_check
      _
    $region10: #{cross_self_attention_forward.1} parent=5 // pred_check_branch
      %412 = sbr.rel (%p409) target = $region12
    $region11: #{cross_self_attention_forward.1} parent=5 // pred_region
      %s413 = ssub.s32 %s22, 1
      // Predicated region
      $region13: #{cross_self_attention_forward.1} parent=11 // pred_check
        %p414 = pneg %p121
      $region14: #{cross_self_attention_forward.1} parent=11 // pred_check_branch
        %416 = sbr.rel (%p414) target = $region16
      $region15: #{cross_self_attention_forward.1} parent=11 // pred_region
        _
      $region16: #{cross_self_attention_forward.1} parent=11 // pred_fallthru
        _
      // Predicated region
      $region17: #{cross_self_attention_forward.1} parent=11 // pred_check
        %p417 = pneg %p142
      $region18: #{cross_self_attention_forward.1} parent=11 // pred_check_branch
        %419 = sbr.rel (%p417) target = $region20
      $region19: #{cross_self_attention_forward.1} parent=11 // pred_region
        _
      $region20: #{cross_self_attention_forward.1} parent=11 // pred_fallthru
        _
      // Predicated region
      $region21: #{cross_self_attention_forward.1} parent=11 // pred_check
        %p420 = pneg %p163
      $region22: #{cross_self_attention_forward.1} parent=11 // pred_check_branch
        %422 = sbr.rel (%p420) target = $region24
      $region23: #{cross_self_attention_forward.1} parent=11 // pred_region
        _
      $region24: #{cross_self_attention_forward.1} parent=11 // pred_fallthru
        _
      // Predicated region
      $region25: #{cross_self_attention_forward.1} parent=11 // pred_check
        %p423 = pneg %p184
      $region26: #{cross_self_attention_forward.1} parent=11 // pred_check_branch
        %425 = sbr.rel (%p423) target = $region28
      $region27: #{cross_self_attention_forward.1} parent=11 // pred_region
        _
      $region28: #{cross_self_attention_forward.1} parent=11 // pred_fallthru
        _
      // Predicated region
      $region29: #{cross_self_attention_forward.1} parent=11 // pred_check
        %p426 = pneg %p205
      $region30: #{cross_self_attention_forward.1} parent=11 // pred_check_branch
        %428 = sbr.rel (%p426) target = $region32
      $region31: #{cross_self_attention_forward.1} parent=11 // pred_region
        _
      $region32: #{cross_self_attention_forward.1} parent=11 // pred_fallthru
        _
      // Predicated region
      $region33: #{cross_self_attention_forward.1} parent=11 // pred_check
        %p429 = pneg %p226
      $region34: #{cross_self_attention_forward.1} parent=11 // pred_check_branch
        %431 = sbr.rel (%p429) target = $region36
      $region35: #{cross_self_attention_forward.1} parent=11 // pred_region
        _
      $region36: #{cross_self_attention_forward.1} parent=11 // pred_fallthru
        _
      // Predicated region
      $region37: #{cross_self_attention_forward.1} parent=11 // pred_check
        %p432 = pneg %p247
      $region38: #{cross_self_attention_forward.1} parent=11 // pred_check_branch
        %434 = sbr.rel (%p432) target = $region40
      $region39: #{cross_self_attention_forward.1} parent=11 // pred_region
        _
      $region40: #{cross_self_attention_forward.1} parent=11 // pred_fallthru
        _
      // Predicated region
      $region41: #{cross_self_attention_forward.1} parent=11 // pred_check
        %p435 = pneg %p268
      $region42: #{cross_self_attention_forward.1} parent=11 // pred_check_branch
        %437 = sbr.rel (%p435) target = $region44
      $region43: #{cross_self_attention_forward.1} parent=11 // pred_region
        _
      $region44: #{cross_self_attention_forward.1} parent=11 // pred_fallthru
        _
      // Predicated region
      $region45: #{cross_self_attention_forward.1} parent=11 // pred_check
        %p438 = pneg %p289
      $region46: #{cross_self_attention_forward.1} parent=11 // pred_check_branch
        %440 = sbr.rel (%p438) target = $region48
      $region47: #{cross_self_attention_forward.1} parent=11 // pred_region
        _
      $region48: #{cross_self_attention_forward.1} parent=11 // pred_fallthru
        _
      // Predicated region
      $region49: #{cross_self_attention_forward.1} parent=11 // pred_check
        %p441 = pneg %p310
      $region50: #{cross_self_attention_forward.1} parent=11 // pred_check_branch
        %443 = sbr.rel (%p441) target = $region52
      $region51: #{cross_self_attention_forward.1} parent=11 // pred_region
        _
      $region52: #{cross_self_attention_forward.1} parent=11 // pred_fallthru
        _
      // Predicated region
      $region53: #{cross_self_attention_forward.1} parent=11 // pred_check
        %p444 = pneg %p331
      $region54: #{cross_self_attention_forward.1} parent=11 // pred_check_branch
        %446 = sbr.rel (%p444) target = $region56
      $region55: #{cross_self_attention_forward.1} parent=11 // pred_region
        _
      $region56: #{cross_self_attention_forward.1} parent=11 // pred_fallthru
        _
      // Predicated region
      $region57: #{cross_self_attention_forward.1} parent=11 // pred_check
        %p447 = pneg %p352
      $region58: #{cross_self_attention_forward.1} parent=11 // pred_check_branch
        %449 = sbr.rel (%p447) target = $region60
      $region59: #{cross_self_attention_forward.1} parent=11 // pred_region
        _
      $region60: #{cross_self_attention_forward.1} parent=11 // pred_fallthru
        _
      // Predicated region
      $region61: #{cross_self_attention_forward.1} parent=11 // pred_check
        %p450 = pneg %p373
      $region62: #{cross_self_attention_forward.1} parent=11 // pred_check_branch
        %452 = sbr.rel (%p450) target = $region64
      $region63: #{cross_self_attention_forward.1} parent=11 // pred_region
        _
      $region64: #{cross_self_attention_forward.1} parent=11 // pred_fallthru
        _
    $region12: #{cross_self_attention_forward.1} parent=5 // pred_fallthru
      _
    %p453 = scmp.lt.s32.totalorder %s22, 2
    // Predicated region
    $region65: #{cross_self_attention_forward.1} parent=5 // pred_check
      %p454 = pneg %p453
    $region66: #{cross_self_attention_forward.1} parent=5 // pred_check_branch
      %456 = sbr.rel (%p454) target = $region68
    $region67: #{cross_self_attention_forward.1} parent=5 // pred_region
      // Predicated region
      $region69: #{cross_self_attention_forward.1} parent=67 // pred_check
        %p457 = pneg %p42
      $region70: #{cross_self_attention_forward.1} parent=67 // pred_check_branch
        %459 = sbr.rel (%p457) target = $region72
      $region71: #{cross_self_attention_forward.1} parent=67 // pred_region
        %p460 = scmp.lt.s32.totalorder %s22, 1
        %s461 = scalar_select %p460, %s22, 1
        %s462 = smul.addr %s461, 3
        %s463 = smul.addr %s462, 8
        %s464 = scalar_lea.vmem %s0, %s463
      $region72: #{cross_self_attention_forward.1} parent=67 // pred_fallthru
        _
      // Predicated region
      $region73: #{cross_self_attention_forward.1} parent=67 // pred_check
        %p465 = pneg %p68
      $region74: #{cross_self_attention_forward.1} parent=67 // pred_check_branch
        %467 = sbr.rel (%p465) target = $region76
      $region75: #{cross_self_attention_forward.1} parent=67 // pred_region
        %p468 = scmp.lt.s32.totalorder %s22, 1
        %s469 = scalar_select %p468, %s22, 1
        %s470 = smul.addr %s469, 3
        %s471 = smul.addr %s470, 8
        %s472 = scalar_lea.vmem %s1, %s471
      $region76: #{cross_self_attention_forward.1} parent=67 // pred_fallthru
        _
      // Predicated region
      $region77: #{cross_self_attention_forward.1} parent=67 // pred_check
        %p473 = pneg %p94
      $region78: #{cross_self_attention_forward.1} parent=67 // pred_check_branch
        %475 = sbr.rel (%p473) target = $region80
      $region79: #{cross_self_attention_forward.1} parent=67 // pred_region
        %p476 = scmp.lt.s32.totalorder %s22, 1
        %s477 = scalar_select %p476, %s22, 1
        %s478 = scalar_lea.vmem %s2, %s477
      $region80: #{cross_self_attention_forward.1} parent=67 // pred_fallthru
        _
    $region68: #{cross_self_attention_forward.1} parent=5 // pred_fallthru
      _
    %p479 = scmp.le.s32.totalorder 1, %s22
    %p480 = scmp.lt.s32.totalorder %s22, 3
    %p481 = pnand %p479, %p480
    %p482 = pneg %p481
    // Predicated region
    $region81: #{cross_self_attention_forward.1} parent=5 // pred_check
      _
    $region82: #{cross_self_attention_forward.1} parent=5 // pred_check_branch
      %484 = sbr.rel (%p481) target = $region84
    $region83: #{cross_self_attention_forward.1} parent=5 // pred_region
      %s485 = ssub.s32 %s22, 1
      %p486 = scmp.lt.s32.totalorder %s27, 1
      %s487 = scalar_select %p486, %s27, 1
      %s488 = smul.addr %s487, 3
      %s489 = smul.addr %s488, 8
      %s490 = scalar_lea.vmem %s0, %s489
      %p491 = pneg %p48
      %p492 = pneg %p45
      %p493 = scmp.lt.s32.totalorder %s27, 1
      %s494 = scalar_select %p493, %s27, 1
      %s495 = smul.addr %s494, 3
      %s496 = smul.addr %s495, 8
      %s497 = scalar_lea.vmem %s1, %s496
      %p498 = pneg %p74
      %p499 = pneg %p71
      %p500 = scmp.lt.s32.totalorder %s27, 1
      %s501 = scalar_select %p500, %s27, 1
      %s502 = scalar_lea.vmem %s2, %s501
      %p503 = pneg %p100
      %p504 = pneg %p97
      %p505 = pneg %p121
      %p506 = pneg %p118
      %p507 = pneg %p142
      %p508 = pneg %p139
      %p509 = pneg %p163
      %p510 = pneg %p160
      %p511 = pneg %p184
      %p512 = pneg %p181
      %p513 = pneg %p205
      %p514 = pneg %p202
      %p515 = pneg %p226
      %p516 = pneg %p223
      %p517 = pneg %p247
      %p518 = pneg %p244
      %p519 = pneg %p268
      %p520 = pneg %p265
      %p521 = pneg %p289
      %p522 = pneg %p286
      %p523 = pneg %p310
      %p524 = pneg %p307
      %p525 = pneg %p331
      %p526 = pneg %p328
      %p527 = pneg %p352
      %p528 = pneg %p349
      %p529 = pneg %p373
      %p530 = pneg %p370
      %p531 = pneg %p399
      %p532 = pneg %p396
      %p533 = scmp.lt.s32.totalorder %s27, 1
      %s534 = scalar_select %p533, %s27, 1
      %s535 = smul.addr %s534, 3
      %s536 = smul.addr %s535, 8
      %s537 = scalar_lea.vmem %s16, %s536
      %p538 = scmp.lt.s32.totalorder %s27, 1
      %s539 = scalar_select %p538, %s27, 1
      %s540 = smul.addr %s539, 3
      %s541 = smul.addr %s540, 8
      %s542 = scalar_lea.vmem %s0, %s541
      %p543 = scmp.lt.s32.totalorder %s27, 1
      %s544 = scalar_select %p543, %s27, 1
      %s545 = smul.addr %s544, 3
      %s546 = smul.addr %s545, 8
      %s547 = scalar_lea.vmem %s1, %s546
      %p548 = scmp.lt.s32.totalorder %s27, 1
      %s549 = scalar_select %p548, %s27, 1
      %s550 = scalar_lea.vmem %s2, %s549
      %p551 = scmp.lt.s32.totalorder %s27, 1
      %s552 = scalar_select %p551, %s27, 1
      %s553 = smul.addr %s552, 3
      %s554 = smul.addr %s553, 8
      %s555 = scalar_lea.vmem %s16, %s554
      %v556 = vld [vmem:[%s542] sm:$0xff]
      %v557 = vld [vmem:[%s542 + $0x8] sm:$0xff]
      %v558 = vld [vmem:[%s542 + $0x10] sm:$0xff]
      %v559 = vld [vmem:[%s547] sm:$0xff]
      %v560 = vld [vmem:[%s547 + $0x8] sm:$0xff]
      %v561 = vld [vmem:[%s547 + $0x10] sm:$0xff]
      %v562 = vld [vmem:[%s550] sm:$0x1]
      %vm563 = vcmp.gt.f32.partialorder %v562, 0.5
      %v564 = vsel %vm563, 0.0, -1e+30
      %v565 = vld [vmem:[%s3] sm:$0xff]
      %v566 = vld [vmem:[%s3 + $0x8] sm:$0xff]
      %v567 = vld [vmem:[%s3 + $0x10] sm:$0xff]
      %v568 = vld [vmem:[%s3 + $0x18] sm:$0xff]
      %v569 = vld [vmem:[%s3 + $0x20] sm:$0xff]
      %v570 = vld [vmem:[%s3 + $0x28] sm:$0xff]
      %v571 = vld [vmem:[%s3 + $0x30] sm:$0xff]
      %v572 = vld [vmem:[%s3 + $0x38] sm:$0xff]
      %v573 = vld [vmem:[%s3 + $0x40] sm:$0xff]
      %v574 = vld [vmem:[%s3 + $0x48] sm:$0xff]
      %v575 = vld [vmem:[%s3 + $0x50] sm:$0xff]
      %v576 = vld [vmem:[%s3 + $0x58] sm:$0xff]
      %v577 = vld [vmem:[%s3 + $0x60] sm:$0xff]
      %v578 = vld [vmem:[%s3 + $0x68] sm:$0xff]
      %v579 = vld [vmem:[%s3 + $0x70] sm:$0xff]
      %v580 = vld [vmem:[%s3 + $0x78] sm:$0xff]
      %v581 = vld [vmem:[%s4] sm:$0xff]
      %v582 = vld [vmem:[%s4 + $0x8] sm:$0xff]
      %v583 = vld [vmem:[%s4 + $0x10] sm:$0xff]
      %v584 = vld [vmem:[%s4 + $0x18] sm:$0xff]
      %v585 = vld [vmem:[%s4 + $0x20] sm:$0xff]
      %v586 = vld [vmem:[%s4 + $0x28] sm:$0xff]
      %v587 = vld [vmem:[%s4 + $0x30] sm:$0xff]
      %v588 = vld [vmem:[%s4 + $0x38] sm:$0xff]
      %v589 = vld [vmem:[%s4 + $0x40] sm:$0xff]
      %v590 = vld [vmem:[%s4 + $0x48] sm:$0xff]
      %v591 = vld [vmem:[%s4 + $0x50] sm:$0xff]
      %v592 = vld [vmem:[%s4 + $0x58] sm:$0xff]
      %v593 = vld [vmem:[%s4 + $0x60] sm:$0xff]
      %v594 = vld [vmem:[%s4 + $0x68] sm:$0xff]
      %v595 = vld [vmem:[%s4 + $0x70] sm:$0xff]
      %v596 = vld [vmem:[%s4 + $0x78] sm:$0xff]
      %597 = vmatprep.subr.mxu0 0.0
      %598 = vmatpush1.msra.mxu0 %v581
      %599 = vmatprep.subr.mxu0 0.0
      %600 = vmatpush1.msra.mxu0 %v582
      %601 = vmatprep.subr.mxu0 0.0
      %602 = vmatpush1.msra.mxu0 %v583
      %603 = vmatprep.subr.mxu0 0.0
      %604 = vmatpush1.msra.mxu0 %v584
      %605 = vmatprep.subr.mxu0 0.0
      %606 = vmatpush1.msra.mxu0 %v585
      %607 = vmatprep.subr.mxu0 0.0
      %608 = vmatpush1.msra.mxu0 %v586
      %609 = vmatprep.subr.mxu0 0.0
      %610 = vmatpush1.msra.mxu0 %v587
      %611 = vmatprep.subr.mxu0 0.0
      %612 = vmatpush1.msra.mxu0 %v588
      %613 = vmatprep.subr.mxu0 0.0
      %614 = vmatpush1.msra.mxu0 %v589
      %615 = vmatprep.subr.mxu0 0.0
      %616 = vmatpush1.msra.mxu0 %v590
      %617 = vmatprep.subr.mxu0 0.0
      %618 = vmatpush1.msra.mxu0 %v591
      %619 = vmatprep.subr.mxu0 0.0
      %620 = vmatpush1.msra.mxu0 %v592
      %621 = vmatprep.subr.mxu0 0.0
      %622 = vmatpush1.msra.mxu0 %v593
      %623 = vmatprep.subr.mxu0 0.0
      %624 = vmatpush1.msra.mxu0 %v594
      %625 = vmatprep.subr.mxu0 0.0
      %626 = vmatpush1.msra.mxu0 %v595
      %627 = vmatprep.subr.mxu0 0.0
      %628 = vmatpush1.msra.mxu0 %v596
      %629 = vmatprep.subr.mxu0 0.0
      %630 = vmatpush1.msra.mxu0 0.0
      %631 = vmatprep.subr.mxu0 0.0
      %632 = vmatpush1.msra.mxu0 0.0
      %633 = vmatprep.subr.mxu0 0.0
      %634 = vmatpush1.msra.mxu0 0.0
      %635 = vmatprep.subr.mxu0 0.0
      %636 = vmatpush1.msra.mxu0 0.0
      %637 = vmatprep.subr.mxu0 0.0
      %638 = vmatpush1.msra.mxu0 0.0
      %639 = vmatprep.subr.mxu0 0.0
      %640 = vmatpush1.msra.mxu0 0.0
      %641 = vmatprep.subr.mxu0 0.0
      %642 = vmatpush1.msra.mxu0 0.0
      %643 = vmatprep.subr.mxu0 0.0
      %644 = vmatpush1.msra.mxu0 0.0
      %645 = vmatprep.subr.mxu0 0.0
      %646 = vmatpush1.msra.mxu0 0.0
      %647 = vmatprep.subr.mxu0 0.0
      %648 = vmatpush1.msra.mxu0 0.0
      %649 = vmatprep.subr.mxu0 0.0
      %650 = vmatpush1.msra.mxu0 0.0
      %651 = vmatprep.subr.mxu0 0.0
      %652 = vmatpush1.msra.mxu0 0.0
      %653 = vmatprep.subr.mxu0 0.0
      %654 = vmatpush1.msra.mxu0 0.0
      %655 = vmatprep.subr.mxu0 0.0
      %656 = vmatpush1.msra.mxu0 0.0
      %657 = vmatprep.subr.mxu0 0.0
      %658 = vmatpush1.msra.mxu0 0.0
      %659 = vmatprep.subr.mxu0 0.0
      %660 = vmatpush1.msra.mxu0 0.0
      %661 = vmatprep.mubr.f32.mxu0 0.0
      %662 = vmatmul.mubr.f32.gmra.mrb[0].mxu0 %v559
      %v663 = vpop.f32.mrb[0].mxu0
      %v664 = vadd.f32 0.0, %v663
      %v665 = vpop.f32.mrb[0].mxu0
      %666 = vmatprep.mubr.f32.mxu0 0.0
      %667 = vmatmul.mubr.f32.gmra.mrb[0].mxu0 %v560
      %v668 = vpop.f32.mrb[0].mxu0
      %v669 = vadd.f32 0.0, %v668
      %v670 = vpop.f32.mrb[0].mxu0
      %671 = vmatprep.mubr.f32.mxu0 0.0
      %672 = vmatmul.mubr.f32.gmra.mrb[0].mxu0 %v561
      %v673 = vpop.f32.mrb[0].mxu0
      %v674 = vadd.f32 0.0, %v673
      %v675 = vpop.f32.mrb[0].mxu0
      %676 = vdwg.mxu0
      %677 = vmatprep.subr.mxu0 0.0
      %678 = vmatpush1.msra.mxu0 %v565
      %679 = vmatprep.subr.mxu0 0.0
      %680 = vmatpush1.msra.mxu0 %v566
      %681 = vmatprep.subr.mxu0 0.0
      %682 = vmatpush1.msra.mxu0 %v567
      %683 = vmatprep.subr.mxu0 0.0
      %684 = vmatpush1.msra.mxu0 %v568
      %685 = vmatprep.subr.mxu0 0.0
      %686 = vmatpush1.msra.mxu0 %v569
      %687 = vmatprep.subr.mxu0 0.0
      %688 = vmatpush1.msra.mxu0 %v570
      %689 = vmatprep.subr.mxu0 0.0
      %690 = vmatpush1.msra.mxu0 %v571
      %691 = vmatprep.subr.mxu0 0.0
      %692 = vmatpush1.msra.mxu0 %v572
      %693 = vmatprep.subr.mxu0 0.0
      %694 = vmatpush1.msra.mxu0 %v573
      %695 = vmatprep.subr.mxu0 0.0
      %696 = vmatpush1.msra.mxu0 %v574
      %697 = vmatprep.subr.mxu0 0.0
      %698 = vmatpush1.msra.mxu0 %v575
      %699 = vmatprep.subr.mxu0 0.0
      %700 = vmatpush1.msra.mxu0 %v576
      %701 = vmatprep.subr.mxu0 0.0
      %702 = vmatpush1.msra.mxu0 %v577
      %703 = vmatprep.subr.mxu0 0.0
      %704 = vmatpush1.msra.mxu0 %v578
      %705 = vmatprep.subr.mxu0 0.0
      %706 = vmatpush1.msra.mxu0 %v579
      %707 = vmatprep.subr.mxu0 0.0
      %708 = vmatpush1.msra.mxu0 %v580
      %709 = vmatprep.subr.mxu0 0.0
      %710 = vmatpush1.msra.mxu0 0.0
      %711 = vmatprep.subr.mxu0 0.0
      %712 = vmatpush1.msra.mxu0 0.0
      %713 = vmatprep.subr.mxu0 0.0
      %714 = vmatpush1.msra.mxu0 0.0
      %715 = vmatprep.subr.mxu0 0.0
      %716 = vmatpush1.msra.mxu0 0.0
      %717 = vmatprep.subr.mxu0 0.0
      %718 = vmatpush1.msra.mxu0 0.0
      %719 = vmatprep.subr.mxu0 0.0
      %720 = vmatpush1.msra.mxu0 0.0
      %721 = vmatprep.subr.mxu0 0.0
      %722 = vmatpush1.msra.mxu0 0.0
      %723 = vmatprep.subr.mxu0 0.0
      %724 = vmatpush1.msra.mxu0 0.0
      %725 = vmatprep.subr.mxu0 0.0
      %726 = vmatpush1.msra.mxu0 0.0
      %727 = vmatprep.subr.mxu0 0.0
      %728 = vmatpush1.msra.mxu0 0.0
      %729 = vmatprep.subr.mxu0 0.0
      %730 = vmatpush1.msra.mxu0 0.0
      %731 = vmatprep.subr.mxu0 0.0
      %732 = vmatpush1.msra.mxu0 0.0
      %733 = vmatprep.subr.mxu0 0.0
      %734 = vmatpush1.msra.mxu0 0.0
      %735 = vmatprep.subr.mxu0 0.0
      %736 = vmatpush1.msra.mxu0 0.0
      %737 = vmatprep.subr.mxu0 0.0
      %738 = vmatpush1.msra.mxu0 0.0
      %739 = vmatprep.subr.mxu0 0.0
      %740 = vmatpush1.msra.mxu0 0.0
      %741 = vmatprep.mubr.f32.mxu0 0.0
      %742 = vmatmul.mubr.f32.gmra.mrb[0].mxu0 %v556
      %v743 = vpop.f32.mrb[0].mxu0
      %v744 = vadd.f32 %v664, %v743
      %v745 = vpop.f32.mrb[0].mxu0
      %746 = vmatprep.mubr.f32.mxu0 0.0
      %747 = vmatmul.mubr.f32.gmra.mrb[0].mxu0 %v557
      %v748 = vpop.f32.mrb[0].mxu0
      %v749 = vadd.f32 %v669, %v748
      %v750 = vpop.f32.mrb[0].mxu0
      %751 = vmatprep.mubr.f32.mxu0 0.0
      %752 = vmatmul.mubr.f32.gmra.mrb[0].mxu0 %v558
      %v753 = vpop.f32.mrb[0].mxu0
      %v754 = vadd.f32 %v674, %v753
      %v755 = vpop.f32.mrb[0].mxu0
      %756 = vdwg.mxu0
      %v757 = vld [vmem:[%s5] sm:$0x1]
      %v759 = vlaneseq
      %v760 = vshrl.u32 %v759, 7
      %v761 = vsub.s32 0, %v760
      %v762 = vrot.slane %v757, %v761
      %v764 = vadd.f32 %v744, %v762
      %v765 = vadd.f32 %v749, %v762
      %v766 = vadd.f32 %v754, %v762
      %v767 = vld [vmem:[%s6] sm:$0xff]
      %v768 = vld [vmem:[%s6 + $0x8] sm:$0xff]
      %v769 = vld [vmem:[%s6 + $0x10] sm:$0xff]
      %v770 = vld [vmem:[%s6 + $0x18] sm:$0xff]
      %v772 = vlaneseq
      %v773 = vshrl.u32 %v772, 7
      %v774 = vsub.s32 0, %v773
      %v775 = vrot.slane %v564, %v774
      %780 = vrot.lane.b32.xlu0 %v764, 96
      %v781 = vpop.permute.xlu0 %780
      %782 = vrot.lane.b32.xlu0 %v765, 96
      %v783 = vpop.permute.xlu0 %782
      %784 = vrot.lane.b32.xlu0 %v766, 96
      %v785 = vpop.permute.xlu0 %784
      %vm786 = vcmask 64512
      %v787 = vsel %vm786, %v764, 0
      %v789 = vsel %vm786, %v765, 0
      %v791 = vsel %vm786, %v766, 0
      %v793 = vsel %vm786, %v781, 0
      %v795 = vsel %vm786, %v783, 0
      %v797 = vsel %vm786, %v785, 0
      %799 = vmatprep.subr.mxu0 0.0
      %800 = vmatpush1.xpose.msra.mxu0 %v793
      %801 = vmatprep.subr.mxu0 0.0
      %802 = vmatpush1.xpose.msra.mxu0 %v795
      %803 = vmatprep.subr.mxu0 0.0
      %804 = vmatpush1.xpose.msra.mxu0 %v797
      %805 = vmatprep.subr.mxu0 0.0
      %806 = vmatpush1.xpose.msra.mxu0 0.0
      %807 = vmatprep.subr.mxu0 0.0
      %808 = vmatpush1.xpose.msra.mxu0 0.0
      %809 = vmatprep.subr.mxu0 0.0
      %810 = vmatpush1.xpose.msra.mxu0 0.0
      %811 = vmatprep.subr.mxu0 0.0
      %812 = vmatpush1.xpose.msra.mxu0 0.0
      %813 = vmatprep.subr.mxu0 0.0
      %814 = vmatpush1.xpose.msra.mxu0 0.0
      %815 = vmatprep.subr.mxu0 0.0
      %816 = vmatpush1.xpose.msra.mxu0 0.0
      %817 = vmatprep.subr.mxu0 0.0
      %818 = vmatpush1.xpose.msra.mxu0 0.0
      %819 = vmatprep.subr.mxu0 0.0
      %820 = vmatpush1.xpose.msra.mxu0 0.0
      %821 = vmatprep.subr.mxu0 0.0
      %822 = vmatpush1.xpose.msra.mxu0 0.0
      %823 = vmatprep.subr.mxu0 0.0
      %824 = vmatpush1.xpose.msra.mxu0 0.0
      %825 = vmatprep.subr.mxu0 0.0
      %826 = vmatpush1.xpose.msra.mxu0 0.0
      %827 = vmatprep.subr.mxu0 0.0
      %828 = vmatpush1.xpose.msra.mxu0 0.0
      %829 = vmatprep.subr.mxu0 0.0
      %830 = vmatpush1.xpose.msra.mxu0 0.0
      %831 = vmatprep.subr.mxu0 0.0
      %832 = vmatpush1.xpose.msra.mxu0 0.0
      %833 = vmatprep.subr.mxu0 0.0
      %834 = vmatpush1.xpose.msra.mxu0 0.0
      %835 = vmatprep.subr.mxu0 0.0
      %836 = vmatpush1.xpose.msra.mxu0 0.0
      %837 = vmatprep.subr.mxu0 0.0
      %838 = vmatpush1.xpose.msra.mxu0 0.0
      %839 = vmatprep.subr.mxu0 0.0
      %840 = vmatpush1.xpose.msra.mxu0 0.0
      %841 = vmatprep.subr.mxu0 0.0
      %842 = vmatpush1.xpose.msra.mxu0 0.0
      %843 = vmatprep.subr.mxu0 0.0
      %844 = vmatpush1.xpose.msra.mxu0 0.0
      %845 = vmatprep.subr.mxu0 0.0
      %846 = vmatpush1.xpose.msra.mxu0 0.0
      %847 = vmatprep.subr.mxu0 0.0
      %848 = vmatpush1.xpose.msra.mxu0 0.0
      %849 = vmatprep.subr.mxu0 0.0
      %850 = vmatpush1.xpose.msra.mxu0 0.0
      %851 = vmatprep.subr.mxu0 0.0
      %852 = vmatpush1.xpose.msra.mxu0 0.0
      %853 = vmatprep.subr.mxu0 0.0
      %854 = vmatpush1.xpose.msra.mxu0 0.0
      %855 = vmatprep.subr.mxu0 0.0
      %856 = vmatpush1.xpose.msra.mxu0 0.0
      %857 = vmatprep.subr.mxu0 0.0
      %858 = vmatpush1.xpose.msra.mxu0 0.0
      %859 = vmatprep.subr.mxu0 0.0
      %860 = vmatpush1.xpose.msra.mxu0 0.0
      %861 = vmatprep.subr.mxu0 0.0
      %862 = vmatpush1.xpose.msra.mxu0 0.0
      %863 = vmatprep.mubr.f32.mxu0 0.0
      %864 = vmatmul.mubr.f32.gmra.mrb[0].mxu0 %v787
      %v865 = vpop.f32.mrb[0].mxu0
      %v866 = vadd.f32 %v775, %v865
      %v867 = vpop.f32.mrb[0].mxu0
      %868 = vmatprep.mubr.f32.mxu0 0.0
      %869 = vmatmul.mubr.f32.gmra.mrb[0].mxu0 %v789
      %v870 = vpop.f32.mrb[0].mxu0
      %v871 = vadd.f32 %v775, %v870
      %v872 = vpop.f32.mrb[0].mxu0
      %873 = vmatprep.mubr.f32.mxu0 0.0
      %874 = vmatmul.mubr.f32.gmra.mrb[0].mxu0 %v791
      %v875 = vpop.f32.mrb[0].mxu0
      %v876 = vadd.f32 %v775, %v875
      %v877 = vpop.f32.mrb[0].mxu0
      %878 = vdwg.mxu0
      %vm879 = vcmask 195584
      %v880 = vsel %vm879, %v866, -inf
      %881 = vmax.xlane.f32.xlu0 %v880
      %v882 = vpop.xlane.xlu0 %881
      %v883 = vsel %vm879, %v871, -inf
      %884 = vmax.xlane.f32.xlu0 %v883
      %v885 = vpop.xlane.xlu0 %884
      %v886 = vsel %vm879, %v876, -inf
      %887 = vmax.xlane.f32.xlu0 %v886
      %v888 = vpop.xlane.xlu0 %887
      %v889 = vsub.f32 %v866, %v882
      %v890 = vsub.f32 %v871, %v885
      %v891 = vsub.f32 %v876, %v888
      %v892 = vmul.f32 %v889, 1.442695
      %v893 = vpow.pop %v892
      %v894 = vmul.f32 %v890, 1.442695
      %v895 = vpow.pop %v894
      %v896 = vmul.f32 %v891, 1.442695
      %v897 = vpow.pop %v896
      %v898 = vsel %vm879, %v893, 0.0
      %899 = vadd.xlane.f32.xlu0 %v898
      %v900 = vpop.xlane.xlu0 %899
      %v901 = vsel %vm879, %v895, 0.0
      %902 = vadd.xlane.f32.xlu0 %v901
      %v903 = vpop.xlane.xlu0 %902
      %v904 = vsel %vm879, %v897, 0.0
      %905 = vadd.xlane.f32.xlu0 %v904
      %v906 = vpop.xlane.xlu0 %905
      %907 = vrot.lane.b32.xlu0 %v764, 64
      %v908 = vpop.permute.xlu0 %907
      %909 = vrot.lane.b32.xlu0 %v765, 64
      %v910 = vpop.permute.xlu0 %909
      %911 = vrot.lane.b32.xlu0 %v766, 64
      %v912 = vpop.permute.xlu0 %911
      %v917 = vsel %vm879, %v893, 0
      %v920 = vsel %vm879, %v895, 0
      %v923 = vsel %vm879, %v897, 0
      %925 = vmatprep.subr.mxu0 0.0
      %926 = vmatpush1.msra.mxu0 %v908
      %927 = vmatprep.subr.mxu0 0.0
      %928 = vmatpush1.msra.mxu0 %v910
      %929 = vmatprep.subr.mxu0 0.0
      %930 = vmatpush1.msra.mxu0 %v912
      %931 = vmatprep.subr.mxu0 0.0
      %932 = vmatpush1.msra.mxu0 0.0
      %933 = vmatprep.subr.mxu0 0.0
      %934 = vmatpush1.msra.mxu0 0.0
      %935 = vmatprep.subr.mxu0 0.0
      %936 = vmatpush1.msra.mxu0 0.0
      %937 = vmatprep.subr.mxu0 0.0
      %938 = vmatpush1.msra.mxu0 0.0
      %939 = vmatprep.subr.mxu0 0.0
      %940 = vmatpush1.msra.mxu0 0.0
      %941 = vmatprep.subr.mxu0 0.0
      %942 = vmatpush1.msra.mxu0 0.0
      %943 = vmatprep.subr.mxu0 0.0
      %944 = vmatpush1.msra.mxu0 0.0
      %945 = vmatprep.subr.mxu0 0.0
      %946 = vmatpush1.msra.mxu0 0.0
      %947 = vmatprep.subr.mxu0 0.0
      %948 = vmatpush1.msra.mxu0 0.0
      %949 = vmatprep.subr.mxu0 0.0
      %950 = vmatpush1.msra.mxu0 0.0
      %951 = vmatprep.subr.mxu0 0.0
      %952 = vmatpush1.msra.mxu0 0.0
      %953 = vmatprep.subr.mxu0 0.0
      %954 = vmatpush1.msra.mxu0 0.0
      %955 = vmatprep.subr.mxu0 0.0
      %956 = vmatpush1.msra.mxu0 0.0
      %957 = vmatprep.subr.mxu0 0.0
      %958 = vmatpush1.msra.mxu0 0.0
      %959 = vmatprep.subr.mxu0 0.0
      %960 = vmatpush1.msra.mxu0 0.0
      %961 = vmatprep.subr.mxu0 0.0
      %962 = vmatpush1.msra.mxu0 0.0
      %963 = vmatprep.subr.mxu0 0.0
      %964 = vmatpush1.msra.mxu0 0.0
      %965 = vmatprep.subr.mxu0 0.0
      %966 = vmatpush1.msra.mxu0 0.0
      %967 = vmatprep.subr.mxu0 0.0
      %968 = vmatpush1.msra.mxu0 0.0
      %969 = vmatprep.subr.mxu0 0.0
      %970 = vmatpush1.msra.mxu0 0.0
      %971 = vmatprep.subr.mxu0 0.0
      %972 = vmatpush1.msra.mxu0 0.0
      %973 = vmatprep.subr.mxu0 0.0
      %974 = vmatpush1.msra.mxu0 0.0
      %975 = vmatprep.subr.mxu0 0.0
      %976 = vmatpush1.msra.mxu0 0.0
      %977 = vmatprep.subr.mxu0 0.0
      %978 = vmatpush1.msra.mxu0 0.0
      %979 = vmatprep.subr.mxu0 0.0
      %980 = vmatpush1.msra.mxu0 0.0
      %981 = vmatprep.subr.mxu0 0.0
      %982 = vmatpush1.msra.mxu0 0.0
      %983 = vmatprep.subr.mxu0 0.0
      %984 = vmatpush1.msra.mxu0 0.0
      %985 = vmatprep.subr.mxu0 0.0
      %986 = vmatpush1.msra.mxu0 0.0
      %987 = vmatprep.subr.mxu0 0.0
      %988 = vmatpush1.msra.mxu0 0.0
      %989 = vmatprep.mubr.f32.mxu0 0.0
      %990 = vmatmul.mubr.f32.gmra.mrb[0].mxu0 %v917
      %v991 = vpop.f32.mrb[0].mxu0
      %v992 = vadd.f32 0.0, %v991
      %v993 = vpop.f32.mrb[0].mxu0
      %994 = vmatprep.mubr.f32.mxu0 0.0
      %995 = vmatmul.mubr.f32.gmra.mrb[0].mxu0 %v920
      %v996 = vpop.f32.mrb[0].mxu0
      %v997 = vadd.f32 0.0, %v996
      %v998 = vpop.f32.mrb[0].mxu0
      %999 = vmatprep.mubr.f32.mxu0 0.0
      %1000 = vmatmul.mubr.f32.gmra.mrb[0].mxu0 %v923
      %v1001 = vpop.f32.mrb[0].mxu0
      %v1002 = vadd.f32 0.0, %v1001
      %v1003 = vpop.f32.mrb[0].mxu0
      %1004 = vdwg.mxu0
      %v1005 = vrcp.pop %v900
      %v1006 = vrcp.pop %v903
      %v1007 = vrcp.pop %v906
      %v1008 = vmul.f32 %v992, %v1005
      %v1009 = vmul.f32 %v997, %v1006
      %v1010 = vmul.f32 %v1002, %v1007
      %1011 = vrot.lane.b32.xlu0 %v764, 120
      %v1012 = vpop.permute.xlu0 %1011
      %1013 = vrot.lane.b32.xlu0 %v765, 120
      %v1014 = vpop.permute.xlu0 %1013
      %1015 = vrot.lane.b32.xlu0 %v766, 120
      %v1016 = vpop.permute.xlu0 %1015
      %1017 = vrot.lane.b32.xlu0 %v764, 88
      %v1018 = vpop.permute.xlu0 %1017
      %1019 = vrot.lane.b32.xlu0 %v765, 88
      %v1020 = vpop.permute.xlu0 %1019
      %1021 = vrot.lane.b32.xlu0 %v766, 88
      %v1022 = vpop.permute.xlu0 %1021
      %v1023 = vsel %vm786, %v1012, 0
      %v1025 = vsel %vm786, %v1014, 0
      %v1027 = vsel %vm786, %v1016, 0
      %v1029 = vsel %vm786, %v1018, 0
      %v1031 = vsel %vm786, %v1020, 0
      %v1033 = vsel %vm786, %v1022, 0
      %1035 = vmatprep.subr.mxu0 0.0
      %1036 = vmatpush1.xpose.msra.mxu0 %v1029
      %1037 = vmatprep.subr.mxu0 0.0
      %1038 = vmatpush1.xpose.msra.mxu0 %v1031
      %1039 = vmatprep.subr.mxu0 0.0
      %1040 = vmatpush1.xpose.msra.mxu0 %v1033
      %1041 = vmatprep.subr.mxu0 0.0
      %1042 = vmatpush1.xpose.msra.mxu0 0.0
      %1043 = vmatprep.subr.mxu0 0.0
      %1044 = vmatpush1.xpose.msra.mxu0 0.0
      %1045 = vmatprep.subr.mxu0 0.0
      %1046 = vmatpush1.xpose.msra.mxu0 0.0
      %1047 = vmatprep.subr.mxu0 0.0
      %1048 = vmatpush1.xpose.msra.mxu0 0.0
      %1049 = vmatprep.subr.mxu0 0.0
      %1050 = vmatpush1.xpose.msra.mxu0 0.0
      %1051 = vmatprep.subr.mxu0 0.0
      %1052 = vmatpush1.xpose.msra.mxu0 0.0
      %1053 = vmatprep.subr.mxu0 0.0
      %1054 = vmatpush1.xpose.msra.mxu0 0.0
      %1055 = vmatprep.subr.mxu0 0.0
      %1056 = vmatpush1.xpose.msra.mxu0 0.0
      %1057 = vmatprep.subr.mxu0 0.0
      %1058 = vmatpush1.xpose.msra.mxu0 0.0
      %1059 = vmatprep.subr.mxu0 0.0
      %1060 = vmatpush1.xpose.msra.mxu0 0.0
      %1061 = vmatprep.subr.mxu0 0.0
      %1062 = vmatpush1.xpose.msra.mxu0 0.0
      %1063 = vmatprep.subr.mxu0 0.0
      %1064 = vmatpush1.xpose.msra.mxu0 0.0
      %1065 = vmatprep.subr.mxu0 0.0
      %1066 = vmatpush1.xpose.msra.mxu0 0.0
      %1067 = vmatprep.subr.mxu0 0.0
      %1068 = vmatpush1.xpose.msra.mxu0 0.0
      %1069 = vmatprep.subr.mxu0 0.0
      %1070 = vmatpush1.xpose.msra.mxu0 0.0
      %1071 = vmatprep.subr.mxu0 0.0
      %1072 = vmatpush1.xpose.msra.mxu0 0.0
      %1073 = vmatprep.subr.mxu0 0.0
      %1074 = vmatpush1.xpose.msra.mxu0 0.0
      %1075 = vmatprep.subr.mxu0 0.0
      %1076 = vmatpush1.xpose.msra.mxu0 0.0
      %1077 = vmatprep.subr.mxu0 0.0
      %1078 = vmatpush1.xpose.msra.mxu0 0.0
      %1079 = vmatprep.subr.mxu0 0.0
      %1080 = vmatpush1.xpose.msra.mxu0 0.0
      %1081 = vmatprep.subr.mxu0 0.0
      %1082 = vmatpush1.xpose.msra.mxu0 0.0
      %1083 = vmatprep.subr.mxu0 0.0
      %1084 = vmatpush1.xpose.msra.mxu0 0.0
      %1085 = vmatprep.subr.mxu0 0.0
      %1086 = vmatpush1.xpose.msra.mxu0 0.0
      %1087 = vmatprep.subr.mxu0 0.0
      %1088 = vmatpush1.xpose.msra.mxu0 0.0
      %1089 = vmatprep.subr.mxu0 0.0
      %1090 = vmatpush1.xpose.msra.mxu0 0.0
      %1091 = vmatprep.subr.mxu0 0.0
      %1092 = vmatpush1.xpose.msra.mxu0 0.0
      %1093 = vmatprep.subr.mxu0 0.0
      %1094 = vmatpush1.xpose.msra.mxu0 0.0
      %1095 = vmatprep.subr.mxu0 0.0
      %1096 = vmatpush1.xpose.msra.mxu0 0.0
      %1097 = vmatprep.subr.mxu0 0.0
      %1098 = vmatpush1.xpose.msra.mxu0 0.0
      %1099 = vmatprep.mubr.f32.mxu0 0.0
      %1100 = vmatmul.mubr.f32.gmra.mrb[0].mxu0 %v1023
      %v1101 = vpop.f32.mrb[0].mxu0
      %v1102 = vadd.f32 %v775, %v1101
      %v1103 = vpop.f32.mrb[0].mxu0
      %1104 = vmatprep.mubr.f32.mxu0 0.0
      %1105 = vmatmul.mubr.f32.gmra.mrb[0].mxu0 %v1025
      %v1106 = vpop.f32.mrb[0].mxu0
      %v1107 = vadd.f32 %v775, %v1106
      %v1108 = vpop.f32.mrb[0].mxu0
      %1109 = vmatprep.mubr.f32.mxu0 0.0
      %1110 = vmatmul.mubr.f32.gmra.mrb[0].mxu0 %v1027
      %v1111 = vpop.f32.mrb[0].mxu0
      %v1112 = vadd.f32 %v775, %v1111
      %v1113 = vpop.f32.mrb[0].mxu0
      %1114 = vdwg.mxu0
      %v1115 = vsel %vm879, %v1102, -inf
      %1116 = vmax.xlane.f32.xlu0 %v1115
      %v1117 = vpop.xlane.xlu0 %1116
      %v1118 = vsel %vm879, %v1107, -inf
      %1119 = vmax.xlane.f32.xlu0 %v1118
      %v1120 = vpop.xlane.xlu0 %1119
      %v1121 = vsel %vm879, %v1112, -inf
      %1122 = vmax.xlane.f32.xlu0 %v1121
      %v1123 = vpop.xlane.xlu0 %1122
      %v1124 = vsub.f32 %v1102, %v1117
      %v1125 = vsub.f32 %v1107, %v1120
      %v1126 = vsub.f32 %v1112, %v1123
      %v1127 = vmul.f32 %v1124, 1.442695
      %v1128 = vpow.pop %v1127
      %v1129 = vmul.f32 %v1125, 1.442695
      %v1130 = vpow.pop %v1129
      %v1131 = vmul.f32 %v1126, 1.442695
      %v1132 = vpow.pop %v1131
      %v1133 = vsel %vm879, %v1128, 0.0
      %1134 = vadd.xlane.f32.xlu0 %v1133
      %v1135 = vpop.xlane.xlu0 %1134
      %v1136 = vsel %vm879, %v1130, 0.0
      %1137 = vadd.xlane.f32.xlu0 %v1136
      %v1138 = vpop.xlane.xlu0 %1137
      %v1139 = vsel %vm879, %v1132, 0.0
      %1140 = vadd.xlane.f32.xlu0 %v1139
      %v1141 = vpop.xlane.xlu0 %1140
      %1142 = vrot.lane.b32.xlu0 %v764, 56
      %v1143 = vpop.permute.xlu0 %1142
      %1144 = vrot.lane.b32.xlu0 %v765, 56
      %v1145 = vpop.permute.xlu0 %1144
      %1146 = vrot.lane.b32.xlu0 %v766, 56
      %v1147 = vpop.permute.xlu0 %1146
      %v1152 = vsel %vm879, %v1128, 0
      %v1155 = vsel %vm879, %v1130, 0
      %v1158 = vsel %vm879, %v1132, 0
      %1160 = vmatprep.subr.mxu0 0.0
      %1161 = vmatpush1.msra.mxu0 %v1143
      %1162 = vmatprep.subr.mxu0 0.0
      %1163 = vmatpush1.msra.mxu0 %v1145
      %1164 = vmatprep.subr.mxu0 0.0
      %1165 = vmatpush1.msra.mxu0 %v1147
      %1166 = vmatprep.subr.mxu0 0.0
      %1167 = vmatpush1.msra.mxu0 0.0
      %1168 = vmatprep.subr.mxu0 0.0
      %1169 = vmatpush1.msra.mxu0 0.0
      %1170 = vmatprep.subr.mxu0 0.0
      %1171 = vmatpush1.msra.mxu0 0.0
      %1172 = vmatprep.subr.mxu0 0.0
      %1173 = vmatpush1.msra.mxu0 0.0
      %1174 = vmatprep.subr.mxu0 0.0
      %1175 = vmatpush1.msra.mxu0 0.0
      %1176 = vmatprep.subr.mxu0 0.0
      %1177 = vmatpush1.msra.mxu0 0.0
      %1178 = vmatprep.subr.mxu0 0.0
      %1179 = vmatpush1.msra.mxu0 0.0
      %1180 = vmatprep.subr.mxu0 0.0
      %1181 = vmatpush1.msra.mxu0 0.0
      %1182 = vmatprep.subr.mxu0 0.0
      %1183 = vmatpush1.msra.mxu0 0.0
      %1184 = vmatprep.subr.mxu0 0.0
      %1185 = vmatpush1.msra.mxu0 0.0
      %1186 = vmatprep.subr.mxu0 0.0
      %1187 = vmatpush1.msra.mxu0 0.0
      %1188 = vmatprep.subr.mxu0 0.0
      %1189 = vmatpush1.msra.mxu0 0.0
      %1190 = vmatprep.subr.mxu0 0.0
      %1191 = vmatpush1.msra.mxu0 0.0
      %1192 = vmatprep.subr.mxu0 0.0
      %1193 = vmatpush1.msra.mxu0 0.0
      %1194 = vmatprep.subr.mxu0 0.0
      %1195 = vmatpush1.msra.mxu0 0.0
      %1196 = vmatprep.subr.mxu0 0.0
      %1197 = vmatpush1.msra.mxu0 0.0
      %1198 = vmatprep.subr.mxu0 0.0
      %1199 = vmatpush1.msra.mxu0 0.0
      %1200 = vmatprep.subr.mxu0 0.0
      %1201 = vmatpush1.msra.mxu0 0.0
      %1202 = vmatprep.subr.mxu0 0.0
      %1203 = vmatpush1.msra.mxu0 0.0
      %1204 = vmatprep.subr.mxu0 0.0
      %1205 = vmatpush1.msra.mxu0 0.0
      %1206 = vmatprep.subr.mxu0 0.0
      %1207 = vmatpush1.msra.mxu0 0.0
      %1208 = vmatprep.subr.mxu0 0.0
      %1209 = vmatpush1.msra.mxu0 0.0
      %1210 = vmatprep.subr.mxu0 0.0
      %1211 = vmatpush1.msra.mxu0 0.0
      %1212 = vmatprep.subr.mxu0 0.0
      %1213 = vmatpush1.msra.mxu0 0.0
      %1214 = vmatprep.subr.mxu0 0.0
      %1215 = vmatpush1.msra.mxu0 0.0
      %1216 = vmatprep.subr.mxu0 0.0
      %1217 = vmatpush1.msra.mxu0 0.0
      %1218 = vmatprep.subr.mxu0 0.0
      %1219 = vmatpush1.msra.mxu0 0.0
      %1220 = vmatprep.subr.mxu0 0.0
      %1221 = vmatpush1.msra.mxu0 0.0
      %1222 = vmatprep.subr.mxu0 0.0
      %1223 = vmatpush1.msra.mxu0 0.0
      %1224 = vmatprep.mubr.f32.mxu0 0.0
      %1225 = vmatmul.mubr.f32.gmra.mrb[0].mxu0 %v1152
      %v1226 = vpop.f32.mrb[0].mxu0
      %v1227 = vadd.f32 0.0, %v1226
      %v1228 = vpop.f32.mrb[0].mxu0
      %1229 = vmatprep.mubr.f32.mxu0 0.0
      %1230 = vmatmul.mubr.f32.gmra.mrb[0].mxu0 %v1155
      %v1231 = vpop.f32.mrb[0].mxu0
      %v1232 = vadd.f32 0.0, %v1231
      %v1233 = vpop.f32.mrb[0].mxu0
      %1234 = vmatprep.mubr.f32.mxu0 0.0
      %1235 = vmatmul.mubr.f32.gmra.mrb[0].mxu0 %v1158
      %v1236 = vpop.f32.mrb[0].mxu0
      %v1237 = vadd.f32 0.0, %v1236
      %v1238 = vpop.f32.mrb[0].mxu0
      %1239 = vdwg.mxu0
      %v1240 = vrcp.pop %v1135
      %v1241 = vrcp.pop %v1138
      %v1242 = vrcp.pop %v1141
      %v1243 = vmul.f32 %v1227, %v1240
      %v1244 = vmul.f32 %v1232, %v1241
      %v1245 = vmul.f32 %v1237, %v1242
      %v1247 = vsel %vm786, %v1243, 0
      %v1250 = vsel %vm786, %v1244, 0
      %v1253 = vsel %vm786, %v1245, 0
      %1255 = vmatprep.subr.mxu0 0.0
      %1256 = vmatpush1.msra.mxu0 %v768
      %1257 = vmatprep.subr.mxu0 0.0
      %1258 = vmatpush1.msra.mxu0 0.0
      %1259 = vmatprep.subr.mxu0 0.0
      %1260 = vmatpush1.msra.mxu0 0.0
      %1261 = vmatprep.subr.mxu0 0.0
      %1262 = vmatpush1.msra.mxu0 0.0
      %1263 = vmatprep.subr.mxu0 0.0
      %1264 = vmatpush1.msra.mxu0 0.0
      %1265 = vmatprep.subr.mxu0 0.0
      %1266 = vmatpush1.msra.mxu0 0.0
      %1267 = vmatprep.subr.mxu0 0.0
      %1268 = vmatpush1.msra.mxu0 0.0
      %1269 = vmatprep.subr.mxu0 0.0
      %1270 = vmatpush1.msra.mxu0 0.0
      %1271 = vmatprep.subr.mxu0 0.0
      %1272 = vmatpush1.msra.mxu0 0.0
      %1273 = vmatprep.subr.mxu0 0.0
      %1274 = vmatpush1.msra.mxu0 0.0
      %1275 = vmatprep.subr.mxu0 0.0
      %1276 = vmatpush1.msra.mxu0 0.0
      %1277 = vmatprep.subr.mxu0 0.0
      %1278 = vmatpush1.msra.mxu0 0.0
      %1279 = vmatprep.subr.mxu0 0.0
      %1280 = vmatpush1.msra.mxu0 0.0
      %1281 = vmatprep.subr.mxu0 0.0
      %1282 = vmatpush1.msra.mxu0 0.0
      %1283 = vmatprep.subr.mxu0 0.0
      %1284 = vmatpush1.msra.mxu0 0.0
      %1285 = vmatprep.subr.mxu0 0.0
      %1286 = vmatpush1.msra.mxu0 0.0
      %1287 = vmatprep.subr.mxu0 0.0
      %1288 = vmatpush1.msra.mxu0 0.0
      %1289 = vmatprep.subr.mxu0 0.0
      %1290 = vmatpush1.msra.mxu0 0.0
      %1291 = vmatprep.subr.mxu0 0.0
      %1292 = vmatpush1.msra.mxu0 0.0
      %1293 = vmatprep.subr.mxu0 0.0
      %1294 = vmatpush1.msra.mxu0 0.0
      %1295 = vmatprep.subr.mxu0 0.0
      %1296 = vmatpush1.msra.mxu0 0.0
      %1297 = vmatprep.subr.mxu0 0.0
      %1298 = vmatpush1.msra.mxu0 0.0
      %1299 = vmatprep.subr.mxu0 0.0
      %1300 = vmatpush1.msra.mxu0 0.0
      %1301 = vmatprep.subr.mxu0 0.0
      %1302 = vmatpush1.msra.mxu0 0.0
      %1303 = vmatprep.subr.mxu0 0.0
      %1304 = vmatpush1.msra.mxu0 0.0
      %1305 = vmatprep.subr.mxu0 0.0
      %1306 = vmatpush1.msra.mxu0 0.0
      %1307 = vmatprep.subr.mxu0 0.0
      %1308 = vmatpush1.msra.mxu0 0.0
      %1309 = vmatprep.subr.mxu0 0.0
      %1310 = vmatpush1.msra.mxu0 0.0
      %1311 = vmatprep.subr.mxu0 0.0
      %1312 = vmatpush1.msra.mxu0 0.0
      %1313 = vmatprep.subr.mxu0 0.0
      %1314 = vmatpush1.msra.mxu0 0.0
      %1315 = vmatprep.subr.mxu0 0.0
      %1316 = vmatpush1.msra.mxu0 0.0
      %1317 = vmatprep.subr.mxu0 0.0
      %1318 = vmatpush1.msra.mxu0 0.0
      %1319 = vmatprep.mubr.f32.mxu0 0.0
      %1320 = vmatmul.mubr.f32.gmra.mrb[0].mxu0 %v1247
      %v1321 = vpop.f32.mrb[0].mxu0
      %v1322 = vadd.f32 0.0, %v1321
      %v1323 = vpop.f32.mrb[0].mxu0
      %1324 = vmatprep.mubr.f32.mxu0 0.0
      %1325 = vmatmul.mubr.f32.gmra.mrb[0].mxu0 %v1250
      %v1326 = vpop.f32.mrb[0].mxu0
      %v1327 = vadd.f32 0.0, %v1326
      %v1328 = vpop.f32.mrb[0].mxu0
      %1329 = vmatprep.mubr.f32.mxu0 0.0
      %1330 = vmatmul.mubr.f32.gmra.mrb[0].mxu0 %v1253
      %v1331 = vpop.f32.mrb[0].mxu0
      %v1332 = vadd.f32 0.0, %v1331
      %v1333 = vpop.f32.mrb[0].mxu0
      %1334 = vdwg.mxu0
      %v1336 = vsel %vm786, %v1008, 0
      %v1339 = vsel %vm786, %v1009, 0
      %v1342 = vsel %vm786, %v1010, 0
      %1344 = vmatprep.subr.mxu0 0.0
      %1345 = vmatpush1.msra.mxu0 %v767
      %1346 = vmatprep.subr.mxu0 0.0
      %1347 = vmatpush1.msra.mxu0 0.0
      %1348 = vmatprep.subr.mxu0 0.0
      %1349 = vmatpush1.msra.mxu0 0.0
      %1350 = vmatprep.subr.mxu0 0.0
      %1351 = vmatpush1.msra.mxu0 0.0
      %1352 = vmatprep.subr.mxu0 0.0
      %1353 = vmatpush1.msra.mxu0 0.0
      %1354 = vmatprep.subr.mxu0 0.0
      %1355 = vmatpush1.msra.mxu0 0.0
      %1356 = vmatprep.subr.mxu0 0.0
      %1357 = vmatpush1.msra.mxu0 0.0
      %1358 = vmatprep.subr.mxu0 0.0
      %1359 = vmatpush1.msra.mxu0 0.0
      %1360 = vmatprep.subr.mxu0 0.0
      %1361 = vmatpush1.msra.mxu0 0.0
      %1362 = vmatprep.subr.mxu0 0.0
      %1363 = vmatpush1.msra.mxu0 0.0
      %1364 = vmatprep.subr.mxu0 0.0
      %1365 = vmatpush1.msra.mxu0 0.0
      %1366 = vmatprep.subr.mxu0 0.0
      %1367 = vmatpush1.msra.mxu0 0.0
      %1368 = vmatprep.subr.mxu0 0.0
      %1369 = vmatpush1.msra.mxu0 0.0
      %1370 = vmatprep.subr.mxu0 0.0
      %1371 = vmatpush1.msra.mxu0 0.0
      %1372 = vmatprep.subr.mxu0 0.0
      %1373 = vmatpush1.msra.mxu0 0.0
      %1374 = vmatprep.subr.mxu0 0.0
      %1375 = vmatpush1.msra.mxu0 0.0
      %1376 = vmatprep.subr.mxu0 0.0
      %1377 = vmatpush1.msra.mxu0 0.0
      %1378 = vmatprep.subr.mxu0 0.0
      %1379 = vmatpush1.msra.mxu0 0.0
      %1380 = vmatprep.subr.mxu0 0.0
      %1381 = vmatpush1.msra.mxu0 0.0
      %1382 = vmatprep.subr.mxu0 0.0
      %1383 = vmatpush1.msra.mxu0 0.0
      %1384 = vmatprep.subr.mxu0 0.0
      %1385 = vmatpush1.msra.mxu0 0.0
      %1386 = vmatprep.subr.mxu0 0.0
      %1387 = vmatpush1.msra.mxu0 0.0
      %1388 = vmatprep.subr.mxu0 0.0
      %1389 = vmatpush1.msra.mxu0 0.0
      %1390 = vmatprep.subr.mxu0 0.0
      %1391 = vmatpush1.msra.mxu0 0.0
      %1392 = vmatprep.subr.mxu0 0.0
      %1393 = vmatpush1.msra.mxu0 0.0
      %1394 = vmatprep.subr.mxu0 0.0
      %1395 = vmatpush1.msra.mxu0 0.0
      %1396 = vmatprep.subr.mxu0 0.0
      %1397 = vmatpush1.msra.mxu0 0.0
      %1398 = vmatprep.subr.mxu0 0.0
      %1399 = vmatpush1.msra.mxu0 0.0
      %1400 = vmatprep.subr.mxu0 0.0
      %1401 = vmatpush1.msra.mxu0 0.0
      %1402 = vmatprep.subr.mxu0 0.0
      %1403 = vmatpush1.msra.mxu0 0.0
      %1404 = vmatprep.subr.mxu0 0.0
      %1405 = vmatpush1.msra.mxu0 0.0
      %1406 = vmatprep.subr.mxu0 0.0
      %1407 = vmatpush1.msra.mxu0 0.0
      %1408 = vmatprep.mubr.f32.mxu0 0.0
      %1409 = vmatmul.mubr.f32.gmra.mrb[0].mxu0 %v1336
      %v1410 = vpop.f32.mrb[0].mxu0
      %v1411 = vadd.f32 %v1322, %v1410
      %v1412 = vpop.f32.mrb[0].mxu0
      %1413 = vmatprep.mubr.f32.mxu0 0.0
      %1414 = vmatmul.mubr.f32.gmra.mrb[0].mxu0 %v1339
      %v1415 = vpop.f32.mrb[0].mxu0
      %v1416 = vadd.f32 %v1327, %v1415
      %v1417 = vpop.f32.mrb[0].mxu0
      %1418 = vmatprep.mubr.f32.mxu0 0.0
      %1419 = vmatmul.mubr.f32.gmra.mrb[0].mxu0 %v1342
      %v1420 = vpop.f32.mrb[0].mxu0
      %v1421 = vadd.f32 %v1332, %v1420
      %v1422 = vpop.f32.mrb[0].mxu0
      %1423 = vdwg.mxu0
      %1424 = vrot.lane.b32.xlu0 %v764, 112
      %v1425 = vpop.permute.xlu0 %1424
      %1426 = vrot.lane.b32.xlu0 %v765, 112
      %v1427 = vpop.permute.xlu0 %1426
      %1428 = vrot.lane.b32.xlu0 %v766, 112
      %v1429 = vpop.permute.xlu0 %1428
      %1430 = vrot.lane.b32.xlu0 %v764, 80
      %v1431 = vpop.permute.xlu0 %1430
      %1432 = vrot.lane.b32.xlu0 %v765, 80
      %v1433 = vpop.permute.xlu0 %1432
      %1434 = vrot.lane.b32.xlu0 %v766, 80
      %v1435 = vpop.permute.xlu0 %1434
      %v1436 = vsel %vm786, %v1425, 0
      %v1438 = vsel %vm786, %v1427, 0
      %v1440 = vsel %vm786, %v1429, 0
      %v1442 = vsel %vm786, %v1431, 0
      %v1444 = vsel %vm786, %v1433, 0
      %v1446 = vsel %vm786, %v1435, 0
      %1448 = vmatprep.subr.mxu0 0.0
      %1449 = vmatpush1.xpose.msra.mxu0 %v1442
      %1450 = vmatprep.subr.mxu0 0.0
      %1451 = vmatpush1.xpose.msra.mxu0 %v1444
      %1452 = vmatprep.subr.mxu0 0.0
      %1453 = vmatpush1.xpose.msra.mxu0 %v1446
      %1454 = vmatprep.subr.mxu0 0.0
      %1455 = vmatpush1.xpose.msra.mxu0 0.0
      %1456 = vmatprep.subr.mxu0 0.0
      %1457 = vmatpush1.xpose.msra.mxu0 0.0
      %1458 = vmatprep.subr.mxu0 0.0
      %1459 = vmatpush1.xpose.msra.mxu0 0.0
      %1460 = vmatprep.subr.mxu0 0.0
      %1461 = vmatpush1.xpose.msra.mxu0 0.0
      %1462 = vmatprep.subr.mxu0 0.0
      %1463 = vmatpush1.xpose.msra.mxu0 0.0
      %1464 = vmatprep.subr.mxu0 0.0
      %1465 = vmatpush1.xpose.msra.mxu0 0.0
      %1466 = vmatprep.subr.mxu0 0.0
      %1467 = vmatpush1.xpose.msra.mxu0 0.0
      %1468 = vmatprep.subr.mxu0 0.0
      %1469 = vmatpush1.xpose.msra.mxu0 0.0
      %1470 = vmatprep.subr.mxu0 0.0
      %1471 = vmatpush1.xpose.msra.mxu0 0.0
      %1472 = vmatprep.subr.mxu0 0.0
      %1473 = vmatpush1.xpose.msra.mxu0 0.0
      %1474 = vmatprep.subr.mxu0 0.0
      %1475 = vmatpush1.xpose.msra.mxu0 0.0
      %1476 = vmatprep.subr.mxu0 0.0
      %1477 = vmatpush1.xpose.msra.mxu0 0.0
      %1478 = vmatprep.subr.mxu0 0.0
      %1479 = vmatpush1.xpose.msra.mxu0 0.0
      %1480 = vmatprep.subr.mxu0 0.0
      %1481 = vmatpush1.xpose.msra.mxu0 0.0
      %1482 = vmatprep.subr.mxu0 0.0
      %1483 = vmatpush1.xpose.msra.mxu0 0.0
      %1484 = vmatprep.subr.mxu0 0.0
      %1485 = vmatpush1.xpose.msra.mxu0 0.0
      %1486 = vmatprep.subr.mxu0 0.0
      %1487 = vmatpush1.xpose.msra.mxu0 0.0
      %1488 = vmatprep.subr.mxu0 0.0
      %1489 = vmatpush1.xpose.msra.mxu0 0.0
      %1490 = vmatprep.subr.mxu0 0.0
      %1491 = vmatpush1.xpose.msra.mxu0 0.0
      %1492 = vmatprep.subr.mxu0 0.0
      %1493 = vmatpush1.xpose.msra.mxu0 0.0
      %1494 = vmatprep.subr.mxu0 0.0
      %1495 = vmatpush1.xpose.msra.mxu0 0.0
      %1496 = vmatprep.subr.mxu0 0.0
      %1497 = vmatpush1.xpose.msra.mxu0 0.0
      %1498 = vmatprep.subr.mxu0 0.0
      %1499 = vmatpush1.xpose.msra.mxu0 0.0
      %1500 = vmatprep.subr.mxu0 0.0
      %1501 = vmatpush1.xpose.msra.mxu0 0.0
      %1502 = vmatprep.subr.mxu0 0.0
      %1503 = vmatpush1.xpose.msra.mxu0 0.0
      %1504 = vmatprep.subr.mxu0 0.0
      %1505 = vmatpush1.xpose.msra.mxu0 0.0
      %1506 = vmatprep.subr.mxu0 0.0
      %1507 = vmatpush1.xpose.msra.mxu0 0.0
      %1508 = vmatprep.subr.mxu0 0.0
      %1509 = vmatpush1.xpose.msra.mxu0 0.0
      %1510 = vmatprep.subr.mxu0 0.0
      %1511 = vmatpush1.xpose.msra.mxu0 0.0
      %1512 = vmatprep.mubr.f32.mxu0 0.0
      %1513 = vmatmul.mubr.f32.gmra.mrb[0].mxu0 %v1436
      %v1514 = vpop.f32.mrb[0].mxu0
      %v1515 = vadd.f32 %v775, %v1514
      %v1516 = vpop.f32.mrb[0].mxu0
      %1517 = vmatprep.mubr.f32.mxu0 0.0
      %1518 = vmatmul.mubr.f32.gmra.mrb[0].mxu0 %v1438
      %v1519 = vpop.f32.mrb[0].mxu0
      %v1520 = vadd.f32 %v775, %v1519
      %v1521 = vpop.f32.mrb[0].mxu0
      %1522 = vmatprep.mubr.f32.mxu0 0.0
      %1523 = vmatmul.mubr.f32.gmra.mrb[0].mxu0 %v1440
      %v1524 = vpop.f32.mrb[0].mxu0
      %v1525 = vadd.f32 %v775, %v1524
      %v1526 = vpop.f32.mrb[0].mxu0
      %1527 = vdwg.mxu0
      %v1528 = vsel %vm879, %v1515, -inf
      %1529 = vmax.xlane.f32.xlu0 %v1528
      %v1530 = vpop.xlane.xlu0 %1529
      %v1531 = vsel %vm879, %v1520, -inf
      %1532 = vmax.xlane.f32.xlu0 %v1531
      %v1533 = vpop.xlane.xlu0 %1532
      %v1534 = vsel %vm879, %v1525, -inf
      %1535 = vmax.xlane.f32.xlu0 %v1534
      %v1536 = vpop.xlane.xlu0 %1535
      %v1537 = vsub.f32 %v1515, %v1530
      %v1538 = vsub.f32 %v1520, %v1533
      %v1539 = vsub.f32 %v1525, %v1536
      %v1540 = vmul.f32 %v1537, 1.442695
      %v1541 = vpow.pop %v1540
      %v1542 = vmul.f32 %v1538, 1.442695
      %v1543 = vpow.pop %v1542
      %v1544 = vmul.f32 %v1539, 1.442695
      %v1545 = vpow.pop %v1544
      %v1546 = vsel %vm879, %v1541, 0.0
      %1547 = vadd.xlane.f32.xlu0 %v1546
      %v1548 = vpop.xlane.xlu0 %1547
      %v1549 = vsel %vm879, %v1543, 0.0
      %1550 = vadd.xlane.f32.xlu0 %v1549
      %v1551 = vpop.xlane.xlu0 %1550
      %v1552 = vsel %vm879, %v1545, 0.0
      %1553 = vadd.xlane.f32.xlu0 %v1552
      %v1554 = vpop.xlane.xlu0 %1553
      %1555 = vrot.lane.b32.xlu0 %v764, 48
      %v1556 = vpop.permute.xlu0 %1555
      %1557 = vrot.lane.b32.xlu0 %v765, 48
      %v1558 = vpop.permute.xlu0 %1557
      %1559 = vrot.lane.b32.xlu0 %v766, 48
      %v1560 = vpop.permute.xlu0 %1559
      %v1565 = vsel %vm879, %v1541, 0
      %v1568 = vsel %vm879, %v1543, 0
      %v1571 = vsel %vm879, %v1545, 0
      %1573 = vmatprep.subr.mxu0 0.0
      %1574 = vmatpush1.msra.mxu0 %v1556
      %1575 = vmatprep.subr.mxu0 0.0
      %1576 = vmatpush1.msra.mxu0 %v1558
      %1577 = vmatprep.subr.mxu0 0.0
      %1578 = vmatpush1.msra.mxu0 %v1560
      %1579 = vmatprep.subr.mxu0 0.0
      %1580 = vmatpush1.msra.mxu0 0.0
      %1581 = vmatprep.subr.mxu0 0.0
      %1582 = vmatpush1.msra.mxu0 0.0
      %1583 = vmatprep.subr.mxu0 0.0
      %1584 = vmatpush1.msra.mxu0 0.0
      %1585 = vmatprep.subr.mxu0 0.0
      %1586 = vmatpush1.msra.mxu0 0.0
      %1587 = vmatprep.subr.mxu0 0.0
      %1588 = vmatpush1.msra.mxu0 0.0
      %1589 = vmatprep.subr.mxu0 0.0
      %1590 = vmatpush1.msra.mxu0 0.0
      %1591 = vmatprep.subr.mxu0 0.0
      %1592 = vmatpush1.msra.mxu0 0.0
      %1593 = vmatprep.subr.mxu0 0.0
      %1594 = vmatpush1.msra.mxu0 0.0
      %1595 = vmatprep.subr.mxu0 0.0
      %1596 = vmatpush1.msra.mxu0 0.0
      %1597 = vmatprep.subr.mxu0 0.0
      %1598 = vmatpush1.msra.mxu0 0.0
      %1599 = vmatprep.subr.mxu0 0.0
      %1600 = vmatpush1.msra.mxu0 0.0
      %1601 = vmatprep.subr.mxu0 0.0
      %1602 = vmatpush1.msra.mxu0 0.0
      %1603 = vmatprep.subr.mxu0 0.0
      %1604 = vmatpush1.msra.mxu0 0.0
      %1605 = vmatprep.subr.mxu0 0.0
      %1606 = vmatpush1.msra.mxu0 0.0
      %1607 = vmatprep.subr.mxu0 0.0
      %1608 = vmatpush1.msra.mxu0 0.0
      %1609 = vmatprep.subr.mxu0 0.0
      %1610 = vmatpush1.msra.mxu0 0.0
      %1611 = vmatprep.subr.mxu0 0.0
      %1612 = vmatpush1.msra.mxu0 0.0
      %1613 = vmatprep.subr.mxu0 0.0
      %1614 = vmatpush1.msra.mxu0 0.0
      %1615 = vmatprep.subr.mxu0 0.0
      %1616 = vmatpush1.msra.mxu0 0.0
      %1617 = vmatprep.subr.mxu0 0.0
      %1618 = vmatpush1.msra.mxu0 0.0
      %1619 = vmatprep.subr.mxu0 0.0
      %1620 = vmatpush1.msra.mxu0 0.0
      %1621 = vmatprep.subr.mxu0 0.0
      %1622 = vmatpush1.msra.mxu0 0.0
      %1623 = vmatprep.subr.mxu0 0.0
      %1624 = vmatpush1.msra.mxu0 0.0
      %1625 = vmatprep.subr.mxu0 0.0
      %1626 = vmatpush1.msra.mxu0 0.0
      %1627 = vmatprep.subr.mxu0 0.0
      %1628 = vmatpush1.msra.mxu0 0.0
      %1629 = vmatprep.subr.mxu0 0.0
      %1630 = vmatpush1.msra.mxu0 0.0
      %1631 = vmatprep.subr.mxu0 0.0
      %1632 = vmatpush1.msra.mxu0 0.0
      %1633 = vmatprep.subr.mxu0 0.0
      %1634 = vmatpush1.msra.mxu0 0.0
      %1635 = vmatprep.subr.mxu0 0.0
      %1636 = vmatpush1.msra.mxu0 0.0
      %1637 = vmatprep.mubr.f32.mxu0 0.0
      %1638 = vmatmul.mubr.f32.gmra.mrb[0].mxu0 %v1565
      %v1639 = vpop.f32.mrb[0].mxu0
      %v1640 = vadd.f32 0.0, %v1639
      %v1641 = vpop.f32.mrb[0].mxu0
      %1642 = vmatprep.mubr.f32.mxu0 0.0
      %1643 = vmatmul.mubr.f32.gmra.mrb[0].mxu0 %v1568
      %v1644 = vpop.f32.mrb[0].mxu0
      %v1645 = vadd.f32 0.0, %v1644
      %v1646 = vpop.f32.mrb[0].mxu0
      %1647 = vmatprep.mubr.f32.mxu0 0.0
      %1648 = vmatmul.mubr.f32.gmra.mrb[0].mxu0 %v1571
      %v1649 = vpop.f32.mrb[0].mxu0
      %v1650 = vadd.f32 0.0, %v1649
      %v1651 = vpop.f32.mrb[0].mxu0
      %1652 = vdwg.mxu0
      %v1653 = vrcp.pop %v1548
      %v1654 = vrcp.pop %v1551
      %v1655 = vrcp.pop %v1554
      %v1656 = vmul.f32 %v1640, %v1653
      %v1657 = vmul.f32 %v1645, %v1654
      %v1658 = vmul.f32 %v1650, %v1655
      %v1660 = vsel %vm786, %v1656, 0
      %v1663 = vsel %vm786, %v1657, 0
      %v1666 = vsel %vm786, %v1658, 0
      %1668 = vmatprep.subr.mxu0 0.0
      %1669 = vmatpush1.msra.mxu0 %v769
      %1670 = vmatprep.subr.mxu0 0.0
      %1671 = vmatpush1.msra.mxu0 0.0
      %1672 = vmatprep.subr.mxu0 0.0
      %1673 = vmatpush1.msra.mxu0 0.0
      %1674 = vmatprep.subr.mxu0 0.0
      %1675 = vmatpush1.msra.mxu0 0.0
      %1676 = vmatprep.subr.mxu0 0.0
      %1677 = vmatpush1.msra.mxu0 0.0
      %1678 = vmatprep.subr.mxu0 0.0
      %1679 = vmatpush1.msra.mxu0 0.0
      %1680 = vmatprep.subr.mxu0 0.0
      %1681 = vmatpush1.msra.mxu0 0.0
      %1682 = vmatprep.subr.mxu0 0.0
      %1683 = vmatpush1.msra.mxu0 0.0
      %1684 = vmatprep.subr.mxu0 0.0
      %1685 = vmatpush1.msra.mxu0 0.0
      %1686 = vmatprep.subr.mxu0 0.0
      %1687 = vmatpush1.msra.mxu0 0.0
      %1688 = vmatprep.subr.mxu0 0.0
      %1689 = vmatpush1.msra.mxu0 0.0
      %1690 = vmatprep.subr.mxu0 0.0
      %1691 = vmatpush1.msra.mxu0 0.0
      %1692 = vmatprep.subr.mxu0 0.0
      %1693 = vmatpush1.msra.mxu0 0.0
      %1694 = vmatprep.subr.mxu0 0.0
      %1695 = vmatpush1.msra.mxu0 0.0
      %1696 = vmatprep.subr.mxu0 0.0
      %1697 = vmatpush1.msra.mxu0 0.0
      %1698 = vmatprep.subr.mxu0 0.0
      %1699 = vmatpush1.msra.mxu0 0.0
      %1700 = vmatprep.subr.mxu0 0.0
      %1701 = vmatpush1.msra.mxu0 0.0
      %1702 = vmatprep.subr.mxu0 0.0
      %1703 = vmatpush1.msra.mxu0 0.0
      %1704 = vmatprep.subr.mxu0 0.0
      %1705 = vmatpush1.msra.mxu0 0.0
      %1706 = vmatprep.subr.mxu0 0.0
      %1707 = vmatpush1.msra.mxu0 0.0
      %1708 = vmatprep.subr.mxu0 0.0
      %1709 = vmatpush1.msra.mxu0 0.0
      %1710 = vmatprep.subr.mxu0 0.0
      %1711 = vmatpush1.msra.mxu0 0.0
      %1712 = vmatprep.subr.mxu0 0.0
      %1713 = vmatpush1.msra.mxu0 0.0
      %1714 = vmatprep.subr.mxu0 0.0
      %1715 = vmatpush1.msra.mxu0 0.0
      %1716 = vmatprep.subr.mxu0 0.0
      %1717 = vmatpush1.msra.mxu0 0.0
      %1718 = vmatprep.subr.mxu0 0.0
      %1719 = vmatpush1.msra.mxu0 0.0
      %1720 = vmatprep.subr.mxu0 0.0
      %1721 = vmatpush1.msra.mxu0 0.0
      %1722 = vmatprep.subr.mxu0 0.0
      %1723 = vmatpush1.msra.mxu0 0.0
      %1724 = vmatprep.subr.mxu0 0.0
      %1725 = vmatpush1.msra.mxu0 0.0
      %1726 = vmatprep.subr.mxu0 0.0
      %1727 = vmatpush1.msra.mxu0 0.0
      %1728 = vmatprep.subr.mxu0 0.0
      %1729 = vmatpush1.msra.mxu0 0.0
      %1730 = vmatprep.subr.mxu0 0.0
      %1731 = vmatpush1.msra.mxu0 0.0
      %1732 = vmatprep.mubr.f32.mxu0 0.0
      %1733 = vmatmul.mubr.f32.gmra.mrb[0].mxu0 %v1660
      %v1734 = vpop.f32.mrb[0].mxu0
      %v1735 = vadd.f32 0.0, %v1734
      %v1736 = vpop.f32.mrb[0].mxu0
      %1737 = vmatprep.mubr.f32.mxu0 0.0
      %1738 = vmatmul.mubr.f32.gmra.mrb[0].mxu0 %v1663
      %v1739 = vpop.f32.mrb[0].mxu0
      %v1740 = vadd.f32 0.0, %v1739
      %v1741 = vpop.f32.mrb[0].mxu0
      %1742 = vmatprep.mubr.f32.mxu0 0.0
      %1743 = vmatmul.mubr.f32.gmra.mrb[0].mxu0 %v1666
      %v1744 = vpop.f32.mrb[0].mxu0
      %v1745 = vadd.f32 0.0, %v1744
      %v1746 = vpop.f32.mrb[0].mxu0
      %1747 = vdwg.mxu0
      %v1748 = vadd.f32 %v1411, %v1735
      %v1749 = vadd.f32 %v1416, %v1740
      %v1750 = vadd.f32 %v1421, %v1745
      %1751 = vrot.lane.b32.xlu0 %v764, 104
      %v1752 = vpop.permute.xlu0 %1751
      %1753 = vrot.lane.b32.xlu0 %v765, 104
      %v1754 = vpop.permute.xlu0 %1753
      %1755 = vrot.lane.b32.xlu0 %v766, 104
      %v1756 = vpop.permute.xlu0 %1755
      %1757 = vrot.lane.b32.xlu0 %v764, 72
      %v1758 = vpop.permute.xlu0 %1757
      %1759 = vrot.lane.b32.xlu0 %v765, 72
      %v1760 = vpop.permute.xlu0 %1759
      %1761 = vrot.lane.b32.xlu0 %v766, 72
      %v1762 = vpop.permute.xlu0 %1761
      %v1763 = vsel %vm786, %v1752, 0
      %v1765 = vsel %vm786, %v1754, 0
      %v1767 = vsel %vm786, %v1756, 0
      %v1769 = vsel %vm786, %v1758, 0
      %v1771 = vsel %vm786, %v1760, 0
      %v1773 = vsel %vm786, %v1762, 0
      %1775 = vmatprep.subr.mxu0 0.0
      %1776 = vmatpush1.xpose.msra.mxu0 %v1769
      %1777 = vmatprep.subr.mxu0 0.0
      %1778 = vmatpush1.xpose.msra.mxu0 %v1771
      %1779 = vmatprep.subr.mxu0 0.0
      %1780 = vmatpush1.xpose.msra.mxu0 %v1773
      %1781 = vmatprep.subr.mxu0 0.0
      %1782 = vmatpush1.xpose.msra.mxu0 0.0
      %1783 = vmatprep.subr.mxu0 0.0
      %1784 = vmatpush1.xpose.msra.mxu0 0.0
      %1785 = vmatprep.subr.mxu0 0.0
      %1786 = vmatpush1.xpose.msra.mxu0 0.0
      %1787 = vmatprep.subr.mxu0 0.0
      %1788 = vmatpush1.xpose.msra.mxu0 0.0
      %1789 = vmatprep.subr.mxu0 0.0
      %1790 = vmatpush1.xpose.msra.mxu0 0.0
      %1791 = vmatprep.subr.mxu0 0.0
      %1792 = vmatpush1.xpose.msra.mxu0 0.0
      %1793 = vmatprep.subr.mxu0 0.0
      %1794 = vmatpush1.xpose.msra.mxu0 0.0
      %1795 = vmatprep.subr.mxu0 0.0
      %1796 = vmatpush1.xpose.msra.mxu0 0.0
      %1797 = vmatprep.subr.mxu0 0.0
      %1798 = vmatpush1.xpose.msra.mxu0 0.0
      %1799 = vmatprep.subr.mxu0 0.0
      %1800 = vmatpush1.xpose.msra.mxu0 0.0
      %1801 = vmatprep.subr.mxu0 0.0
      %1802 = vmatpush1.xpose.msra.mxu0 0.0
      %1803 = vmatprep.subr.mxu0 0.0
      %1804 = vmatpush1.xpose.msra.mxu0 0.0
      %1805 = vmatprep.subr.mxu0 0.0
      %1806 = vmatpush1.xpose.msra.mxu0 0.0
      %1807 = vmatprep.subr.mxu0 0.0
      %1808 = vmatpush1.xpose.msra.mxu0 0.0
      %1809 = vmatprep.subr.mxu0 0.0
      %1810 = vmatpush1.xpose.msra.mxu0 0.0
      %1811 = vmatprep.subr.mxu0 0.0
      %1812 = vmatpush1.xpose.msra.mxu0 0.0
      %1813 = vmatprep.subr.mxu0 0.0
      %1814 = vmatpush1.xpose.msra.mxu0 0.0
      %1815 = vmatprep.subr.mxu0 0.0
      %1816 = vmatpush1.xpose.msra.mxu0 0.0
      %1817 = vmatprep.subr.mxu0 0.0
      %1818 = vmatpush1.xpose.msra.mxu0 0.0
      %1819 = vmatprep.subr.mxu0 0.0
      %1820 = vmatpush1.xpose.msra.mxu0 0.0
      %1821 = vmatprep.subr.mxu0 0.0
      %1822 = vmatpush1.xpose.msra.mxu0 0.0
      %1823 = vmatprep.subr.mxu0 0.0
      %1824 = vmatpush1.xpose.msra.mxu0 0.0
      %1825 = vmatprep.subr.mxu0 0.0
      %1826 = vmatpush1.xpose.msra.mxu0 0.0
      %1827 = vmatprep.subr.mxu0 0.0
      %1828 = vmatpush1.xpose.msra.mxu0 0.0
      %1829 = vmatprep.subr.mxu0 0.0
      %1830 = vmatpush1.xpose.msra.mxu0 0.0
      %1831 = vmatprep.subr.mxu0 0.0
      %1832 = vmatpush1.xpose.msra.mxu0 0.0
      %1833 = vmatprep.subr.mxu0 0.0
      %1834 = vmatpush1.xpose.msra.mxu0 0.0
      %1835 = vmatprep.subr.mxu0 0.0
      %1836 = vmatpush1.xpose.msra.mxu0 0.0
      %1837 = vmatprep.subr.mxu0 0.0
      %1838 = vmatpush1.xpose.msra.mxu0 0.0
      %1839 = vmatprep.mubr.f32.mxu0 0.0
      %1840 = vmatmul.mubr.f32.gmra.mrb[0].mxu0 %v1763
      %v1841 = vpop.f32.mrb[0].mxu0
      %v1842 = vadd.f32 %v775, %v1841
      %v1843 = vpop.f32.mrb[0].mxu0
      %1844 = vmatprep.mubr.f32.mxu0 0.0
      %1845 = vmatmul.mubr.f32.gmra.mrb[0].mxu0 %v1765
      %v1846 = vpop.f32.mrb[0].mxu0
      %v1847 = vadd.f32 %v775, %v1846
      %v1848 = vpop.f32.mrb[0].mxu0
      %1849 = vmatprep.mubr.f32.mxu0 0.0
      %1850 = vmatmul.mubr.f32.gmra.mrb[0].mxu0 %v1767
      %v1851 = vpop.f32.mrb[0].mxu0
      %v1852 = vadd.f32 %v775, %v1851
      %v1853 = vpop.f32.mrb[0].mxu0
      %1854 = vdwg.mxu0
      %v1855 = vsel %vm879, %v1842, -inf
      %1856 = vmax.xlane.f32.xlu0 %v1855
      %v1857 = vpop.xlane.xlu0 %1856
      %v1858 = vsel %vm879, %v1847, -inf
      %1859 = vmax.xlane.f32.xlu0 %v1858
      %v1860 = vpop.xlane.xlu0 %1859
      %v1861 = vsel %vm879, %v1852, -inf
      %1862 = vmax.xlane.f32.xlu0 %v1861
      %v1863 = vpop.xlane.xlu0 %1862
      %v1864 = vsub.f32 %v1842, %v1857
      %v1865 = vsub.f32 %v1847, %v1860
      %v1866 = vsub.f32 %v1852, %v1863
      %v1867 = vmul.f32 %v1864, 1.442695
      %v1868 = vpow.pop %v1867
      %v1869 = vmul.f32 %v1865, 1.442695
      %v1870 = vpow.pop %v1869
      %v1871 = vmul.f32 %v1866, 1.442695
      %v1872 = vpow.pop %v1871
      %v1873 = vsel %vm879, %v1868, 0.0
      %1874 = vadd.xlane.f32.xlu0 %v1873
      %v1875 = vpop.xlane.xlu0 %1874
      %v1876 = vsel %vm879, %v1870, 0.0
      %1877 = vadd.xlane.f32.xlu0 %v1876
      %v1878 = vpop.xlane.xlu0 %1877
      %v1879 = vsel %vm879, %v1872, 0.0
      %1880 = vadd.xlane.f32.xlu0 %v1879
      %v1881 = vpop.xlane.xlu0 %1880
      %1882 = vrot.lane.b32.xlu0 %v764, 40
      %v1883 = vpop.permute.xlu0 %1882
      %1884 = vrot.lane.b32.xlu0 %v765, 40
      %v1885 = vpop.permute.xlu0 %1884
      %1886 = vrot.lane.b32.xlu0 %v766, 40
      %v1887 = vpop.permute.xlu0 %1886
      %v1892 = vsel %vm879, %v1868, 0
      %v1895 = vsel %vm879, %v1870, 0
      %v1898 = vsel %vm879, %v1872, 0
      %1900 = vmatprep.subr.mxu0 0.0
      %1901 = vmatpush1.msra.mxu0 %v1883
      %1902 = vmatprep.subr.mxu0 0.0
      %1903 = vmatpush1.msra.mxu0 %v1885
      %1904 = vmatprep.subr.mxu0 0.0
      %1905 = vmatpush1.msra.mxu0 %v1887
      %1906 = vmatprep.subr.mxu0 0.0
      %1907 = vmatpush1.msra.mxu0 0.0
      %1908 = vmatprep.subr.mxu0 0.0
      %1909 = vmatpush1.msra.mxu0 0.0
      %1910 = vmatprep.subr.mxu0 0.0
      %1911 = vmatpush1.msra.mxu0 0.0
      %1912 = vmatprep.subr.mxu0 0.0
      %1913 = vmatpush1.msra.mxu0 0.0
      %1914 = vmatprep.subr.mxu0 0.0
      %1915 = vmatpush1.msra.mxu0 0.0
      %1916 = vmatprep.subr.mxu0 0.0
      %1917 = vmatpush1.msra.mxu0 0.0
      %1918 = vmatprep.subr.mxu0 0.0
      %1919 = vmatpush1.msra.mxu0 0.0
      %1920 = vmatprep.subr.mxu0 0.0
      %1921 = vmatpush1.msra.mxu0 0.0
      %1922 = vmatprep.subr.mxu0 0.0
      %1923 = vmatpush1.msra.mxu0 0.0
      %1924 = vmatprep.subr.mxu0 0.0
      %1925 = vmatpush1.msra.mxu0 0.0
      %1926 = vmatprep.subr.mxu0 0.0
      %1927 = vmatpush1.msra.mxu0 0.0
      %1928 = vmatprep.subr.mxu0 0.0
      %1929 = vmatpush1.msra.mxu0 0.0
      %1930 = vmatprep.subr.mxu0 0.0
      %1931 = vmatpush1.msra.mxu0 0.0
      %1932 = vmatprep.subr.mxu0 0.0
      %1933 = vmatpush1.msra.mxu0 0.0
      %1934 = vmatprep.subr.mxu0 0.0
      %1935 = vmatpush1.msra.mxu0 0.0
      %1936 = vmatprep.subr.mxu0 0.0
      %1937 = vmatpush1.msra.mxu0 0.0
      %1938 = vmatprep.subr.mxu0 0.0
      %1939 = vmatpush1.msra.mxu0 0.0
      %1940 = vmatprep.subr.mxu0 0.0
      %1941 = vmatpush1.msra.mxu0 0.0
      %1942 = vmatprep.subr.mxu0 0.0
      %1943 = vmatpush1.msra.mxu0 0.0
      %1944 = vmatprep.subr.mxu0 0.0
      %1945 = vmatpush1.msra.mxu0 0.0
      %1946 = vmatprep.subr.mxu0 0.0
      %1947 = vmatpush1.msra.mxu0 0.0
      %1948 = vmatprep.subr.mxu0 0.0
      %1949 = vmatpush1.msra.mxu0 0.0
      %1950 = vmatprep.subr.mxu0 0.0
      %1951 = vmatpush1.msra.mxu0 0.0
      %1952 = vmatprep.subr.mxu0 0.0
      %1953 = vmatpush1.msra.mxu0 0.0
      %1954 = vmatprep.subr.mxu0 0.0
      %1955 = vmatpush1.msra.mxu0 0.0
      %1956 = vmatprep.subr.mxu0 0.0
      %1957 = vmatpush1.msra.mxu0 0.0
      %1958 = vmatprep.subr.mxu0 0.0
      %1959 = vmatpush1.msra.mxu0 0.0
      %1960 = vmatprep.subr.mxu0 0.0
      %1961 = vmatpush1.msra.mxu0 0.0
      %1962 = vmatprep.subr.mxu0 0.0
      %1963 = vmatpush1.msra.mxu0 0.0
      %1964 = vmatprep.mubr.f32.mxu0 0.0
      %1965 = vmatmul.mubr.f32.gmra.mrb[0].mxu0 %v1892
      %v1966 = vpop.f32.mrb[0].mxu0
      %v1967 = vadd.f32 0.0, %v1966
      %v1968 = vpop.f32.mrb[0].mxu0
      %1969 = vmatprep.mubr.f32.mxu0 0.0
      %1970 = vmatmul.mubr.f32.gmra.mrb[0].mxu0 %v1895
      %v1971 = vpop.f32.mrb[0].mxu0
      %v1972 = vadd.f32 0.0, %v1971
      %v1973 = vpop.f32.mrb[0].mxu0
      %1974 = vmatprep.mubr.f32.mxu0 0.0
      %1975 = vmatmul.mubr.f32.gmra.mrb[0].mxu0 %v1898
      %v1976 = vpop.f32.mrb[0].mxu0
      %v1977 = vadd.f32 0.0, %v1976
      %v1978 = vpop.f32.mrb[0].mxu0
      %1979 = vdwg.mxu0
      %v1980 = vrcp.pop %v1875
      %v1981 = vrcp.pop %v1878
      %v1982 = vrcp.pop %v1881
      %v1983 = vmul.f32 %v1967, %v1980
      %v1984 = vmul.f32 %v1972, %v1981
      %v1985 = vmul.f32 %v1977, %v1982
      %v1987 = vsel %vm786, %v1983, 0
      %v1990 = vsel %vm786, %v1984, 0
      %v1993 = vsel %vm786, %v1985, 0
      %1995 = vmatprep.subr.mxu0 0.0
      %1996 = vmatpush1.msra.mxu0 %v770
      %1997 = vmatprep.subr.mxu0 0.0
      %1998 = vmatpush1.msra.mxu0 0.0
      %1999 = vmatprep.subr.mxu0 0.0
      %2000 = vmatpush1.msra.mxu0 0.0
      %2001 = vmatprep.subr.mxu0 0.0
      %2002 = vmatpush1.msra.mxu0 0.0
      %2003 = vmatprep.subr.mxu0 0.0
      %2004 = vmatpush1.msra.mxu0 0.0
      %2005 = vmatprep.subr.mxu0 0.0
      %2006 = vmatpush1.msra.mxu0 0.0
      %2007 = vmatprep.subr.mxu0 0.0
      %2008 = vmatpush1.msra.mxu0 0.0
      %2009 = vmatprep.subr.mxu0 0.0
      %2010 = vmatpush1.msra.mxu0 0.0
      %2011 = vmatprep.subr.mxu0 0.0
      %2012 = vmatpush1.msra.mxu0 0.0
      %2013 = vmatprep.subr.mxu0 0.0
      %2014 = vmatpush1.msra.mxu0 0.0
      %2015 = vmatprep.subr.mxu0 0.0
      %2016 = vmatpush1.msra.mxu0 0.0
      %2017 = vmatprep.subr.mxu0 0.0
      %2018 = vmatpush1.msra.mxu0 0.0
      %2019 = vmatprep.subr.mxu0 0.0
      %2020 = vmatpush1.msra.mxu0 0.0
      %2021 = vmatprep.subr.mxu0 0.0
      %2022 = vmatpush1.msra.mxu0 0.0
      %2023 = vmatprep.subr.mxu0 0.0
      %2024 = vmatpush1.msra.mxu0 0.0
      %2025 = vmatprep.subr.mxu0 0.0
      %2026 = vmatpush1.msra.mxu0 0.0
      %2027 = vmatprep.subr.mxu0 0.0
      %2028 = vmatpush1.msra.mxu0 0.0
      %2029 = vmatprep.subr.mxu0 0.0
      %2030 = vmatpush1.msra.mxu0 0.0
      %2031 = vmatprep.subr.mxu0 0.0
      %2032 = vmatpush1.msra.mxu0 0.0
      %2033 = vmatprep.subr.mxu0 0.0
      %2034 = vmatpush1.msra.mxu0 0.0
      %2035 = vmatprep.subr.mxu0 0.0
      %2036 = vmatpush1.msra.mxu0 0.0
      %2037 = vmatprep.subr.mxu0 0.0
      %2038 = vmatpush1.msra.mxu0 0.0
      %2039 = vmatprep.subr.mxu0 0.0
      %2040 = vmatpush1.msra.mxu0 0.0
      %2041 = vmatprep.subr.mxu0 0.0
      %2042 = vmatpush1.msra.mxu0 0.0
      %2043 = vmatprep.subr.mxu0 0.0
      %2044 = vmatpush1.msra.mxu0 0.0
      %2045 = vmatprep.subr.mxu0 0.0
      %2046 = vmatpush1.msra.mxu0 0.0
      %2047 = vmatprep.subr.mxu0 0.0
      %2048 = vmatpush1.msra.mxu0 0.0
      %2049 = vmatprep.subr.mxu0 0.0
      %2050 = vmatpush1.msra.mxu0 0.0
      %2051 = vmatprep.subr.mxu0 0.0
      %2052 = vmatpush1.msra.mxu0 0.0
      %2053 = vmatprep.subr.mxu0 0.0
      %2054 = vmatpush1.msra.mxu0 0.0
      %2055 = vmatprep.subr.mxu0 0.0
      %2056 = vmatpush1.msra.mxu0 0.0
      %2057 = vmatprep.subr.mxu0 0.0
      %2058 = vmatpush1.msra.mxu0 0.0
      %2059 = vmatprep.mubr.f32.mxu0 0.0
      %2060 = vmatmul.mubr.f32.gmra.mrb[0].mxu0 %v1987
      %v2061 = vpop.f32.mrb[0].mxu0
      %v2062 = vadd.f32 0.0, %v2061
      %v2063 = vpop.f32.mrb[0].mxu0
      %2064 = vmatprep.mubr.f32.mxu0 0.0
      %2065 = vmatmul.mubr.f32.gmra.mrb[0].mxu0 %v1990
      %v2066 = vpop.f32.mrb[0].mxu0
      %v2067 = vadd.f32 0.0, %v2066
      %v2068 = vpop.f32.mrb[0].mxu0
      %2069 = vmatprep.mubr.f32.mxu0 0.0
      %2070 = vmatmul.mubr.f32.gmra.mrb[0].mxu0 %v1993
      %v2071 = vpop.f32.mrb[0].mxu0
      %v2072 = vadd.f32 0.0, %v2071
      %v2073 = vpop.f32.mrb[0].mxu0
      %2074 = vdwg.mxu0
      %v2075 = vadd.f32 %v1748, %v2062
      %v2076 = vadd.f32 %v1749, %v2067
      %v2077 = vadd.f32 %v1750, %v2072
      %v2078 = vld [vmem:[%s7] sm:$0x1]
      %v2080 = vlaneseq
      %v2081 = vshrl.u32 %v2080, 7
      %v2082 = vsub.s32 0, %v2081
      %v2083 = vrot.slane %v2078, %v2082
      %v2085 = vadd.f32 %v2075, %v2083
      %v2086 = vadd.f32 %v2076, %v2083
      %v2087 = vadd.f32 %v2077, %v2083
      %v2088 = vadd.f32 %v556, %v2085
      %v2089 = vadd.f32 %v557, %v2086
      %v2090 = vadd.f32 %v558, %v2087
      %v2091 = vld [vmem:[%s12] sm:$0x1]
      %v2092 = vld [vmem:[%s13] sm:$0x1]
      %2093 = vadd.xlane.f32.xlu0 %v2088
      %v2094 = vpop.xlane.xlu0 %2093
      %2095 = vadd.xlane.f32.xlu0 %v2089
      %v2096 = vpop.xlane.xlu0 %2095
      %2097 = vadd.xlane.f32.xlu0 %v2090
      %v2098 = vpop.xlane.xlu0 %2097
      %v2099 = vmul.f32 %v2094, 0.03125
      %v2100 = vmul.f32 %v2096, 0.03125
      %v2101 = vmul.f32 %v2098, 0.03125
      %v2102 = vmul.f32 %v2088, %v2088
      %v2103 = vmul.f32 %v2089, %v2089
      %v2104 = vmul.f32 %v2090, %v2090
      %2105 = vadd.xlane.f32.xlu0 %v2102
      %v2106 = vpop.xlane.xlu0 %2105
      %2107 = vadd.xlane.f32.xlu0 %v2103
      %v2108 = vpop.xlane.xlu0 %2107
      %2109 = vadd.xlane.f32.xlu0 %v2104
      %v2110 = vpop.xlane.xlu0 %2109
      %v2111 = vmul.f32 %v2106, 0.03125
      %v2112 = vmul.f32 %v2108, 0.03125
      %v2113 = vmul.f32 %v2110, 0.03125
      %v2114 = vmul.f32 %v2099, %v2099
      %v2115 = vmul.f32 %v2100, %v2100
      %v2116 = vmul.f32 %v2101, %v2101
      %v2117 = vsub.f32 %v2111, %v2114
      %v2118 = vsub.f32 %v2112, %v2115
      %v2119 = vsub.f32 %v2113, %v2116
      %v2120 = vsub.f32 %v2088, %v2099
      %v2121 = vsub.f32 %v2089, %v2100
      %v2122 = vsub.f32 %v2090, %v2101
      %v2123 = vadd.f32 %v2117, 1e-05
      %v2124 = vadd.f32 %v2118, 1e-05
      %v2125 = vadd.f32 %v2119, 1e-05
      %v2126 = vrsqrt.pop %v2123
      %v2127 = vrsqrt.pop %v2124
      %v2128 = vrsqrt.pop %v2125
      %v2129 = vmul.f32 %v2120, %v2126
      %v2130 = vmul.f32 %v2121, %v2127
      %v2131 = vmul.f32 %v2122, %v2128
      %v2133 = vlaneseq
      %v2134 = vshrl.u32 %v2133, 7
      %v2135 = vsub.s32 0, %v2134
      %v2136 = vrot.slane %v2091, %v2135
      %v2138 = vmul.f32 %v2129, %v2136
      %v2139 = vmul.f32 %v2130, %v2136
      %v2140 = vmul.f32 %v2131, %v2136
      %v2142 = vlaneseq
      %v2143 = vshrl.u32 %v2142, 7
      %v2144 = vsub.s32 0, %v2143
      %v2145 = vrot.slane %v2092, %v2144
      %v2147 = vadd.f32 %v2138, %v2145
      %v2148 = vadd.f32 %v2139, %v2145
      %v2149 = vadd.f32 %v2140, %v2145
      %v2150 = vld [vmem:[%s8] sm:$0xff]
      %v2151 = vld [vmem:[%s8 + $0x8] sm:$0xff]
      %v2152 = vld [vmem:[%s8 + $0x10] sm:$0xff]
      %v2153 = vld [vmem:[%s8 + $0x18] sm:$0xff]
      %v2154 = vld [vmem:[%s8 + $0x20] sm:$0xff]
      %v2155 = vld [vmem:[%s8 + $0x28] sm:$0xff]
      %v2156 = vld [vmem:[%s8 + $0x30] sm:$0xff]
      %v2157 = vld [vmem:[%s8 + $0x38] sm:$0xff]
      %v2158 = vld [vmem:[%s8 + $0x40] sm:$0xff]
      %v2159 = vld [vmem:[%s8 + $0x48] sm:$0xff]
      %v2160 = vld [vmem:[%s8 + $0x50] sm:$0xff]
      %v2161 = vld [vmem:[%s8 + $0x58] sm:$0xff]
      %v2162 = vld [vmem:[%s8 + $0x60] sm:$0xff]
      %v2163 = vld [vmem:[%s8 + $0x68] sm:$0xff]
      %v2164 = vld [vmem:[%s8 + $0x70] sm:$0xff]
      %v2165 = vld [vmem:[%s8 + $0x78] sm:$0xff]
      %v2166 = vld [vmem:[%s9] sm:$0x1]
      %v2168 = vlaneseq
      %v2169 = vshrl.u32 %v2168, 7
      %v2170 = vsub.s32 0, %v2169
      %v2171 = vrot.slane %v2166, %v2170
      %2173 = vmatprep.subr.mxu0 0.0
      %2174 = vmatpush1.msra.mxu0 %v2150
      %2175 = vmatprep.subr.mxu0 0.0
      %2176 = vmatpush1.msra.mxu0 %v2151
      %2177 = vmatprep.subr.mxu0 0.0
      %2178 = vmatpush1.msra.mxu0 %v2152
      %2179 = vmatprep.subr.mxu0 0.0
      %2180 = vmatpush1.msra.mxu0 %v2153
      %2181 = vmatprep.subr.mxu0 0.0
      %2182 = vmatpush1.msra.mxu0 %v2154
      %2183 = vmatprep.subr.mxu0 0.0
      %2184 = vmatpush1.msra.mxu0 %v2155
      %2185 = vmatprep.subr.mxu0 0.0
      %2186 = vmatpush1.msra.mxu0 %v2156
      %2187 = vmatprep.subr.mxu0 0.0
      %2188 = vmatpush1.msra.mxu0 %v2157
      %2189 = vmatprep.subr.mxu0 0.0
      %2190 = vmatpush1.msra.mxu0 %v2158
      %2191 = vmatprep.subr.mxu0 0.0
      %2192 = vmatpush1.msra.mxu0 %v2159
      %2193 = vmatprep.subr.mxu0 0.0
      %2194 = vmatpush1.msra.mxu0 %v2160
      %2195 = vmatprep.subr.mxu0 0.0
      %2196 = vmatpush1.msra.mxu0 %v2161
      %2197 = vmatprep.subr.mxu0 0.0
      %2198 = vmatpush1.msra.mxu0 %v2162
      %2199 = vmatprep.subr.mxu0 0.0
      %2200 = vmatpush1.msra.mxu0 %v2163
      %2201 = vmatprep.subr.mxu0 0.0
      %2202 = vmatpush1.msra.mxu0 %v2164
      %2203 = vmatprep.subr.mxu0 0.0
      %2204 = vmatpush1.msra.mxu0 %v2165
      %2205 = vmatprep.subr.mxu0 0.0
      %2206 = vmatpush1.msra.mxu0 0.0
      %2207 = vmatprep.subr.mxu0 0.0
      %2208 = vmatpush1.msra.mxu0 0.0
      %2209 = vmatprep.subr.mxu0 0.0
      %2210 = vmatpush1.msra.mxu0 0.0
      %2211 = vmatprep.subr.mxu0 0.0
      %2212 = vmatpush1.msra.mxu0 0.0
      %2213 = vmatprep.subr.mxu0 0.0
      %2214 = vmatpush1.msra.mxu0 0.0
      %2215 = vmatprep.subr.mxu0 0.0
      %2216 = vmatpush1.msra.mxu0 0.0
      %2217 = vmatprep.subr.mxu0 0.0
      %2218 = vmatpush1.msra.mxu0 0.0
      %2219 = vmatprep.subr.mxu0 0.0
      %2220 = vmatpush1.msra.mxu0 0.0
      %2221 = vmatprep.subr.mxu0 0.0
      %2222 = vmatpush1.msra.mxu0 0.0
      %2223 = vmatprep.subr.mxu0 0.0
      %2224 = vmatpush1.msra.mxu0 0.0
      %2225 = vmatprep.subr.mxu0 0.0
      %2226 = vmatpush1.msra.mxu0 0.0
      %2227 = vmatprep.subr.mxu0 0.0
      %2228 = vmatpush1.msra.mxu0 0.0
      %2229 = vmatprep.subr.mxu0 0.0
      %2230 = vmatpush1.msra.mxu0 0.0
      %2231 = vmatprep.subr.mxu0 0.0
      %2232 = vmatpush1.msra.mxu0 0.0
      %2233 = vmatprep.subr.mxu0 0.0
      %2234 = vmatpush1.msra.mxu0 0.0
      %2235 = vmatprep.subr.mxu0 0.0
      %2236 = vmatpush1.msra.mxu0 0.0
      %2237 = vmatprep.mubr.f32.mxu0 0.0
      %2238 = vmatmul.mubr.f32.gmra.mrb[0].mxu0 %v2147
      %v2239 = vpop.f32.mrb[0].mxu0
      %v2240 = vadd.f32 %v2171, %v2239
      %v2241 = vpop.f32.mrb[0].mxu0
      %2242 = vmatprep.mubr.f32.mxu0 0.0
      %2243 = vmatmul.mubr.f32.gmra.mrb[0].mxu0 %v2148
      %v2244 = vpop.f32.mrb[0].mxu0
      %v2245 = vadd.f32 %v2171, %v2244
      %v2246 = vpop.f32.mrb[0].mxu0
      %2247 = vmatprep.mubr.f32.mxu0 0.0
      %2248 = vmatmul.mubr.f32.gmra.mrb[0].mxu0 %v2149
      %v2249 = vpop.f32.mrb[0].mxu0
      %v2250 = vadd.f32 %v2171, %v2249
      %v2251 = vpop.f32.mrb[0].mxu0
      %2252 = vdwg.mxu0
      %v2253 = vmax.f32 %v2240, 0.0
      %v2254 = vmax.f32 %v2245, 0.0
      %v2255 = vmax.f32 %v2250, 0.0
      %v2256 = vld [vmem:[%s10] sm:$0xff]
      %v2257 = vld [vmem:[%s10 + $0x8] sm:$0xff]
      %v2258 = vld [vmem:[%s10 + $0x10] sm:$0xff]
      %v2259 = vld [vmem:[%s10 + $0x18] sm:$0xff]
      %v2260 = vld [vmem:[%s10 + $0x20] sm:$0xff]
      %v2261 = vld [vmem:[%s10 + $0x28] sm:$0xff]
      %v2262 = vld [vmem:[%s10 + $0x30] sm:$0xff]
      %v2263 = vld [vmem:[%s10 + $0x38] sm:$0xff]
      %v2264 = vld [vmem:[%s10 + $0x40] sm:$0xff]
      %v2265 = vld [vmem:[%s10 + $0x48] sm:$0xff]
      %v2266 = vld [vmem:[%s10 + $0x50] sm:$0xff]
      %v2267 = vld [vmem:[%s10 + $0x58] sm:$0xff]
      %v2268 = vld [vmem:[%s10 + $0x60] sm:$0xff]
      %v2269 = vld [vmem:[%s10 + $0x68] sm:$0xff]
      %v2270 = vld [vmem:[%s10 + $0x70] sm:$0xff]
      %v2271 = vld [vmem:[%s10 + $0x78] sm:$0xff]
      %v2272 = vld [vmem:[%s11] sm:$0x1]
      %v2274 = vlaneseq
      %v2275 = vshrl.u32 %v2274, 7
      %v2276 = vsub.s32 0, %v2275
      %v2277 = vrot.slane %v2272, %v2276
      %2279 = vmatprep.subr.mxu0 0.0
      %2280 = vmatpush1.msra.mxu0 %v2256
      %2281 = vmatprep.subr.mxu0 0.0
      %2282 = vmatpush1.msra.mxu0 %v2257
      %2283 = vmatprep.subr.mxu0 0.0
      %2284 = vmatpush1.msra.mxu0 %v2258
      %2285 = vmatprep.subr.mxu0 0.0
      %2286 = vmatpush1.msra.mxu0 %v2259
      %2287 = vmatprep.subr.mxu0 0.0
      %2288 = vmatpush1.msra.mxu0 %v2260
      %2289 = vmatprep.subr.mxu0 0.0
      %2290 = vmatpush1.msra.mxu0 %v2261
      %2291 = vmatprep.subr.mxu0 0.0
      %2292 = vmatpush1.msra.mxu0 %v2262
      %2293 = vmatprep.subr.mxu0 0.0
      %2294 = vmatpush1.msra.mxu0 %v2263
      %2295 = vmatprep.subr.mxu0 0.0
      %2296 = vmatpush1.msra.mxu0 %v2264
      %2297 = vmatprep.subr.mxu0 0.0
      %2298 = vmatpush1.msra.mxu0 %v2265
      %2299 = vmatprep.subr.mxu0 0.0
      %2300 = vmatpush1.msra.mxu0 %v2266
      %2301 = vmatprep.subr.mxu0 0.0
      %2302 = vmatpush1.msra.mxu0 %v2267
      %2303 = vmatprep.subr.mxu0 0.0
      %2304 = vmatpush1.msra.mxu0 %v2268
      %2305 = vmatprep.subr.mxu0 0.0
      %2306 = vmatpush1.msra.mxu0 %v2269
      %2307 = vmatprep.subr.mxu0 0.0
      %2308 = vmatpush1.msra.mxu0 %v2270
      %2309 = vmatprep.subr.mxu0 0.0
      %2310 = vmatpush1.msra.mxu0 %v2271
      %2311 = vmatprep.subr.mxu0 0.0
      %2312 = vmatpush1.msra.mxu0 0.0
      %2313 = vmatprep.subr.mxu0 0.0
      %2314 = vmatpush1.msra.mxu0 0.0
      %2315 = vmatprep.subr.mxu0 0.0
      %2316 = vmatpush1.msra.mxu0 0.0
      %2317 = vmatprep.subr.mxu0 0.0
      %2318 = vmatpush1.msra.mxu0 0.0
      %2319 = vmatprep.subr.mxu0 0.0
      %2320 = vmatpush1.msra.mxu0 0.0
      %2321 = vmatprep.subr.mxu0 0.0
      %2322 = vmatpush1.msra.mxu0 0.0
      %2323 = vmatprep.subr.mxu0 0.0
      %2324 = vmatpush1.msra.mxu0 0.0
      %2325 = vmatprep.subr.mxu0 0.0
      %2326 = vmatpush1.msra.mxu0 0.0
      %2327 = vmatprep.subr.mxu0 0.0
      %2328 = vmatpush1.msra.mxu0 0.0
      %2329 = vmatprep.subr.mxu0 0.0
      %2330 = vmatpush1.msra.mxu0 0.0
      %2331 = vmatprep.subr.mxu0 0.0
      %2332 = vmatpush1.msra.mxu0 0.0
      %2333 = vmatprep.subr.mxu0 0.0
      %2334 = vmatpush1.msra.mxu0 0.0
      %2335 = vmatprep.subr.mxu0 0.0
      %2336 = vmatpush1.msra.mxu0 0.0
      %2337 = vmatprep.subr.mxu0 0.0
      %2338 = vmatpush1.msra.mxu0 0.0
      %2339 = vmatprep.subr.mxu0 0.0
      %2340 = vmatpush1.msra.mxu0 0.0
      %2341 = vmatprep.subr.mxu0 0.0
      %2342 = vmatpush1.msra.mxu0 0.0
      %2343 = vmatprep.mubr.f32.mxu0 0.0
      %2344 = vmatmul.mubr.f32.gmra.mrb[0].mxu0 %v2253
      %v2345 = vpop.f32.mrb[0].mxu0
      %v2346 = vadd.f32 %v2277, %v2345
      %v2347 = vpop.f32.mrb[0].mxu0
      %2348 = vmatprep.mubr.f32.mxu0 0.0
      %2349 = vmatmul.mubr.f32.gmra.mrb[0].mxu0 %v2254
      %v2350 = vpop.f32.mrb[0].mxu0
      %v2351 = vadd.f32 %v2277, %v2350
      %v2352 = vpop.f32.mrb[0].mxu0
      %2353 = vmatprep.mubr.f32.mxu0 0.0
      %2354 = vmatmul.mubr.f32.gmra.mrb[0].mxu0 %v2255
      %v2355 = vpop.f32.mrb[0].mxu0
      %v2356 = vadd.f32 %v2277, %v2355
      %v2357 = vpop.f32.mrb[0].mxu0
      %2358 = vdwg.mxu0
      %v2359 = vadd.f32 %v2147, %v2346
      %v2360 = vadd.f32 %v2148, %v2351
      %v2361 = vadd.f32 %v2149, %v2356
      %v2362 = vld [vmem:[%s14] sm:$0x1]
      %v2363 = vld [vmem:[%s15] sm:$0x1]
      %2364 = vadd.xlane.f32.xlu0 %v2359
      %v2365 = vpop.xlane.xlu0 %2364
      %2366 = vadd.xlane.f32.xlu0 %v2360
      %v2367 = vpop.xlane.xlu0 %2366
      %2368 = vadd.xlane.f32.xlu0 %v2361
      %v2369 = vpop.xlane.xlu0 %2368
      %v2370 = vmul.f32 %v2365, 0.03125
      %v2371 = vmul.f32 %v2367, 0.03125
      %v2372 = vmul.f32 %v2369, 0.03125
      %v2373 = vmul.f32 %v2359, %v2359
      %v2374 = vmul.f32 %v2360, %v2360
      %v2375 = vmul.f32 %v2361, %v2361
      %2376 = vadd.xlane.f32.xlu0 %v2373
      %v2377 = vpop.xlane.xlu0 %2376
      %2378 = vadd.xlane.f32.xlu0 %v2374
      %v2379 = vpop.xlane.xlu0 %2378
      %2380 = vadd.xlane.f32.xlu0 %v2375
      %v2381 = vpop.xlane.xlu0 %2380
      %v2382 = vmul.f32 %v2377, 0.03125
      %v2383 = vmul.f32 %v2379, 0.03125
      %v2384 = vmul.f32 %v2381, 0.03125
      %v2385 = vmul.f32 %v2370, %v2370
      %v2386 = vmul.f32 %v2371, %v2371
      %v2387 = vmul.f32 %v2372, %v2372
      %v2388 = vsub.f32 %v2382, %v2385
      %v2389 = vsub.f32 %v2383, %v2386
      %v2390 = vsub.f32 %v2384, %v2387
      %v2391 = vsub.f32 %v2359, %v2370
      %v2392 = vsub.f32 %v2360, %v2371
      %v2393 = vsub.f32 %v2361, %v2372
      %v2394 = vadd.f32 %v2388, 1e-05
      %v2395 = vadd.f32 %v2389, 1e-05
      %v2396 = vadd.f32 %v2390, 1e-05
      %v2397 = vrsqrt.pop %v2394
      %v2398 = vrsqrt.pop %v2395
      %v2399 = vrsqrt.pop %v2396
      %v2400 = vmul.f32 %v2391, %v2397
      %v2401 = vmul.f32 %v2392, %v2398
      %v2402 = vmul.f32 %v2393, %v2399
      %v2404 = vlaneseq
      %v2405 = vshrl.u32 %v2404, 7
      %v2406 = vsub.s32 0, %v2405
      %v2407 = vrot.slane %v2362, %v2406
      %v2409 = vmul.f32 %v2400, %v2407
      %v2410 = vmul.f32 %v2401, %v2407
      %v2411 = vmul.f32 %v2402, %v2407
      %v2413 = vlaneseq
      %v2414 = vshrl.u32 %v2413, 7
      %v2415 = vsub.s32 0, %v2414
      %v2416 = vrot.slane %v2363, %v2415
      %v2418 = vadd.f32 %v2409, %v2416
      %v2419 = vadd.f32 %v2410, %v2416
      %v2420 = vadd.f32 %v2411, %v2416
      %s2421 = scalar_lea.vmem %s3, 128
      %v2422 = vld [vmem:[%s2421] sm:$0xff]
      %v2423 = vld [vmem:[%s2421 + $0x8] sm:$0xff]
      %v2424 = vld [vmem:[%s2421 + $0x10] sm:$0xff]
      %v2425 = vld [vmem:[%s2421 + $0x18] sm:$0xff]
      %v2426 = vld [vmem:[%s2421 + $0x20] sm:$0xff]
      %v2427 = vld [vmem:[%s2421 + $0x28] sm:$0xff]
      %v2428 = vld [vmem:[%s2421 + $0x30] sm:$0xff]
      %v2429 = vld [vmem:[%s2421 + $0x38] sm:$0xff]
      %v2430 = vld [vmem:[%s2421 + $0x40] sm:$0xff]
      %v2431 = vld [vmem:[%s2421 + $0x48] sm:$0xff]
      %v2432 = vld [vmem:[%s2421 + $0x50] sm:$0xff]
      %v2433 = vld [vmem:[%s2421 + $0x58] sm:$0xff]
      %v2434 = vld [vmem:[%s2421 + $0x60] sm:$0xff]
      %v2435 = vld [vmem:[%s2421 + $0x68] sm:$0xff]
      %v2436 = vld [vmem:[%s2421 + $0x70] sm:$0xff]
      %v2437 = vld [vmem:[%s2421 + $0x78] sm:$0xff]
      %s2438 = scalar_lea.vmem %s4, 128
      %v2439 = vld [vmem:[%s2438] sm:$0xff]
      %v2440 = vld [vmem:[%s2438 + $0x8] sm:$0xff]
      %v2441 = vld [vmem:[%s2438 + $0x10] sm:$0xff]
      %v2442 = vld [vmem:[%s2438 + $0x18] sm:$0xff]
      %v2443 = vld [vmem:[%s2438 + $0x20] sm:$0xff]
      %v2444 = vld [vmem:[%s2438 + $0x28] sm:$0xff]
      %v2445 = vld [vmem:[%s2438 + $0x30] sm:$0xff]
      %v2446 = vld [vmem:[%s2438 + $0x38] sm:$0xff]
      %v2447 = vld [vmem:[%s2438 + $0x40] sm:$0xff]
      %v2448 = vld [vmem:[%s2438 + $0x48] sm:$0xff]
      %v2449 = vld [vmem:[%s2438 + $0x50] sm:$0xff]
      %v2450 = vld [vmem:[%s2438 + $0x58] sm:$0xff]
      %v2451 = vld [vmem:[%s2438 + $0x60] sm:$0xff]
      %v2452 = vld [vmem:[%s2438 + $0x68] sm:$0xff]
      %v2453 = vld [vmem:[%s2438 + $0x70] sm:$0xff]
      %v2454 = vld [vmem:[%s2438 + $0x78] sm:$0xff]
      %2455 = vmatprep.subr.mxu0 0.0
      %2456 = vmatpush1.msra.mxu0 %v2439
      %2457 = vmatprep.subr.mxu0 0.0
      %2458 = vmatpush1.msra.mxu0 %v2440
      %2459 = vmatprep.subr.mxu0 0.0
      %2460 = vmatpush1.msra.mxu0 %v2441
      %2461 = vmatprep.subr.mxu0 0.0
      %2462 = vmatpush1.msra.mxu0 %v2442
      %2463 = vmatprep.subr.mxu0 0.0
      %2464 = vmatpush1.msra.mxu0 %v2443
      %2465 = vmatprep.subr.mxu0 0.0
      %2466 = vmatpush1.msra.mxu0 %v2444
      %2467 = vmatprep.subr.mxu0 0.0
      %2468 = vmatpush1.msra.mxu0 %v2445
      %2469 = vmatprep.subr.mxu0 0.0
      %2470 = vmatpush1.msra.mxu0 %v2446
      %2471 = vmatprep.subr.mxu0 0.0
      %2472 = vmatpush1.msra.mxu0 %v2447
      %2473 = vmatprep.subr.mxu0 0.0
      %2474 = vmatpush1.msra.mxu0 %v2448
      %2475 = vmatprep.subr.mxu0 0.0
      %2476 = vmatpush1.msra.mxu0 %v2449
      %2477 = vmatprep.subr.mxu0 0.0
      %2478 = vmatpush1.msra.mxu0 %v2450
      %2479 = vmatprep.subr.mxu0 0.0
      %2480 = vmatpush1.msra.mxu0 %v2451
      %2481 = vmatprep.subr.mxu0 0.0
      %2482 = vmatpush1.msra.mxu0 %v2452
      %2483 = vmatprep.subr.mxu0 0.0
      %2484 = vmatpush1.msra.mxu0 %v2453
      %2485 = vmatprep.subr.mxu0 0.0
      %2486 = vmatpush1.msra.mxu0 %v2454
      %2487 = vmatprep.subr.mxu0 0.0
      %2488 = vmatpush1.msra.mxu0 0.0
      %2489 = vmatprep.subr.mxu0 0.0
      %2490 = vmatpush1.msra.mxu0 0.0
      %2491 = vmatprep.subr.mxu0 0.0
      %2492 = vmatpush1.msra.mxu0 0.0
      %2493 = vmatprep.subr.mxu0 0.0
      %2494 = vmatpush1.msra.mxu0 0.0
      %2495 = vmatprep.subr.mxu0 0.0
      %2496 = vmatpush1.msra.mxu0 0.0
      %2497 = vmatprep.subr.mxu0 0.0
      %2498 = vmatpush1.msra.mxu0 0.0
      %2499 = vmatprep.subr.mxu0 0.0
      %2500 = vmatpush1.msra.mxu0 0.0
      %2501 = vmatprep.subr.mxu0 0.0
      %2502 = vmatpush1.msra.mxu0 0.0
      %2503 = vmatprep.subr.mxu0 0.0
      %2504 = vmatpush1.msra.mxu0 0.0
      %2505 = vmatprep.subr.mxu0 0.0
      %2506 = vmatpush1.msra.mxu0 0.0
      %2507 = vmatprep.subr.mxu0 0.0
      %2508 = vmatpush1.msra.mxu0 0.0
      %2509 = vmatprep.subr.mxu0 0.0
      %2510 = vmatpush1.msra.mxu0 0.0
      %2511 = vmatprep.subr.mxu0 0.0
      %2512 = vmatpush1.msra.mxu0 0.0
      %2513 = vmatprep.subr.mxu0 0.0
      %2514 = vmatpush1.msra.mxu0 0.0
      %2515 = vmatprep.subr.mxu0 0.0
      %2516 = vmatpush1.msra.mxu0 0.0
      %2517 = vmatprep.subr.mxu0 0.0
      %2518 = vmatpush1.msra.mxu0 0.0
      %2519 = vmatprep.mubr.f32.mxu0 0.0
      %2520 = vmatmul.mubr.f32.gmra.mrb[0].mxu0 %v559
      %v2521 = vpop.f32.mrb[0].mxu0
      %v2522 = vadd.f32 0.0, %v2521
      %v2523 = vpop.f32.mrb[0].mxu0
      %2524 = vmatprep.mubr.f32.mxu0 0.0
      %2525 = vmatmul.mubr.f32.gmra.mrb[0].mxu0 %v560
      %v2526 = vpop.f32.mrb[0].mxu0
      %v2527 = vadd.f32 0.0, %v2526
      %v2528 = vpop.f32.mrb[0].mxu0
      %2529 = vmatprep.mubr.f32.mxu0 0.0
      %2530 = vmatmul.mubr.f32.gmra.mrb[0].mxu0 %v561
      %v2531 = vpop.f32.mrb[0].mxu0
      %v2532 = vadd.f32 0.0, %v2531
      %v2533 = vpop.f32.mrb[0].mxu0
      %2534 = vdwg.mxu0
      %2535 = vmatprep.subr.mxu0 0.0
      %2536 = vmatpush1.msra.mxu0 %v2422
      %2537 = vmatprep.subr.mxu0 0.0
      %2538 = vmatpush1.msra.mxu0 %v2423
      %2539 = vmatprep.subr.mxu0 0.0
      %2540 = vmatpush1.msra.mxu0 %v2424
      %2541 = vmatprep.subr.mxu0 0.0
      %2542 = vmatpush1.msra.mxu0 %v2425
      %2543 = vmatprep.subr.mxu0 0.0
      %2544 = vmatpush1.msra.mxu0 %v2426
      %2545 = vmatprep.subr.mxu0 0.0
      %2546 = vmatpush1.msra.mxu0 %v2427
      %2547 = vmatprep.subr.mxu0 0.0
      %2548 = vmatpush1.msra.mxu0 %v2428
      %2549 = vmatprep.subr.mxu0 0.0
      %2550 = vmatpush1.msra.mxu0 %v2429
      %2551 = vmatprep.subr.mxu0 0.0
      %2552 = vmatpush1.msra.mxu0 %v2430
      %2553 = vmatprep.subr.mxu0 0.0
      %2554 = vmatpush1.msra.mxu0 %v2431
      %2555 = vmatprep.subr.mxu0 0.0
      %2556 = vmatpush1.msra.mxu0 %v2432
      %2557 = vmatprep.subr.mxu0 0.0
      %2558 = vmatpush1.msra.mxu0 %v2433
      %2559 = vmatprep.subr.mxu0 0.0
      %2560 = vmatpush1.msra.mxu0 %v2434
      %2561 = vmatprep.subr.mxu0 0.0
      %2562 = vmatpush1.msra.mxu0 %v2435
      %2563 = vmatprep.subr.mxu0 0.0
      %2564 = vmatpush1.msra.mxu0 %v2436
      %2565 = vmatprep.subr.mxu0 0.0
      %2566 = vmatpush1.msra.mxu0 %v2437
      %2567 = vmatprep.subr.mxu0 0.0
      %2568 = vmatpush1.msra.mxu0 0.0
      %2569 = vmatprep.subr.mxu0 0.0
      %2570 = vmatpush1.msra.mxu0 0.0
      %2571 = vmatprep.subr.mxu0 0.0
      %2572 = vmatpush1.msra.mxu0 0.0
      %2573 = vmatprep.subr.mxu0 0.0
      %2574 = vmatpush1.msra.mxu0 0.0
      %2575 = vmatprep.subr.mxu0 0.0
      %2576 = vmatpush1.msra.mxu0 0.0
      %2577 = vmatprep.subr.mxu0 0.0
      %2578 = vmatpush1.msra.mxu0 0.0
      %2579 = vmatprep.subr.mxu0 0.0
      %2580 = vmatpush1.msra.mxu0 0.0
      %2581 = vmatprep.subr.mxu0 0.0
      %2582 = vmatpush1.msra.mxu0 0.0
      %2583 = vmatprep.subr.mxu0 0.0
      %2584 = vmatpush1.msra.mxu0 0.0
      %2585 = vmatprep.subr.mxu0 0.0
      %2586 = vmatpush1.msra.mxu0 0.0
      %2587 = vmatprep.subr.mxu0 0.0
      %2588 = vmatpush1.msra.mxu0 0.0
      %2589 = vmatprep.subr.mxu0 0.0
      %2590 = vmatpush1.msra.mxu0 0.0
      %2591 = vmatprep.subr.mxu0 0.0
      %2592 = vmatpush1.msra.mxu0 0.0
      %2593 = vmatprep.subr.mxu0 0.0
      %2594 = vmatpush1.msra.mxu0 0.0
      %2595 = vmatprep.subr.mxu0 0.0
      %2596 = vmatpush1.msra.mxu0 0.0
      %2597 = vmatprep.subr.mxu0 0.0
      %2598 = vmatpush1.msra.mxu0 0.0
      %2599 = vmatprep.mubr.f32.mxu0 0.0
      %2600 = vmatmul.mubr.f32.gmra.mrb[0].mxu0 %v2418
      %v2601 = vpop.f32.mrb[0].mxu0
      %v2602 = vadd.f32 %v2522, %v2601
      %v2603 = vpop.f32.mrb[0].mxu0
      %2604 = vmatprep.mubr.f32.mxu0 0.0
      %2605 = vmatmul.mubr.f32.gmra.mrb[0].mxu0 %v2419
      %v2606 = vpop.f32.mrb[0].mxu0
      %v2607 = vadd.f32 %v2527, %v2606
      %v2608 = vpop.f32.mrb[0].mxu0
      %2609 = vmatprep.mubr.f32.mxu0 0.0
      %2610 = vmatmul.mubr.f32.gmra.mrb[0].mxu0 %v2420
      %v2611 = vpop.f32.mrb[0].mxu0
      %v2612 = vadd.f32 %v2532, %v2611
      %v2613 = vpop.f32.mrb[0].mxu0
      %2614 = vdwg.mxu0
      %s2615 = scalar_lea.vmem %s5, 1
      %v2616 = vld [vmem:[%s2615] sm:$0x1]
      %v2618 = vlaneseq
      %v2619 = vshrl.u32 %v2618, 7
      %v2620 = vsub.s32 0, %v2619
      %v2621 = vrot.slane %v2616, %v2620
      %v2623 = vadd.f32 %v2602, %v2621
      %v2624 = vadd.f32 %v2607, %v2621
      %v2625 = vadd.f32 %v2612, %v2621
      %s2626 = scalar_lea.vmem %s6, 32
      %v2627 = vld [vmem:[%s2626] sm:$0xff]
      %v2628 = vld [vmem:[%s2626 + $0x8] sm:$0xff]
      %v2629 = vld [vmem:[%s2626 + $0x10] sm:$0xff]
      %v2630 = vld [vmem:[%s2626 + $0x18] sm:$0xff]
      %2634 = vrot.lane.b32.xlu0 %v2623, 96
      %v2635 = vpop.permute.xlu0 %2634
      %2636 = vrot.lane.b32.xlu0 %v2624, 96
      %v2637 = vpop.permute.xlu0 %2636
      %2638 = vrot.lane.b32.xlu0 %v2625, 96
      %v2639 = vpop.permute.xlu0 %2638
      %v2640 = vsel %vm786, %v2623, 0
      %v2642 = vsel %vm786, %v2624, 0
      %v2644 = vsel %vm786, %v2625, 0
      %v2646 = vsel %vm786, %v2635, 0
      %v2648 = vsel %vm786, %v2637, 0
      %v2650 = vsel %vm786, %v2639, 0
      %2652 = vmatprep.subr.mxu0 0.0
      %2653 = vmatpush1.xpose.msra.mxu0 %v2646
      %2654 = vmatprep.subr.mxu0 0.0
      %2655 = vmatpush1.xpose.msra.mxu0 %v2648
      %2656 = vmatprep.subr.mxu0 0.0
      %2657 = vmatpush1.xpose.msra.mxu0 %v2650
      %2658 = vmatprep.subr.mxu0 0.0
      %2659 = vmatpush1.xpose.msra.mxu0 0.0
      %2660 = vmatprep.subr.mxu0 0.0
      %2661 = vmatpush1.xpose.msra.mxu0 0.0
      %2662 = vmatprep.subr.mxu0 0.0
      %2663 = vmatpush1.xpose.msra.mxu0 0.0
      %2664 = vmatprep.subr.mxu0 0.0
      %2665 = vmatpush1.xpose.msra.mxu0 0.0
      %2666 = vmatprep.subr.mxu0 0.0
      %2667 = vmatpush1.xpose.msra.mxu0 0.0
      %2668 = vmatprep.subr.mxu0 0.0
      %2669 = vmatpush1.xpose.msra.mxu0 0.0
      %2670 = vmatprep.subr.mxu0 0.0
      %2671 = vmatpush1.xpose.msra.mxu0 0.0
      %2672 = vmatprep.subr.mxu0 0.0
      %2673 = vmatpush1.xpose.msra.mxu0 0.0
      %2674 = vmatprep.subr.mxu0 0.0
      %2675 = vmatpush1.xpose.msra.mxu0 0.0
      %2676 = vmatprep.subr.mxu0 0.0
      %2677 = vmatpush1.xpose.msra.mxu0 0.0
      %2678 = vmatprep.subr.mxu0 0.0
      %2679 = vmatpush1.xpose.msra.mxu0 0.0
      %2680 = vmatprep.subr.mxu0 0.0
      %2681 = vmatpush1.xpose.msra.mxu0 0.0
      %2682 = vmatprep.subr.mxu0 0.0
      %2683 = vmatpush1.xpose.msra.mxu0 0.0
      %2684 = vmatprep.subr.mxu0 0.0
      %2685 = vmatpush1.xpose.msra.mxu0 0.0
      %2686 = vmatprep.subr.mxu0 0.0
      %2687 = vmatpush1.xpose.msra.mxu0 0.0
      %2688 = vmatprep.subr.mxu0 0.0
      %2689 = vmatpush1.xpose.msra.mxu0 0.0
      %2690 = vmatprep.subr.mxu0 0.0
      %2691 = vmatpush1.xpose.msra.mxu0 0.0
      %2692 = vmatprep.subr.mxu0 0.0
      %2693 = vmatpush1.xpose.msra.mxu0 0.0
      %2694 = vmatprep.subr.mxu0 0.0
      %2695 = vmatpush1.xpose.msra.mxu0 0.0
      %2696 = vmatprep.subr.mxu0 0.0
      %2697 = vmatpush1.xpose.msra.mxu0 0.0
      %2698 = vmatprep.subr.mxu0 0.0
      %2699 = vmatpush1.xpose.msra.mxu0 0.0
      %2700 = vmatprep.subr.mxu0 0.0
      %2701 = vmatpush1.xpose.msra.mxu0 0.0
      %2702 = vmatprep.subr.mxu0 0.0
      %2703 = vmatpush1.xpose.msra.mxu0 0.0
      %2704 = vmatprep.subr.mxu0 0.0
      %2705 = vmatpush1.xpose.msra.mxu0 0.0
      %2706 = vmatprep.subr.mxu0 0.0
      %2707 = vmatpush1.xpose.msra.mxu0 0.0
      %2708 = vmatprep.subr.mxu0 0.0
      %2709 = vmatpush1.xpose.msra.mxu0 0.0
      %2710 = vmatprep.subr.mxu0 0.0
      %2711 = vmatpush1.xpose.msra.mxu0 0.0
      %2712 = vmatprep.subr.mxu0 0.0
      %2713 = vmatpush1.xpose.msra.mxu0 0.0
      %2714 = vmatprep.subr.mxu0 0.0
      %2715 = vmatpush1.xpose.msra.mxu0 0.0
      %2716 = vmatprep.mubr.f32.mxu0 0.0
      %2717 = vmatmul.mubr.f32.gmra.mrb[0].mxu0 %v2640
      %v2718 = vpop.f32.mrb[0].mxu0
      %v2719 = vadd.f32 %v775, %v2718
      %v2720 = vpop.f32.mrb[0].mxu0
      %2721 = vmatprep.mubr.f32.mxu0 0.0
      %2722 = vmatmul.mubr.f32.gmra.mrb[0].mxu0 %v2642
      %v2723 = vpop.f32.mrb[0].mxu0
      %v2724 = vadd.f32 %v775, %v2723
      %v2725 = vpop.f32.mrb[0].mxu0
      %2726 = vmatprep.mubr.f32.mxu0 0.0
      %2727 = vmatmul.mubr.f32.gmra.mrb[0].mxu0 %v2644
      %v2728 = vpop.f32.mrb[0].mxu0
      %v2729 = vadd.f32 %v775, %v2728
      %v2730 = vpop.f32.mrb[0].mxu0
      %2731 = vdwg.mxu0
      %v2732 = vsel %vm879, %v2719, -inf
      %2733 = vmax.xlane.f32.xlu0 %v2732
      %v2734 = vpop.xlane.xlu0 %2733
      %v2735 = vsel %vm879, %v2724, -inf
      %2736 = vmax.xlane.f32.xlu0 %v2735
      %v2737 = vpop.xlane.xlu0 %2736
      %v2738 = vsel %vm879, %v2729, -inf
      %2739 = vmax.xlane.f32.xlu0 %v2738
      %v2740 = vpop.xlane.xlu0 %2739
      %v2741 = vsub.f32 %v2719, %v2734
      %v2742 = vsub.f32 %v2724, %v2737
      %v2743 = vsub.f32 %v2729, %v2740
      %v2744 = vmul.f32 %v2741, 1.442695
      %v2745 = vpow.pop %v2744
      %v2746 = vmul.f32 %v2742, 1.442695
      %v2747 = vpow.pop %v2746
      %v2748 = vmul.f32 %v2743, 1.442695
      %v2749 = vpow.pop %v2748
      %v2750 = vsel %vm879, %v2745, 0.0
      %2751 = vadd.xlane.f32.xlu0 %v2750
      %v2752 = vpop.xlane.xlu0 %2751
      %v2753 = vsel %vm879, %v2747, 0.0
      %2754 = vadd.xlane.f32.xlu0 %v2753
      %v2755 = vpop.xlane.xlu0 %2754
      %v2756 = vsel %vm879, %v2749, 0.0
      %2757 = vadd.xlane.f32.xlu0 %v2756
      %v2758 = vpop.xlane.xlu0 %2757
      %2759 = vrot.lane.b32.xlu0 %v2623, 64
      %v2760 = vpop.permute.xlu0 %2759
      %2761 = vrot.lane.b32.xlu0 %v2624, 64
      %v2762 = vpop.permute.xlu0 %2761
      %2763 = vrot.lane.b32.xlu0 %v2625, 64
      %v2764 = vpop.permute.xlu0 %2763
      %v2769 = vsel %vm879, %v2745, 0
      %v2772 = vsel %vm879, %v2747, 0
      %v2775 = vsel %vm879, %v2749, 0
      %2777 = vmatprep.subr.mxu0 0.0
      %2778 = vmatpush1.msra.mxu0 %v2760
      %2779 = vmatprep.subr.mxu0 0.0
      %2780 = vmatpush1.msra.mxu0 %v2762
      %2781 = vmatprep.subr.mxu0 0.0
      %2782 = vmatpush1.msra.mxu0 %v2764
      %2783 = vmatprep.subr.mxu0 0.0
      %2784 = vmatpush1.msra.mxu0 0.0
      %2785 = vmatprep.subr.mxu0 0.0
      %2786 = vmatpush1.msra.mxu0 0.0
      %2787 = vmatprep.subr.mxu0 0.0
      %2788 = vmatpush1.msra.mxu0 0.0
      %2789 = vmatprep.subr.mxu0 0.0
      %2790 = vmatpush1.msra.mxu0 0.0
      %2791 = vmatprep.subr.mxu0 0.0
      %2792 = vmatpush1.msra.mxu0 0.0
      %2793 = vmatprep.subr.mxu0 0.0
      %2794 = vmatpush1.msra.mxu0 0.0
      %2795 = vmatprep.subr.mxu0 0.0
      %2796 = vmatpush1.msra.mxu0 0.0
      %2797 = vmatprep.subr.mxu0 0.0
      %2798 = vmatpush1.msra.mxu0 0.0
      %2799 = vmatprep.subr.mxu0 0.0
      %2800 = vmatpush1.msra.mxu0 0.0
      %2801 = vmatprep.subr.mxu0 0.0
      %2802 = vmatpush1.msra.mxu0 0.0
      %2803 = vmatprep.subr.mxu0 0.0
      %2804 = vmatpush1.msra.mxu0 0.0
      %2805 = vmatprep.subr.mxu0 0.0
      %2806 = vmatpush1.msra.mxu0 0.0
      %2807 = vmatprep.subr.mxu0 0.0
      %2808 = vmatpush1.msra.mxu0 0.0
      %2809 = vmatprep.subr.mxu0 0.0
      %2810 = vmatpush1.msra.mxu0 0.0
      %2811 = vmatprep.subr.mxu0 0.0
      %2812 = vmatpush1.msra.mxu0 0.0
      %2813 = vmatprep.subr.mxu0 0.0
      %2814 = vmatpush1.msra.mxu0 0.0
      %2815 = vmatprep.subr.mxu0 0.0
      %2816 = vmatpush1.msra.mxu0 0.0
      %2817 = vmatprep.subr.mxu0 0.0
      %2818 = vmatpush1.msra.mxu0 0.0
      %2819 = vmatprep.subr.mxu0 0.0
      %2820 = vmatpush1.msra.mxu0 0.0
      %2821 = vmatprep.subr.mxu0 0.0
      %2822 = vmatpush1.msra.mxu0 0.0
      %2823 = vmatprep.subr.mxu0 0.0
      %2824 = vmatpush1.msra.mxu0 0.0
      %2825 = vmatprep.subr.mxu0 0.0
      %2826 = vmatpush1.msra.mxu0 0.0
      %2827 = vmatprep.subr.mxu0 0.0
      %2828 = vmatpush1.msra.mxu0 0.0
      %2829 = vmatprep.subr.mxu0 0.0
      %2830 = vmatpush1.msra.mxu0 0.0
      %2831 = vmatprep.subr.mxu0 0.0
      %2832 = vmatpush1.msra.mxu0 0.0
      %2833 = vmatprep.subr.mxu0 0.0
      %2834 = vmatpush1.msra.mxu0 0.0
      %2835 = vmatprep.subr.mxu0 0.0
      %2836 = vmatpush1.msra.mxu0 0.0
      %2837 = vmatprep.subr.mxu0 0.0
      %2838 = vmatpush1.msra.mxu0 0.0
      %2839 = vmatprep.subr.mxu0 0.0
      %2840 = vmatpush1.msra.mxu0 0.0
      %2841 = vmatprep.mubr.f32.mxu0 0.0
      %2842 = vmatmul.mubr.f32.gmra.mrb[0].mxu0 %v2769
      %v2843 = vpop.f32.mrb[0].mxu0
      %v2844 = vadd.f32 0.0, %v2843
      %v2845 = vpop.f32.mrb[0].mxu0
      %2846 = vmatprep.mubr.f32.mxu0 0.0
      %2847 = vmatmul.mubr.f32.gmra.mrb[0].mxu0 %v2772
      %v2848 = vpop.f32.mrb[0].mxu0
      %v2849 = vadd.f32 0.0, %v2848
      %v2850 = vpop.f32.mrb[0].mxu0
      %2851 = vmatprep.mubr.f32.mxu0 0.0
      %2852 = vmatmul.mubr.f32.gmra.mrb[0].mxu0 %v2775
      %v2853 = vpop.f32.mrb[0].mxu0
      %v2854 = vadd.f32 0.0, %v2853
      %v2855 = vpop.f32.mrb[0].mxu0
      %2856 = vdwg.mxu0
      %v2857 = vrcp.pop %v2752
      %v2858 = vrcp.pop %v2755
      %v2859 = vrcp.pop %v2758
      %v2860 = vmul.f32 %v2844, %v2857
      %v2861 = vmul.f32 %v2849, %v2858
      %v2862 = vmul.f32 %v2854, %v2859
      %2863 = vrot.lane.b32.xlu0 %v2623, 120
      %v2864 = vpop.permute.xlu0 %2863
      %2865 = vrot.lane.b32.xlu0 %v2624, 120
      %v2866 = vpop.permute.xlu0 %2865
      %2867 = vrot.lane.b32.xlu0 %v2625, 120
      %v2868 = vpop.permute.xlu0 %2867
      %2869 = vrot.lane.b32.xlu0 %v2623, 88
      %v2870 = vpop.permute.xlu0 %2869
      %2871 = vrot.lane.b32.xlu0 %v2624, 88
      %v2872 = vpop.permute.xlu0 %2871
      %2873 = vrot.lane.b32.xlu0 %v2625, 88
      %v2874 = vpop.permute.xlu0 %2873
      %v2875 = vsel %vm786, %v2864, 0
      %v2877 = vsel %vm786, %v2866, 0
      %v2879 = vsel %vm786, %v2868, 0
      %v2881 = vsel %vm786, %v2870, 0
      %v2883 = vsel %vm786, %v2872, 0
      %v2885 = vsel %vm786, %v2874, 0
      %2887 = vmatprep.subr.mxu0 0.0
      %2888 = vmatpush1.xpose.msra.mxu0 %v2881
      %2889 = vmatprep.subr.mxu0 0.0
      %2890 = vmatpush1.xpose.msra.mxu0 %v2883
      %2891 = vmatprep.subr.mxu0 0.0
      %2892 = vmatpush1.xpose.msra.mxu0 %v2885
      %2893 = vmatprep.subr.mxu0 0.0
      %2894 = vmatpush1.xpose.msra.mxu0 0.0
      %2895 = vmatprep.subr.mxu0 0.0
      %2896 = vmatpush1.xpose.msra.mxu0 0.0
      %2897 = vmatprep.subr.mxu0 0.0
      %2898 = vmatpush1.xpose.msra.mxu0 0.0
      %2899 = vmatprep.subr.mxu0 0.0
      %2900 = vmatpush1.xpose.msra.mxu0 0.0
      %2901 = vmatprep.subr.mxu0 0.0
      %2902 = vmatpush1.xpose.msra.mxu0 0.0
      %2903 = vmatprep.subr.mxu0 0.0
      %2904 = vmatpush1.xpose.msra.mxu0 0.0
      %2905 = vmatprep.subr.mxu0 0.0
      %2906 = vmatpush1.xpose.msra.mxu0 0.0
      %2907 = vmatprep.subr.mxu0 0.0
      %2908 = vmatpush1.xpose.msra.mxu0 0.0
      %2909 = vmatprep.subr.mxu0 0.0
      %2910 = vmatpush1.xpose.msra.mxu0 0.0
      %2911 = vmatprep.subr.mxu0 0.0
      %2912 = vmatpush1.xpose.msra.mxu0 0.0
      %2913 = vmatprep.subr.mxu0 0.0
      %2914 = vmatpush1.xpose.msra.mxu0 0.0
      %2915 = vmatprep.subr.mxu0 0.0
      %2916 = vmatpush1.xpose.msra.mxu0 0.0
      %2917 = vmatprep.subr.mxu0 0.0
      %2918 = vmatpush1.xpose.msra.mxu0 0.0
      %2919 = vmatprep.subr.mxu0 0.0
      %2920 = vmatpush1.xpose.msra.mxu0 0.0
      %2921 = vmatprep.subr.mxu0 0.0
      %2922 = vmatpush1.xpose.msra.mxu0 0.0
      %2923 = vmatprep.subr.mxu0 0.0
      %2924 = vmatpush1.xpose.msra.mxu0 0.0
      %2925 = vmatprep.subr.mxu0 0.0
      %2926 = vmatpush1.xpose.msra.mxu0 0.0
      %2927 = vmatprep.subr.mxu0 0.0
      %2928 = vmatpush1.xpose.msra.mxu0 0.0
      %2929 = vmatprep.subr.mxu0 0.0
      %2930 = vmatpush1.xpose.msra.mxu0 0.0
      %2931 = vmatprep.subr.mxu0 0.0
      %2932 = vmatpush1.xpose.msra.mxu0 0.0
      %2933 = vmatprep.subr.mxu0 0.0
      %2934 = vmatpush1.xpose.msra.mxu0 0.0
      %2935 = vmatprep.subr.mxu0 0.0
      %2936 = vmatpush1.xpose.msra.mxu0 0.0
      %2937 = vmatprep.subr.mxu0 0.0
      %2938 = vmatpush1.xpose.msra.mxu0 0.0
      %2939 = vmatprep.subr.mxu0 0.0
      %2940 = vmatpush1.xpose.msra.mxu0 0.0
      %2941 = vmatprep.subr.mxu0 0.0
      %2942 = vmatpush1.xpose.msra.mxu0 0.0
      %2943 = vmatprep.subr.mxu0 0.0
      %2944 = vmatpush1.xpose.msra.mxu0 0.0
      %2945 = vmatprep.subr.mxu0 0.0
      %2946 = vmatpush1.xpose.msra.mxu0 0.0
      %2947 = vmatprep.subr.mxu0 0.0
      %2948 = vmatpush1.xpose.msra.mxu0 0.0
      %2949 = vmatprep.subr.mxu0 0.0
      %2950 = vmatpush1.xpose.msra.mxu0 0.0
      %2951 = vmatprep.mubr.f32.mxu0 0.0
      %2952 = vmatmul.mubr.f32.gmra.mrb[0].mxu0 %v2875
      %v2953 = vpop.f32.mrb[0].mxu0
      %v2954 = vadd.f32 %v775, %v2953
      %v2955 = vpop.f32.mrb[0].mxu0
      %2956 = vmatprep.mubr.f32.mxu0 0.0
      %2957 = vmatmul.mubr.f32.gmra.mrb[0].mxu0 %v2877
      %v2958 = vpop.f32.mrb[0].mxu0
      %v2959 = vadd.f32 %v775, %v2958
      %v2960 = vpop.f32.mrb[0].mxu0
      %2961 = vmatprep.mubr.f32.mxu0 0.0
      %2962 = vmatmul.mubr.f32.gmra.mrb[0].mxu0 %v2879
      %v2963 = vpop.f32.mrb[0].mxu0
      %v2964 = vadd.f32 %v775, %v2963
      %v2965 = vpop.f32.mrb[0].mxu0
      %2966 = vdwg.mxu0
      %v2967 = vsel %vm879, %v2954, -inf
      %2968 = vmax.xlane.f32.xlu0 %v2967
      %v2969 = vpop.xlane.xlu0 %2968
      %v2970 = vsel %vm879, %v2959, -inf
      %2971 = vmax.xlane.f32.xlu0 %v2970
      %v2972 = vpop.xlane.xlu0 %2971
      %v2973 = vsel %vm879, %v2964, -inf
      %2974 = vmax.xlane.f32.xlu0 %v2973
      %v2975 = vpop.xlane.xlu0 %2974
      %v2976 = vsub.f32 %v2954, %v2969
      %v2977 = vsub.f32 %v2959, %v2972
      %v2978 = vsub.f32 %v2964, %v2975
      %v2979 = vmul.f32 %v2976, 1.442695
      %v2980 = vpow.pop %v2979
      %v2981 = vmul.f32 %v2977, 1.442695
      %v2982 = vpow.pop %v2981
      %v2983 = vmul.f32 %v2978, 1.442695
      %v2984 = vpow.pop %v2983
      %v2985 = vsel %vm879, %v2980, 0.0
      %2986 = vadd.xlane.f32.xlu0 %v2985
      %v2987 = vpop.xlane.xlu0 %2986
      %v2988 = vsel %vm879, %v2982, 0.0
      %2989 = vadd.xlane.f32.xlu0 %v2988
      %v2990 = vpop.xlane.xlu0 %2989
      %v2991 = vsel %vm879, %v2984, 0.0
      %2992 = vadd.xlane.f32.xlu0 %v2991
      %v2993 = vpop.xlane.xlu0 %2992
      %2994 = vrot.lane.b32.xlu0 %v2623, 56
      %v2995 = vpop.permute.xlu0 %2994
      %2996 = vrot.lane.b32.xlu0 %v2624, 56
      %v2997 = vpop.permute.xlu0 %2996
      %2998 = vrot.lane.b32.xlu0 %v2625, 56
      %v2999 = vpop.permute.xlu0 %2998
      %v3004 = vsel %vm879, %v2980, 0
      %v3007 = vsel %vm879, %v2982, 0
      %v3010 = vsel %vm879, %v2984, 0
      %3012 = vmatprep.subr.mxu0 0.0
      %3013 = vmatpush1.msra.mxu0 %v2995
      %3014 = vmatprep.subr.mxu0 0.0
      %3015 = vmatpush1.msra.mxu0 %v2997
      %3016 = vmatprep.subr.mxu0 0.0
      %3017 = vmatpush1.msra.mxu0 %v2999
      %3018 = vmatprep.subr.mxu0 0.0
      %3019 = vmatpush1.msra.mxu0 0.0
      %3020 = vmatprep.subr.mxu0 0.0
      %3021 = vmatpush1.msra.mxu0 0.0
      %3022 = vmatprep.subr.mxu0 0.0
      %3023 = vmatpush1.msra.mxu0 0.0
      %3024 = vmatprep.subr.mxu0 0.0
      %3025 = vmatpush1.msra.mxu0 0.0
      %3026 = vmatprep.subr.mxu0 0.0
      %3027 = vmatpush1.msra.mxu0 0.0
      %3028 = vmatprep.subr.mxu0 0.0
      %3029 = vmatpush1.msra.mxu0 0.0
      %3030 = vmatprep.subr.mxu0 0.0
      %3031 = vmatpush1.msra.mxu0 0.0
      %3032 = vmatprep.subr.mxu0 0.0
      %3033 = vmatpush1.msra.mxu0 0.0
      %3034 = vmatprep.subr.mxu0 0.0
      %3035 = vmatpush1.msra.mxu0 0.0
      %3036 = vmatprep.subr.mxu0 0.0
      %3037 = vmatpush1.msra.mxu0 0.0
      %3038 = vmatprep.subr.mxu0 0.0
      %3039 = vmatpush1.msra.mxu0 0.0
      %3040 = vmatprep.subr.mxu0 0.0
      %3041 = vmatpush1.msra.mxu0 0.0
      %3042 = vmatprep.subr.mxu0 0.0
      %3043 = vmatpush1.msra.mxu0 0.0
      %3044 = vmatprep.subr.mxu0 0.0
      %3045 = vmatpush1.msra.mxu0 0.0
      %3046 = vmatprep.subr.mxu0 0.0
      %3047 = vmatpush1.msra.mxu0 0.0
      %3048 = vmatprep.subr.mxu0 0.0
      %3049 = vmatpush1.msra.mxu0 0.0
      %3050 = vmatprep.subr.mxu0 0.0
      %3051 = vmatpush1.msra.mxu0 0.0
      %3052 = vmatprep.subr.mxu0 0.0
      %3053 = vmatpush1.msra.mxu0 0.0
      %3054 = vmatprep.subr.mxu0 0.0
      %3055 = vmatpush1.msra.mxu0 0.0
      %3056 = vmatprep.subr.mxu0 0.0
      %3057 = vmatpush1.msra.mxu0 0.0
      %3058 = vmatprep.subr.mxu0 0.0
      %3059 = vmatpush1.msra.mxu0 0.0
      %3060 = vmatprep.subr.mxu0 0.0
      %3061 = vmatpush1.msra.mxu0 0.0
      %3062 = vmatprep.subr.mxu0 0.0
      %3063 = vmatpush1.msra.mxu0 0.0
      %3064 = vmatprep.subr.mxu0 0.0
      %3065 = vmatpush1.msra.mxu0 0.0
      %3066 = vmatprep.subr.mxu0 0.0
      %3067 = vmatpush1.msra.mxu0 0.0
      %3068 = vmatprep.subr.mxu0 0.0
      %3069 = vmatpush1.msra.mxu0 0.0
      %3070 = vmatprep.subr.mxu0 0.0
      %3071 = vmatpush1.msra.mxu0 0.0
      %3072 = vmatprep.subr.mxu0 0.0
      %3073 = vmatpush1.msra.mxu0 0.0
      %3074 = vmatprep.subr.mxu0 0.0
      %3075 = vmatpush1.msra.mxu0 0.0
      %3076 = vmatprep.mubr.f32.mxu0 0.0
      %3077 = vmatmul.mubr.f32.gmra.mrb[0].mxu0 %v3004
      %v3078 = vpop.f32.mrb[0].mxu0
      %v3079 = vadd.f32 0.0, %v3078
      %v3080 = vpop.f32.mrb[0].mxu0
      %3081 = vmatprep.mubr.f32.mxu0 0.0
      %3082 = vmatmul.mubr.f32.gmra.mrb[0].mxu0 %v3007
      %v3083 = vpop.f32.mrb[0].mxu0
      %v3084 = vadd.f32 0.0, %v3083
      %v3085 = vpop.f32.mrb[0].mxu0
      %3086 = vmatprep.mubr.f32.mxu0 0.0
      %3087 = vmatmul.mubr.f32.gmra.mrb[0].mxu0 %v3010
      %v3088 = vpop.f32.mrb[0].mxu0
      %v3089 = vadd.f32 0.0, %v3088
      %v3090 = vpop.f32.mrb[0].mxu0
      %3091 = vdwg.mxu0
      %v3092 = vrcp.pop %v2987
      %v3093 = vrcp.pop %v2990
      %v3094 = vrcp.pop %v2993
      %v3095 = vmul.f32 %v3079, %v3092
      %v3096 = vmul.f32 %v3084, %v3093
      %v3097 = vmul.f32 %v3089, %v3094
      %v3099 = vsel %vm786, %v3095, 0
      %v3102 = vsel %vm786, %v3096, 0
      %v3105 = vsel %vm786, %v3097, 0
      %3107 = vmatprep.subr.mxu0 0.0
      %3108 = vmatpush1.msra.mxu0 %v2628
      %3109 = vmatprep.subr.mxu0 0.0
      %3110 = vmatpush1.msra.mxu0 0.0
      %3111 = vmatprep.subr.mxu0 0.0
      %3112 = vmatpush1.msra.mxu0 0.0
      %3113 = vmatprep.subr.mxu0 0.0
      %3114 = vmatpush1.msra.mxu0 0.0
      %3115 = vmatprep.subr.mxu0 0.0
      %3116 = vmatpush1.msra.mxu0 0.0
      %3117 = vmatprep.subr.mxu0 0.0
      %3118 = vmatpush1.msra.mxu0 0.0
      %3119 = vmatprep.subr.mxu0 0.0
      %3120 = vmatpush1.msra.mxu0 0.0
      %3121 = vmatprep.subr.mxu0 0.0
      %3122 = vmatpush1.msra.mxu0 0.0
      %3123 = vmatprep.subr.mxu0 0.0
      %3124 = vmatpush1.msra.mxu0 0.0
      %3125 = vmatprep.subr.mxu0 0.0
      %3126 = vmatpush1.msra.mxu0 0.0
      %3127 = vmatprep.subr.mxu0 0.0
      %3128 = vmatpush1.msra.mxu0 0.0
      %3129 = vmatprep.subr.mxu0 0.0
      %3130 = vmatpush1.msra.mxu0 0.0
      %3131 = vmatprep.subr.mxu0 0.0
      %3132 = vmatpush1.msra.mxu0 0.0
      %3133 = vmatprep.subr.mxu0 0.0
      %3134 = vmatpush1.msra.mxu0 0.0
      %3135 = vmatprep.subr.mxu0 0.0
      %3136 = vmatpush1.msra.mxu0 0.0
      %3137 = vmatprep.subr.mxu0 0.0
      %3138 = vmatpush1.msra.mxu0 0.0
      %3139 = vmatprep.subr.mxu0 0.0
      %3140 = vmatpush1.msra.mxu0 0.0
      %3141 = vmatprep.subr.mxu0 0.0
      %3142 = vmatpush1.msra.mxu0 0.0
      %3143 = vmatprep.subr.mxu0 0.0
      %3144 = vmatpush1.msra.mxu0 0.0
      %3145 = vmatprep.subr.mxu0 0.0
      %3146 = vmatpush1.msra.mxu0 0.0
      %3147 = vmatprep.subr.mxu0 0.0
      %3148 = vmatpush1.msra.mxu0 0.0
      %3149 = vmatprep.subr.mxu0 0.0
      %3150 = vmatpush1.msra.mxu0 0.0
      %3151 = vmatprep.subr.mxu0 0.0
      %3152 = vmatpush1.msra.mxu0 0.0
      %3153 = vmatprep.subr.mxu0 0.0
      %3154 = vmatpush1.msra.mxu0 0.0
      %3155 = vmatprep.subr.mxu0 0.0
      %3156 = vmatpush1.msra.mxu0 0.0
      %3157 = vmatprep.subr.mxu0 0.0
      %3158 = vmatpush1.msra.mxu0 0.0
      %3159 = vmatprep.subr.mxu0 0.0
      %3160 = vmatpush1.msra.mxu0 0.0
      %3161 = vmatprep.subr.mxu0 0.0
      %3162 = vmatpush1.msra.mxu0 0.0
      %3163 = vmatprep.subr.mxu0 0.0
      %3164 = vmatpush1.msra.mxu0 0.0
      %3165 = vmatprep.subr.mxu0 0.0
      %3166 = vmatpush1.msra.mxu0 0.0
      %3167 = vmatprep.subr.mxu0 0.0
      %3168 = vmatpush1.msra.mxu0 0.0
      %3169 = vmatprep.subr.mxu0 0.0
      %3170 = vmatpush1.msra.mxu0 0.0
      %3171 = vmatprep.mubr.f32.mxu0 0.0
      %3172 = vmatmul.mubr.f32.gmra.mrb[0].mxu0 %v3099
      %v3173 = vpop.f32.mrb[0].mxu0
      %v3174 = vadd.f32 0.0, %v3173
      %v3175 = vpop.f32.mrb[0].mxu0
      %3176 = vmatprep.mubr.f32.mxu0 0.0
      %3177 = vmatmul.mubr.f32.gmra.mrb[0].mxu0 %v3102
      %v3178 = vpop.f32.mrb[0].mxu0
      %v3179 = vadd.f32 0.0, %v3178
      %v3180 = vpop.f32.mrb[0].mxu0
      %3181 = vmatprep.mubr.f32.mxu0 0.0
      %3182 = vmatmul.mubr.f32.gmra.mrb[0].mxu0 %v3105
      %v3183 = vpop.f32.mrb[0].mxu0
      %v3184 = vadd.f32 0.0, %v3183
      %v3185 = vpop.f32.mrb[0].mxu0
      %3186 = vdwg.mxu0
      %v3188 = vsel %vm786, %v2860, 0
      %v3191 = vsel %vm786, %v2861, 0
      %v3194 = vsel %vm786, %v2862, 0
      %3196 = vmatprep.subr.mxu0 0.0
      %3197 = vmatpush1.msra.mxu0 %v2627
      %3198 = vmatprep.subr.mxu0 0.0
      %3199 = vmatpush1.msra.mxu0 0.0
      %3200 = vmatprep.subr.mxu0 0.0
      %3201 = vmatpush1.msra.mxu0 0.0
      %3202 = vmatprep.subr.mxu0 0.0
      %3203 = vmatpush1.msra.mxu0 0.0
      %3204 = vmatprep.subr.mxu0 0.0
      %3205 = vmatpush1.msra.mxu0 0.0
      %3206 = vmatprep.subr.mxu0 0.0
      %3207 = vmatpush1.msra.mxu0 0.0
      %3208 = vmatprep.subr.mxu0 0.0
      %3209 = vmatpush1.msra.mxu0 0.0
      %3210 = vmatprep.subr.mxu0 0.0
      %3211 = vmatpush1.msra.mxu0 0.0
      %3212 = vmatprep.subr.mxu0 0.0
      %3213 = vmatpush1.msra.mxu0 0.0
      %3214 = vmatprep.subr.mxu0 0.0
      %3215 = vmatpush1.msra.mxu0 0.0
      %3216 = vmatprep.subr.mxu0 0.0
      %3217 = vmatpush1.msra.mxu0 0.0
      %3218 = vmatprep.subr.mxu0 0.0
      %3219 = vmatpush1.msra.mxu0 0.0
      %3220 = vmatprep.subr.mxu0 0.0
      %3221 = vmatpush1.msra.mxu0 0.0
      %3222 = vmatprep.subr.mxu0 0.0
      %3223 = vmatpush1.msra.mxu0 0.0
      %3224 = vmatprep.subr.mxu0 0.0
      %3225 = vmatpush1.msra.mxu0 0.0
      %3226 = vmatprep.subr.mxu0 0.0
      %3227 = vmatpush1.msra.mxu0 0.0
      %3228 = vmatprep.subr.mxu0 0.0
      %3229 = vmatpush1.msra.mxu0 0.0
      %3230 = vmatprep.subr.mxu0 0.0
      %3231 = vmatpush1.msra.mxu0 0.0
      %3232 = vmatprep.subr.mxu0 0.0
      %3233 = vmatpush1.msra.mxu0 0.0
      %3234 = vmatprep.subr.mxu0 0.0
      %3235 = vmatpush1.msra.mxu0 0.0
      %3236 = vmatprep.subr.mxu0 0.0
      %3237 = vmatpush1.msra.mxu0 0.0
      %3238 = vmatprep.subr.mxu0 0.0
      %3239 = vmatpush1.msra.mxu0 0.0
      %3240 = vmatprep.subr.mxu0 0.0
      %3241 = vmatpush1.msra.mxu0 0.0
      %3242 = vmatprep.subr.mxu0 0.0
      %3243 = vmatpush1.msra.mxu0 0.0
      %3244 = vmatprep.subr.mxu0 0.0
      %3245 = vmatpush1.msra.mxu0 0.0
      %3246 = vmatprep.subr.mxu0 0.0
      %3247 = vmatpush1.msra.mxu0 0.0
      %3248 = vmatprep.subr.mxu0 0.0
      %3249 = vmatpush1.msra.mxu0 0.0
      %3250 = vmatprep.subr.mxu0 0.0
      %3251 = vmatpush1.msra.mxu0 0.0
      %3252 = vmatprep.subr.mxu0 0.0
      %3253 = vmatpush1.msra.mxu0 0.0
      %3254 = vmatprep.subr.mxu0 0.0
      %3255 = vmatpush1.msra.mxu0 0.0
      %3256 = vmatprep.subr.mxu0 0.0
      %3257 = vmatpush1.msra.mxu0 0.0
      %3258 = vmatprep.subr.mxu0 0.0
      %3259 = vmatpush1.msra.mxu0 0.0
      %3260 = vmatprep.mubr.f32.mxu0 0.0
      %3261 = vmatmul.mubr.f32.gmra.mrb[0].mxu0 %v3188
      %v3262 = vpop.f32.mrb[0].mxu0
      %v3263 = vadd.f32 %v3174, %v3262
      %v3264 = vpop.f32.mrb[0].mxu0
      %3265 = vmatprep.mubr.f32.mxu0 0.0
      %3266 = vmatmul.mubr.f32.gmra.mrb[0].mxu0 %v3191
      %v3267 = vpop.f32.mrb[0].mxu0
      %v3268 = vadd.f32 %v3179, %v3267
      %v3269 = vpop.f32.mrb[0].mxu0
      %3270 = vmatprep.mubr.f32.mxu0 0.0
      %3271 = vmatmul.mubr.f32.gmra.mrb[0].mxu0 %v3194
      %v3272 = vpop.f32.mrb[0].mxu0
      %v3273 = vadd.f32 %v3184, %v3272
      %v3274 = vpop.f32.mrb[0].mxu0
      %3275 = vdwg.mxu0
      %3276 = vrot.lane.b32.xlu0 %v2623, 112
      %v3277 = vpop.permute.xlu0 %3276
      %3278 = vrot.lane.b32.xlu0 %v2624, 112
      %v3279 = vpop.permute.xlu0 %3278
      %3280 = vrot.lane.b32.xlu0 %v2625, 112
      %v3281 = vpop.permute.xlu0 %3280
      %3282 = vrot.lane.b32.xlu0 %v2623, 80
      %v3283 = vpop.permute.xlu0 %3282
      %3284 = vrot.lane.b32.xlu0 %v2624, 80
      %v3285 = vpop.permute.xlu0 %3284
      %3286 = vrot.lane.b32.xlu0 %v2625, 80
      %v3287 = vpop.permute.xlu0 %3286
      %v3288 = vsel %vm786, %v3277, 0
      %v3290 = vsel %vm786, %v3279, 0
      %v3292 = vsel %vm786, %v3281, 0
      %v3294 = vsel %vm786, %v3283, 0
      %v3296 = vsel %vm786, %v3285, 0
      %v3298 = vsel %vm786, %v3287, 0
      %3300 = vmatprep.subr.mxu0 0.0
      %3301 = vmatpush1.xpose.msra.mxu0 %v3294
      %3302 = vmatprep.subr.mxu0 0.0
      %3303 = vmatpush1.xpose.msra.mxu0 %v3296
      %3304 = vmatprep.subr.mxu0 0.0
      %3305 = vmatpush1.xpose.msra.mxu0 %v3298
      %3306 = vmatprep.subr.mxu0 0.0
      %3307 = vmatpush1.xpose.msra.mxu0 0.0
      %3308 = vmatprep.subr.mxu0 0.0
      %3309 = vmatpush1.xpose.msra.mxu0 0.0
      %3310 = vmatprep.subr.mxu0 0.0
      %3311 = vmatpush1.xpose.msra.mxu0 0.0
      %3312 = vmatprep.subr.mxu0 0.0
      %3313 = vmatpush1.xpose.msra.mxu0 0.0
      %3314 = vmatprep.subr.mxu0 0.0
      %3315 = vmatpush1.xpose.msra.mxu0 0.0
      %3316 = vmatprep.subr.mxu0 0.0
      %3317 = vmatpush1.xpose.msra.mxu0 0.0
      %3318 = vmatprep.subr.mxu0 0.0
      %3319 = vmatpush1.xpose.msra.mxu0 0.0
      %3320 = vmatprep.subr.mxu0 0.0
      %3321 = vmatpush1.xpose.msra.mxu0 0.0
      %3322 = vmatprep.subr.mxu0 0.0
      %3323 = vmatpush1.xpose.msra.mxu0 0.0
      %3324 = vmatprep.subr.mxu0 0.0
      %3325 = vmatpush1.xpose.msra.mxu0 0.0
      %3326 = vmatprep.subr.mxu0 0.0
      %3327 = vmatpush1.xpose.msra.mxu0 0.0
      %3328 = vmatprep.subr.mxu0 0.0
      %3329 = vmatpush1.xpose.msra.mxu0 0.0
      %3330 = vmatprep.subr.mxu0 0.0
      %3331 = vmatpush1.xpose.msra.mxu0 0.0
      %3332 = vmatprep.subr.mxu0 0.0
      %3333 = vmatpush1.xpose.msra.mxu0 0.0
      %3334 = vmatprep.subr.mxu0 0.0
      %3335 = vmatpush1.xpose.msra.mxu0 0.0
      %3336 = vmatprep.subr.mxu0 0.0
      %3337 = vmatpush1.xpose.msra.mxu0 0.0
      %3338 = vmatprep.subr.mxu0 0.0
      %3339 = vmatpush1.xpose.msra.mxu0 0.0
      %3340 = vmatprep.subr.mxu0 0.0
      %3341 = vmatpush1.xpose.msra.mxu0 0.0
      %3342 = vmatprep.subr.mxu0 0.0
      %3343 = vmatpush1.xpose.msra.mxu0 0.0
      %3344 = vmatprep.subr.mxu0 0.0
      %3345 = vmatpush1.xpose.msra.mxu0 0.0
      %3346 = vmatprep.subr.mxu0 0.0
      %3347 = vmatpush1.xpose.msra.mxu0 0.0
      %3348 = vmatprep.subr.mxu0 0.0
      %3349 = vmatpush1.xpose.msra.mxu0 0.0
      %3350 = vmatprep.subr.mxu0 0.0
      %3351 = vmatpush1.xpose.msra.mxu0 0.0
      %3352 = vmatprep.subr.mxu0 0.0
      %3353 = vmatpush1.xpose.msra.mxu0 0.0
      %3354 = vmatprep.subr.mxu0 0.0
      %3355 = vmatpush1.xpose.msra.mxu0 0.0
      %3356 = vmatprep.subr.mxu0 0.0
      %3357 = vmatpush1.xpose.msra.mxu0 0.0
      %3358 = vmatprep.subr.mxu0 0.0
      %3359 = vmatpush1.xpose.msra.mxu0 0.0
      %3360 = vmatprep.subr.mxu0 0.0
      %3361 = vmatpush1.xpose.msra.mxu0 0.0
      %3362 = vmatprep.subr.mxu0 0.0
      %3363 = vmatpush1.xpose.msra.mxu0 0.0
      %3364 = vmatprep.mubr.f32.mxu0 0.0
      %3365 = vmatmul.mubr.f32.gmra.mrb[0].mxu0 %v3288
      %v3366 = vpop.f32.mrb[0].mxu0
      %v3367 = vadd.f32 %v775, %v3366
      %v3368 = vpop.f32.mrb[0].mxu0
      %3369 = vmatprep.mubr.f32.mxu0 0.0
      %3370 = vmatmul.mubr.f32.gmra.mrb[0].mxu0 %v3290
      %v3371 = vpop.f32.mrb[0].mxu0
      %v3372 = vadd.f32 %v775, %v3371
      %v3373 = vpop.f32.mrb[0].mxu0
      %3374 = vmatprep.mubr.f32.mxu0 0.0
      %3375 = vmatmul.mubr.f32.gmra.mrb[0].mxu0 %v3292
      %v3376 = vpop.f32.mrb[0].mxu0
      %v3377 = vadd.f32 %v775, %v3376
      %v3378 = vpop.f32.mrb[0].mxu0
      %3379 = vdwg.mxu0
      %v3380 = vsel %vm879, %v3367, -inf
      %3381 = vmax.xlane.f32.xlu0 %v3380
      %v3382 = vpop.xlane.xlu0 %3381
      %v3383 = vsel %vm879, %v3372, -inf
      %3384 = vmax.xlane.f32.xlu0 %v3383
      %v3385 = vpop.xlane.xlu0 %3384
      %v3386 = vsel %vm879, %v3377, -inf
      %3387 = vmax.xlane.f32.xlu0 %v3386
      %v3388 = vpop.xlane.xlu0 %3387
      %v3389 = vsub.f32 %v3367, %v3382
      %v3390 = vsub.f32 %v3372, %v3385
      %v3391 = vsub.f32 %v3377, %v3388
      %v3392 = vmul.f32 %v3389, 1.442695
      %v3393 = vpow.pop %v3392
      %v3394 = vmul.f32 %v3390, 1.442695
      %v3395 = vpow.pop %v3394
      %v3396 = vmul.f32 %v3391, 1.442695
      %v3397 = vpow.pop %v3396
      %v3398 = vsel %vm879, %v3393, 0.0
      %3399 = vadd.xlane.f32.xlu0 %v3398
      %v3400 = vpop.xlane.xlu0 %3399
      %v3401 = vsel %vm879, %v3395, 0.0
      %3402 = vadd.xlane.f32.xlu0 %v3401
      %v3403 = vpop.xlane.xlu0 %3402
      %v3404 = vsel %vm879, %v3397, 0.0
      %3405 = vadd.xlane.f32.xlu0 %v3404
      %v3406 = vpop.xlane.xlu0 %3405
      %3407 = vrot.lane.b32.xlu0 %v2623, 48
      %v3408 = vpop.permute.xlu0 %3407
      %3409 = vrot.lane.b32.xlu0 %v2624, 48
      %v3410 = vpop.permute.xlu0 %3409
      %3411 = vrot.lane.b32.xlu0 %v2625, 48
      %v3412 = vpop.permute.xlu0 %3411
      %v3417 = vsel %vm879, %v3393, 0
      %v3420 = vsel %vm879, %v3395, 0
      %v3423 = vsel %vm879, %v3397, 0
      %3425 = vmatprep.subr.mxu0 0.0
      %3426 = vmatpush1.msra.mxu0 %v3408
      %3427 = vmatprep.subr.mxu0 0.0
      %3428 = vmatpush1.msra.mxu0 %v3410
      %3429 = vmatprep.subr.mxu0 0.0
      %3430 = vmatpush1.msra.mxu0 %v3412
      %3431 = vmatprep.subr.mxu0 0.0
      %3432 = vmatpush1.msra.mxu0 0.0
      %3433 = vmatprep.subr.mxu0 0.0
      %3434 = vmatpush1.msra.mxu0 0.0
      %3435 = vmatprep.subr.mxu0 0.0
      %3436 = vmatpush1.msra.mxu0 0.0
      %3437 = vmatprep.subr.mxu0 0.0
      %3438 = vmatpush1.msra.mxu0 0.0
      %3439 = vmatprep.subr.mxu0 0.0
      %3440 = vmatpush1.msra.mxu0 0.0
      %3441 = vmatprep.subr.mxu0 0.0
      %3442 = vmatpush1.msra.mxu0 0.0
      %3443 = vmatprep.subr.mxu0 0.0
      %3444 = vmatpush1.msra.mxu0 0.0
      %3445 = vmatprep.subr.mxu0 0.0
      %3446 = vmatpush1.msra.mxu0 0.0
      %3447 = vmatprep.subr.mxu0 0.0
      %3448 = vmatpush1.msra.mxu0 0.0
      %3449 = vmatprep.subr.mxu0 0.0
      %3450 = vmatpush1.msra.mxu0 0.0
      %3451 = vmatprep.subr.mxu0 0.0
      %3452 = vmatpush1.msra.mxu0 0.0
      %3453 = vmatprep.subr.mxu0 0.0
      %3454 = vmatpush1.msra.mxu0 0.0
      %3455 = vmatprep.subr.mxu0 0.0
      %3456 = vmatpush1.msra.mxu0 0.0
      %3457 = vmatprep.subr.mxu0 0.0
      %3458 = vmatpush1.msra.mxu0 0.0
      %3459 = vmatprep.subr.mxu0 0.0
      %3460 = vmatpush1.msra.mxu0 0.0
      %3461 = vmatprep.subr.mxu0 0.0
      %3462 = vmatpush1.msra.mxu0 0.0
      %3463 = vmatprep.subr.mxu0 0.0
      %3464 = vmatpush1.msra.mxu0 0.0
      %3465 = vmatprep.subr.mxu0 0.0
      %3466 = vmatpush1.msra.mxu0 0.0
      %3467 = vmatprep.subr.mxu0 0.0
      %3468 = vmatpush1.msra.mxu0 0.0
      %3469 = vmatprep.subr.mxu0 0.0
      %3470 = vmatpush1.msra.mxu0 0.0
      %3471 = vmatprep.subr.mxu0 0.0
      %3472 = vmatpush1.msra.mxu0 0.0
      %3473 = vmatprep.subr.mxu0 0.0
      %3474 = vmatpush1.msra.mxu0 0.0
      %3475 = vmatprep.subr.mxu0 0.0
      %3476 = vmatpush1.msra.mxu0 0.0
      %3477 = vmatprep.subr.mxu0 0.0
      %3478 = vmatpush1.msra.mxu0 0.0
      %3479 = vmatprep.subr.mxu0 0.0
      %3480 = vmatpush1.msra.mxu0 0.0
      %3481 = vmatprep.subr.mxu0 0.0
      %3482 = vmatpush1.msra.mxu0 0.0
      %3483 = vmatprep.subr.mxu0 0.0
      %3484 = vmatpush1.msra.mxu0 0.0
      %3485 = vmatprep.subr.mxu0 0.0
      %3486 = vmatpush1.msra.mxu0 0.0
      %3487 = vmatprep.subr.mxu0 0.0
      %3488 = vmatpush1.msra.mxu0 0.0
      %3489 = vmatprep.mubr.f32.mxu0 0.0
      %3490 = vmatmul.mubr.f32.gmra.mrb[0].mxu0 %v3417
      %v3491 = vpop.f32.mrb[0].mxu0
      %v3492 = vadd.f32 0.0, %v3491
      %v3493 = vpop.f32.mrb[0].mxu0
      %3494 = vmatprep.mubr.f32.mxu0 0.0
      %3495 = vmatmul.mubr.f32.gmra.mrb[0].mxu0 %v3420
      %v3496 = vpop.f32.mrb[0].mxu0
      %v3497 = vadd.f32 0.0, %v3496
      %v3498 = vpop.f32.mrb[0].mxu0
      %3499 = vmatprep.mubr.f32.mxu0 0.0
      %3500 = vmatmul.mubr.f32.gmra.mrb[0].mxu0 %v3423
      %v3501 = vpop.f32.mrb[0].mxu0
      %v3502 = vadd.f32 0.0, %v3501
      %v3503 = vpop.f32.mrb[0].mxu0
      %3504 = vdwg.mxu0
      %v3505 = vrcp.pop %v3400
      %v3506 = vrcp.pop %v3403
      %v3507 = vrcp.pop %v3406
      %v3508 = vmul.f32 %v3492, %v3505
      %v3509 = vmul.f32 %v3497, %v3506
      %v3510 = vmul.f32 %v3502, %v3507
      %v3512 = vsel %vm786, %v3508, 0
      %v3515 = vsel %vm786, %v3509, 0
      %v3518 = vsel %vm786, %v3510, 0
      %3520 = vmatprep.subr.mxu0 0.0
      %3521 = vmatpush1.msra.mxu0 %v2629
      %3522 = vmatprep.subr.mxu0 0.0
      %3523 = vmatpush1.msra.mxu0 0.0
      %3524 = vmatprep.subr.mxu0 0.0
      %3525 = vmatpush1.msra.mxu0 0.0
      %3526 = vmatprep.subr.mxu0 0.0
      %3527 = vmatpush1.msra.mxu0 0.0
      %3528 = vmatprep.subr.mxu0 0.0
      %3529 = vmatpush1.msra.mxu0 0.0
      %3530 = vmatprep.subr.mxu0 0.0
      %3531 = vmatpush1.msra.mxu0 0.0
      %3532 = vmatprep.subr.mxu0 0.0
      %3533 = vmatpush1.msra.mxu0 0.0
      %3534 = vmatprep.subr.mxu0 0.0
      %3535 = vmatpush1.msra.mxu0 0.0
      %3536 = vmatprep.subr.mxu0 0.0
      %3537 = vmatpush1.msra.mxu0 0.0
      %3538 = vmatprep.subr.mxu0 0.0
      %3539 = vmatpush1.msra.mxu0 0.0
      %3540 = vmatprep.subr.mxu0 0.0
      %3541 = vmatpush1.msra.mxu0 0.0
      %3542 = vmatprep.subr.mxu0 0.0
      %3543 = vmatpush1.msra.mxu0 0.0
      %3544 = vmatprep.subr.mxu0 0.0
      %3545 = vmatpush1.msra.mxu0 0.0
      %3546 = vmatprep.subr.mxu0 0.0
      %3547 = vmatpush1.msra.mxu0 0.0
      %3548 = vmatprep.subr.mxu0 0.0
      %3549 = vmatpush1.msra.mxu0 0.0
      %3550 = vmatprep.subr.mxu0 0.0
      %3551 = vmatpush1.msra.mxu0 0.0
      %3552 = vmatprep.subr.mxu0 0.0
      %3553 = vmatpush1.msra.mxu0 0.0
      %3554 = vmatprep.subr.mxu0 0.0
      %3555 = vmatpush1.msra.mxu0 0.0
      %3556 = vmatprep.subr.mxu0 0.0
      %3557 = vmatpush1.msra.mxu0 0.0
      %3558 = vmatprep.subr.mxu0 0.0
      %3559 = vmatpush1.msra.mxu0 0.0
      %3560 = vmatprep.subr.mxu0 0.0
      %3561 = vmatpush1.msra.mxu0 0.0
      %3562 = vmatprep.subr.mxu0 0.0
      %3563 = vmatpush1.msra.mxu0 0.0
      %3564 = vmatprep.subr.mxu0 0.0
      %3565 = vmatpush1.msra.mxu0 0.0
      %3566 = vmatprep.subr.mxu0 0.0
      %3567 = vmatpush1.msra.mxu0 0.0
      %3568 = vmatprep.subr.mxu0 0.0
      %3569 = vmatpush1.msra.mxu0 0.0
      %3570 = vmatprep.subr.mxu0 0.0
      %3571 = vmatpush1.msra.mxu0 0.0
      %3572 = vmatprep.subr.mxu0 0.0
      %3573 = vmatpush1.msra.mxu0 0.0
      %3574 = vmatprep.subr.mxu0 0.0
      %3575 = vmatpush1.msra.mxu0 0.0
      %3576 = vmatprep.subr.mxu0 0.0
      %3577 = vmatpush1.msra.mxu0 0.0
      %3578 = vmatprep.subr.mxu0 0.0
      %3579 = vmatpush1.msra.mxu0 0.0
      %3580 = vmatprep.subr.mxu0 0.0
      %3581 = vmatpush1.msra.mxu0 0.0
      %3582 = vmatprep.subr.mxu0 0.0
      %3583 = vmatpush1.msra.mxu0 0.0
      %3584 = vmatprep.mubr.f32.mxu0 0.0
      %3585 = vmatmul.mubr.f32.gmra.mrb[0].mxu0 %v3512
      %v3586 = vpop.f32.mrb[0].mxu0
      %v3587 = vadd.f32 0.0, %v3586
      %v3588 = vpop.f32.mrb[0].mxu0
      %3589 = vmatprep.mubr.f32.mxu0 0.0
      %3590 = vmatmul.mubr.f32.gmra.mrb[0].mxu0 %v3515
      %v3591 = vpop.f32.mrb[0].mxu0
      %v3592 = vadd.f32 0.0, %v3591
      %v3593 = vpop.f32.mrb[0].mxu0
      %3594 = vmatprep.mubr.f32.mxu0 0.0
      %3595 = vmatmul.mubr.f32.gmra.mrb[0].mxu0 %v3518
      %v3596 = vpop.f32.mrb[0].mxu0
      %v3597 = vadd.f32 0.0, %v3596
      %v3598 = vpop.f32.mrb[0].mxu0
      %3599 = vdwg.mxu0
      %v3600 = vadd.f32 %v3263, %v3587
      %v3601 = vadd.f32 %v3268, %v3592
      %v3602 = vadd.f32 %v3273, %v3597
      %3603 = vrot.lane.b32.xlu0 %v2623, 104
      %v3604 = vpop.permute.xlu0 %3603
      %3605 = vrot.lane.b32.xlu0 %v2624, 104
      %v3606 = vpop.permute.xlu0 %3605
      %3607 = vrot.lane.b32.xlu0 %v2625, 104
      %v3608 = vpop.permute.xlu0 %3607
      %3609 = vrot.lane.b32.xlu0 %v2623, 72
      %v3610 = vpop.permute.xlu0 %3609
      %3611 = vrot.lane.b32.xlu0 %v2624, 72
      %v3612 = vpop.permute.xlu0 %3611
      %3613 = vrot.lane.b32.xlu0 %v2625, 72
      %v3614 = vpop.permute.xlu0 %3613
      %v3615 = vsel %vm786, %v3604, 0
      %v3617 = vsel %vm786, %v3606, 0
      %v3619 = vsel %vm786, %v3608, 0
      %v3621 = vsel %vm786, %v3610, 0
      %v3623 = vsel %vm786, %v3612, 0
      %v3625 = vsel %vm786, %v3614, 0
      %3627 = vmatprep.subr.mxu0 0.0
      %3628 = vmatpush1.xpose.msra.mxu0 %v3621
      %3629 = vmatprep.subr.mxu0 0.0
      %3630 = vmatpush1.xpose.msra.mxu0 %v3623
      %3631 = vmatprep.subr.mxu0 0.0
      %3632 = vmatpush1.xpose.msra.mxu0 %v3625
      %3633 = vmatprep.subr.mxu0 0.0
      %3634 = vmatpush1.xpose.msra.mxu0 0.0
      %3635 = vmatprep.subr.mxu0 0.0
      %3636 = vmatpush1.xpose.msra.mxu0 0.0
      %3637 = vmatprep.subr.mxu0 0.0
      %3638 = vmatpush1.xpose.msra.mxu0 0.0
      %3639 = vmatprep.subr.mxu0 0.0
      %3640 = vmatpush1.xpose.msra.mxu0 0.0
      %3641 = vmatprep.subr.mxu0 0.0
      %3642 = vmatpush1.xpose.msra.mxu0 0.0
      %3643 = vmatprep.subr.mxu0 0.0
      %3644 = vmatpush1.xpose.msra.mxu0 0.0
      %3645 = vmatprep.subr.mxu0 0.0
      %3646 = vmatpush1.xpose.msra.mxu0 0.0
      %3647 = vmatprep.subr.mxu0 0.0
      %3648 = vmatpush1.xpose.msra.mxu0 0.0
      %3649 = vmatprep.subr.mxu0 0.0
      %3650 = vmatpush1.xpose.msra.mxu0 0.0
      %3651 = vmatprep.subr.mxu0 0.0
      %3652 = vmatpush1.xpose.msra.mxu0 0.0
      %3653 = vmatprep.subr.mxu0 0.0
      %3654 = vmatpush1.xpose.msra.mxu0 0.0
      %3655 = vmatprep.subr.mxu0 0.0
      %3656 = vmatpush1.xpose.msra.mxu0 0.0
      %3657 = vmatprep.subr.mxu0 0.0
      %3658 = vmatpush1.xpose.msra.mxu0 0.0
      %3659 = vmatprep.subr.mxu0 0.0
      %3660 = vmatpush1.xpose.msra.mxu0 0.0
      %3661 = vmatprep.subr.mxu0 0.0
      %3662 = vmatpush1.xpose.msra.mxu0 0.0
      %3663 = vmatprep.subr.mxu0 0.0
      %3664 = vmatpush1.xpose.msra.mxu0 0.0
      %3665 = vmatprep.subr.mxu0 0.0
      %3666 = vmatpush1.xpose.msra.mxu0 0.0
      %3667 = vmatprep.subr.mxu0 0.0
      %3668 = vmatpush1.xpose.msra.mxu0 0.0
      %3669 = vmatprep.subr.mxu0 0.0
      %3670 = vmatpush1.xpose.msra.mxu0 0.0
      %3671 = vmatprep.subr.mxu0 0.0
      %3672 = vmatpush1.xpose.msra.mxu0 0.0
      %3673 = vmatprep.subr.mxu0 0.0
      %3674 = vmatpush1.xpose.msra.mxu0 0.0
      %3675 = vmatprep.subr.mxu0 0.0
      %3676 = vmatpush1.xpose.msra.mxu0 0.0
      %3677 = vmatprep.subr.mxu0 0.0
      %3678 = vmatpush1.xpose.msra.mxu0 0.0
      %3679 = vmatprep.subr.mxu0 0.0
      %3680 = vmatpush1.xpose.msra.mxu0 0.0
      %3681 = vmatprep.subr.mxu0 0.0
      %3682 = vmatpush1.xpose.msra.mxu0 0.0
      %3683 = vmatprep.subr.mxu0 0.0
      %3684 = vmatpush1.xpose.msra.mxu0 0.0
      %3685 = vmatprep.subr.mxu0 0.0
      %3686 = vmatpush1.xpose.msra.mxu0 0.0
      %3687 = vmatprep.subr.mxu0 0.0
      %3688 = vmatpush1.xpose.msra.mxu0 0.0
      %3689 = vmatprep.subr.mxu0 0.0
      %3690 = vmatpush1.xpose.msra.mxu0 0.0
      %3691 = vmatprep.mubr.f32.mxu0 0.0
      %3692 = vmatmul.mubr.f32.gmra.mrb[0].mxu0 %v3615
      %v3693 = vpop.f32.mrb[0].mxu0
      %v3694 = vadd.f32 %v775, %v3693
      %v3695 = vpop.f32.mrb[0].mxu0
      %3696 = vmatprep.mubr.f32.mxu0 0.0
      %3697 = vmatmul.mubr.f32.gmra.mrb[0].mxu0 %v3617
      %v3698 = vpop.f32.mrb[0].mxu0
      %v3699 = vadd.f32 %v775, %v3698
      %v3700 = vpop.f32.mrb[0].mxu0
      %3701 = vmatprep.mubr.f32.mxu0 0.0
      %3702 = vmatmul.mubr.f32.gmra.mrb[0].mxu0 %v3619
      %v3703 = vpop.f32.mrb[0].mxu0
      %v3704 = vadd.f32 %v775, %v3703
      %v3705 = vpop.f32.mrb[0].mxu0
      %3706 = vdwg.mxu0
      %v3707 = vsel %vm879, %v3694, -inf
      %3708 = vmax.xlane.f32.xlu0 %v3707
      %v3709 = vpop.xlane.xlu0 %3708
      %v3710 = vsel %vm879, %v3699, -inf
      %3711 = vmax.xlane.f32.xlu0 %v3710
      %v3712 = vpop.xlane.xlu0 %3711
      %v3713 = vsel %vm879, %v3704, -inf
      %3714 = vmax.xlane.f32.xlu0 %v3713
      %v3715 = vpop.xlane.xlu0 %3714
      %v3716 = vsub.f32 %v3694, %v3709
      %v3717 = vsub.f32 %v3699, %v3712
      %v3718 = vsub.f32 %v3704, %v3715
      %v3719 = vmul.f32 %v3716, 1.442695
      %v3720 = vpow.pop %v3719
      %v3721 = vmul.f32 %v3717, 1.442695
      %v3722 = vpow.pop %v3721
      %v3723 = vmul.f32 %v3718, 1.442695
      %v3724 = vpow.pop %v3723
      %v3725 = vsel %vm879, %v3720, 0.0
      %3726 = vadd.xlane.f32.xlu0 %v3725
      %v3727 = vpop.xlane.xlu0 %3726
      %v3728 = vsel %vm879, %v3722, 0.0
      %3729 = vadd.xlane.f32.xlu0 %v3728
      %v3730 = vpop.xlane.xlu0 %3729
      %v3731 = vsel %vm879, %v3724, 0.0
      %3732 = vadd.xlane.f32.xlu0 %v3731
      %v3733 = vpop.xlane.xlu0 %3732
      %3734 = vrot.lane.b32.xlu0 %v2623, 40
      %v3735 = vpop.permute.xlu0 %3734
      %3736 = vrot.lane.b32.xlu0 %v2624, 40
      %v3737 = vpop.permute.xlu0 %3736
      %3738 = vrot.lane.b32.xlu0 %v2625, 40
      %v3739 = vpop.permute.xlu0 %3738
      %v3744 = vsel %vm879, %v3720, 0
      %v3747 = vsel %vm879, %v3722, 0
      %v3750 = vsel %vm879, %v3724, 0
      %3752 = vmatprep.subr.mxu0 0.0
      %3753 = vmatpush1.msra.mxu0 %v3735
      %3754 = vmatprep.subr.mxu0 0.0
      %3755 = vmatpush1.msra.mxu0 %v3737
      %3756 = vmatprep.subr.mxu0 0.0
      %3757 = vmatpush1.msra.mxu0 %v3739
      %3758 = vmatprep.subr.mxu0 0.0
      %3759 = vmatpush1.msra.mxu0 0.0
      %3760 = vmatprep.subr.mxu0 0.0
      %3761 = vmatpush1.msra.mxu0 0.0
      %3762 = vmatprep.subr.mxu0 0.0
      %3763 = vmatpush1.msra.mxu0 0.0
      %3764 = vmatprep.subr.mxu0 0.0
      %3765 = vmatpush1.msra.mxu0 0.0
      %3766 = vmatprep.subr.mxu0 0.0
      %3767 = vmatpush1.msra.mxu0 0.0
      %3768 = vmatprep.subr.mxu0 0.0
      %3769 = vmatpush1.msra.mxu0 0.0
      %3770 = vmatprep.subr.mxu0 0.0
      %3771 = vmatpush1.msra.mxu0 0.0
      %3772 = vmatprep.subr.mxu0 0.0
      %3773 = vmatpush1.msra.mxu0 0.0
      %3774 = vmatprep.subr.mxu0 0.0
      %3775 = vmatpush1.msra.mxu0 0.0
      %3776 = vmatprep.subr.mxu0 0.0
      %3777 = vmatpush1.msra.mxu0 0.0
      %3778 = vmatprep.subr.mxu0 0.0
      %3779 = vmatpush1.msra.mxu0 0.0
      %3780 = vmatprep.subr.mxu0 0.0
      %3781 = vmatpush1.msra.mxu0 0.0
      %3782 = vmatprep.subr.mxu0 0.0
      %3783 = vmatpush1.msra.mxu0 0.0
      %3784 = vmatprep.subr.mxu0 0.0
      %3785 = vmatpush1.msra.mxu0 0.0
      %3786 = vmatprep.subr.mxu0 0.0
      %3787 = vmatpush1.msra.mxu0 0.0
      %3788 = vmatprep.subr.mxu0 0.0
      %3789 = vmatpush1.msra.mxu0 0.0
      %3790 = vmatprep.subr.mxu0 0.0
      %3791 = vmatpush1.msra.mxu0 0.0
      %3792 = vmatprep.subr.mxu0 0.0
      %3793 = vmatpush1.msra.mxu0 0.0
      %3794 = vmatprep.subr.mxu0 0.0
      %3795 = vmatpush1.msra.mxu0 0.0
      %3796 = vmatprep.subr.mxu0 0.0
      %3797 = vmatpush1.msra.mxu0 0.0
      %3798 = vmatprep.subr.mxu0 0.0
      %3799 = vmatpush1.msra.mxu0 0.0
      %3800 = vmatprep.subr.mxu0 0.0
      %3801 = vmatpush1.msra.mxu0 0.0
      %3802 = vmatprep.subr.mxu0 0.0
      %3803 = vmatpush1.msra.mxu0 0.0
      %3804 = vmatprep.subr.mxu0 0.0
      %3805 = vmatpush1.msra.mxu0 0.0
      %3806 = vmatprep.subr.mxu0 0.0
      %3807 = vmatpush1.msra.mxu0 0.0
      %3808 = vmatprep.subr.mxu0 0.0
      %3809 = vmatpush1.msra.mxu0 0.0
      %3810 = vmatprep.subr.mxu0 0.0
      %3811 = vmatpush1.msra.mxu0 0.0
      %3812 = vmatprep.subr.mxu0 0.0
      %3813 = vmatpush1.msra.mxu0 0.0
      %3814 = vmatprep.subr.mxu0 0.0
      %3815 = vmatpush1.msra.mxu0 0.0
      %3816 = vmatprep.mubr.f32.mxu0 0.0
      %3817 = vmatmul.mubr.f32.gmra.mrb[0].mxu0 %v3744
      %v3818 = vpop.f32.mrb[0].mxu0
      %v3819 = vadd.f32 0.0, %v3818
      %v3820 = vpop.f32.mrb[0].mxu0
      %3821 = vmatprep.mubr.f32.mxu0 0.0
      %3822 = vmatmul.mubr.f32.gmra.mrb[0].mxu0 %v3747
      %v3823 = vpop.f32.mrb[0].mxu0
      %v3824 = vadd.f32 0.0, %v3823
      %v3825 = vpop.f32.mrb[0].mxu0
      %3826 = vmatprep.mubr.f32.mxu0 0.0
      %3827 = vmatmul.mubr.f32.gmra.mrb[0].mxu0 %v3750
      %v3828 = vpop.f32.mrb[0].mxu0
      %v3829 = vadd.f32 0.0, %v3828
      %v3830 = vpop.f32.mrb[0].mxu0
      %3831 = vdwg.mxu0
      %v3832 = vrcp.pop %v3727
      %v3833 = vrcp.pop %v3730
      %v3834 = vrcp.pop %v3733
      %v3835 = vmul.f32 %v3819, %v3832
      %v3836 = vmul.f32 %v3824, %v3833
      %v3837 = vmul.f32 %v3829, %v3834
      %v3839 = vsel %vm786, %v3835, 0
      %v3842 = vsel %vm786, %v3836, 0
      %v3845 = vsel %vm786, %v3837, 0
      %3847 = vmatprep.subr.mxu0 0.0
      %3848 = vmatpush1.msra.mxu0 %v2630
      %3849 = vmatprep.subr.mxu0 0.0
      %3850 = vmatpush1.msra.mxu0 0.0
      %3851 = vmatprep.subr.mxu0 0.0
      %3852 = vmatpush1.msra.mxu0 0.0
      %3853 = vmatprep.subr.mxu0 0.0
      %3854 = vmatpush1.msra.mxu0 0.0
      %3855 = vmatprep.subr.mxu0 0.0
      %3856 = vmatpush1.msra.mxu0 0.0
      %3857 = vmatprep.subr.mxu0 0.0
      %3858 = vmatpush1.msra.mxu0 0.0
      %3859 = vmatprep.subr.mxu0 0.0
      %3860 = vmatpush1.msra.mxu0 0.0
      %3861 = vmatprep.subr.mxu0 0.0
      %3862 = vmatpush1.msra.mxu0 0.0
      %3863 = vmatprep.subr.mxu0 0.0
      %3864 = vmatpush1.msra.mxu0 0.0
      %3865 = vmatprep.subr.mxu0 0.0
      %3866 = vmatpush1.msra.mxu0 0.0
      %3867 = vmatprep.subr.mxu0 0.0
      %3868 = vmatpush1.msra.mxu0 0.0
      %3869 = vmatprep.subr.mxu0 0.0
      %3870 = vmatpush1.msra.mxu0 0.0
      %3871 = vmatprep.subr.mxu0 0.0
      %3872 = vmatpush1.msra.mxu0 0.0
      %3873 = vmatprep.subr.mxu0 0.0
      %3874 = vmatpush1.msra.mxu0 0.0
      %3875 = vmatprep.subr.mxu0 0.0
      %3876 = vmatpush1.msra.mxu0 0.0
      %3877 = vmatprep.subr.mxu0 0.0
      %3878 = vmatpush1.msra.mxu0 0.0
      %3879 = vmatprep.subr.mxu0 0.0
      %3880 = vmatpush1.msra.mxu0 0.0
      %3881 = vmatprep.subr.mxu0 0.0
      %3882 = vmatpush1.msra.mxu0 0.0
      %3883 = vmatprep.subr.mxu0 0.0
      %3884 = vmatpush1.msra.mxu0 0.0
      %3885 = vmatprep.subr.mxu0 0.0
      %3886 = vmatpush1.msra.mxu0 0.0
      %3887 = vmatprep.subr.mxu0 0.0
      %3888 = vmatpush1.msra.mxu0 0.0
      %3889 = vmatprep.subr.mxu0 0.0
      %3890 = vmatpush1.msra.mxu0 0.0
      %3891 = vmatprep.subr.mxu0 0.0
      %3892 = vmatpush1.msra.mxu0 0.0
      %3893 = vmatprep.subr.mxu0 0.0
      %3894 = vmatpush1.msra.mxu0 0.0
      %3895 = vmatprep.subr.mxu0 0.0
      %3896 = vmatpush1.msra.mxu0 0.0
      %3897 = vmatprep.subr.mxu0 0.0
      %3898 = vmatpush1.msra.mxu0 0.0
      %3899 = vmatprep.subr.mxu0 0.0
      %3900 = vmatpush1.msra.mxu0 0.0
      %3901 = vmatprep.subr.mxu0 0.0
      %3902 = vmatpush1.msra.mxu0 0.0
      %3903 = vmatprep.subr.mxu0 0.0
      %3904 = vmatpush1.msra.mxu0 0.0
      %3905 = vmatprep.subr.mxu0 0.0
      %3906 = vmatpush1.msra.mxu0 0.0
      %3907 = vmatprep.subr.mxu0 0.0
      %3908 = vmatpush1.msra.mxu0 0.0
      %3909 = vmatprep.subr.mxu0 0.0
      %3910 = vmatpush1.msra.mxu0 0.0
      %3911 = vmatprep.mubr.f32.mxu0 0.0
      %3912 = vmatmul.mubr.f32.gmra.mrb[0].mxu0 %v3839
      %v3913 = vpop.f32.mrb[0].mxu0
      %v3914 = vadd.f32 0.0, %v3913
      %v3915 = vpop.f32.mrb[0].mxu0
      %3916 = vmatprep.mubr.f32.mxu0 0.0
      %3917 = vmatmul.mubr.f32.gmra.mrb[0].mxu0 %v3842
      %v3918 = vpop.f32.mrb[0].mxu0
      %v3919 = vadd.f32 0.0, %v3918
      %v3920 = vpop.f32.mrb[0].mxu0
      %3921 = vmatprep.mubr.f32.mxu0 0.0
      %3922 = vmatmul.mubr.f32.gmra.mrb[0].mxu0 %v3845
      %v3923 = vpop.f32.mrb[0].mxu0
      %v3924 = vadd.f32 0.0, %v3923
      %v3925 = vpop.f32.mrb[0].mxu0
      %3926 = vdwg.mxu0
      %v3927 = vadd.f32 %v3600, %v3914
      %v3928 = vadd.f32 %v3601, %v3919
      %v3929 = vadd.f32 %v3602, %v3924
      %s3930 = scalar_lea.vmem %s7, 1
      %v3931 = vld [vmem:[%s3930] sm:$0x1]
      %v3933 = vlaneseq
      %v3934 = vshrl.u32 %v3933, 7
      %v3935 = vsub.s32 0, %v3934
      %v3936 = vrot.slane %v3931, %v3935
      %v3938 = vadd.f32 %v3927, %v3936
      %v3939 = vadd.f32 %v3928, %v3936
      %v3940 = vadd.f32 %v3929, %v3936
      %v3941 = vadd.f32 %v2418, %v3938
      %v3942 = vadd.f32 %v2419, %v3939
      %v3943 = vadd.f32 %v2420, %v3940
      %s3944 = scalar_lea.vmem %s12, 1
      %v3945 = vld [vmem:[%s3944] sm:$0x1]
      %s3946 = scalar_lea.vmem %s13, 1
      %v3947 = vld [vmem:[%s3946] sm:$0x1]
      %3948 = vadd.xlane.f32.xlu0 %v3941
      %v3949 = vpop.xlane.xlu0 %3948
      %3950 = vadd.xlane.f32.xlu0 %v3942
      %v3951 = vpop.xlane.xlu0 %3950
      %3952 = vadd.xlane.f32.xlu0 %v3943
      %v3953 = vpop.xlane.xlu0 %3952
      %v3954 = vmul.f32 %v3949, 0.03125
      %v3955 = vmul.f32 %v3951, 0.03125
      %v3956 = vmul.f32 %v3953, 0.03125
      %v3957 = vmul.f32 %v3941, %v3941
      %v3958 = vmul.f32 %v3942, %v3942
      %v3959 = vmul.f32 %v3943, %v3943
      %3960 = vadd.xlane.f32.xlu0 %v3957
      %v3961 = vpop.xlane.xlu0 %3960
      %3962 = vadd.xlane.f32.xlu0 %v3958
      %v3963 = vpop.xlane.xlu0 %3962
      %3964 = vadd.xlane.f32.xlu0 %v3959
      %v3965 = vpop.xlane.xlu0 %3964
      %v3966 = vmul.f32 %v3961, 0.03125
      %v3967 = vmul.f32 %v3963, 0.03125
      %v3968 = vmul.f32 %v3965, 0.03125
      %v3969 = vmul.f32 %v3954, %v3954
      %v3970 = vmul.f32 %v3955, %v3955
      %v3971 = vmul.f32 %v3956, %v3956
      %v3972 = vsub.f32 %v3966, %v3969
      %v3973 = vsub.f32 %v3967, %v3970
      %v3974 = vsub.f32 %v3968, %v3971
      %v3975 = vsub.f32 %v3941, %v3954
      %v3976 = vsub.f32 %v3942, %v3955
      %v3977 = vsub.f32 %v3943, %v3956
      %v3978 = vadd.f32 %v3972, 1e-05
      %v3979 = vadd.f32 %v3973, 1e-05
      %v3980 = vadd.f32 %v3974, 1e-05
      %v3981 = vrsqrt.pop %v3978
      %v3982 = vrsqrt.pop %v3979
      %v3983 = vrsqrt.pop %v3980
      %v3984 = vmul.f32 %v3975, %v3981
      %v3985 = vmul.f32 %v3976, %v3982
      %v3986 = vmul.f32 %v3977, %v3983
      %v3988 = vlaneseq
      %v3989 = vshrl.u32 %v3988, 7
      %v3990 = vsub.s32 0, %v3989
      %v3991 = vrot.slane %v3945, %v3990
      %v3993 = vmul.f32 %v3984, %v3991
      %v3994 = vmul.f32 %v3985, %v3991
      %v3995 = vmul.f32 %v3986, %v3991
      %v3997 = vlaneseq
      %v3998 = vshrl.u32 %v3997, 7
      %v3999 = vsub.s32 0, %v3998
      %v4000 = vrot.slane %v3947, %v3999
      %v4002 = vadd.f32 %v3993, %v4000
      %v4003 = vadd.f32 %v3994, %v4000
      %v4004 = vadd.f32 %v3995, %v4000
      %s4005 = scalar_lea.vmem %s8, 128
      %v4006 = vld [vmem:[%s4005] sm:$0xff]
      %v4007 = vld [vmem:[%s4005 + $0x8] sm:$0xff]
      %v4008 = vld [vmem:[%s4005 + $0x10] sm:$0xff]
      %v4009 = vld [vmem:[%s4005 + $0x18] sm:$0xff]
      %v4010 = vld [vmem:[%s4005 + $0x20] sm:$0xff]
      %v4011 = vld [vmem:[%s4005 + $0x28] sm:$0xff]
      %v4012 = vld [vmem:[%s4005 + $0x30] sm:$0xff]
      %v4013 = vld [vmem:[%s4005 + $0x38] sm:$0xff]
      %v4014 = vld [vmem:[%s4005 + $0x40] sm:$0xff]
      %v4015 = vld [vmem:[%s4005 + $0x48] sm:$0xff]
      %v4016 = vld [vmem:[%s4005 + $0x50] sm:$0xff]
      %v4017 = vld [vmem:[%s4005 + $0x58] sm:$0xff]
      %v4018 = vld [vmem:[%s4005 + $0x60] sm:$0xff]
      %v4019 = vld [vmem:[%s4005 + $0x68] sm:$0xff]
      %v4020 = vld [vmem:[%s4005 + $0x70] sm:$0xff]
      %v4021 = vld [vmem:[%s4005 + $0x78] sm:$0xff]
      %s4022 = scalar_lea.vmem %s9, 1
      %v4023 = vld [vmem:[%s4022] sm:$0x1]
      %v4025 = vlaneseq
      %v4026 = vshrl.u32 %v4025, 7
      %v4027 = vsub.s32 0, %v4026
      %v4028 = vrot.slane %v4023, %v4027
      %4030 = vmatprep.subr.mxu0 0.0
      %4031 = vmatpush1.msra.mxu0 %v4006
      %4032 = vmatprep.subr.mxu0 0.0
      %4033 = vmatpush1.msra.mxu0 %v4007
      %4034 = vmatprep.subr.mxu0 0.0
      %4035 = vmatpush1.msra.mxu0 %v4008
      %4036 = vmatprep.subr.mxu0 0.0
      %4037 = vmatpush1.msra.mxu0 %v4009
      %4038 = vmatprep.subr.mxu0 0.0
      %4039 = vmatpush1.msra.mxu0 %v4010
      %4040 = vmatprep.subr.mxu0 0.0
      %4041 = vmatpush1.msra.mxu0 %v4011
      %4042 = vmatprep.subr.mxu0 0.0
      %4043 = vmatpush1.msra.mxu0 %v4012
      %4044 = vmatprep.subr.mxu0 0.0
      %4045 = vmatpush1.msra.mxu0 %v4013
      %4046 = vmatprep.subr.mxu0 0.0
      %4047 = vmatpush1.msra.mxu0 %v4014
      %4048 = vmatprep.subr.mxu0 0.0
      %4049 = vmatpush1.msra.mxu0 %v4015
      %4050 = vmatprep.subr.mxu0 0.0
      %4051 = vmatpush1.msra.mxu0 %v4016
      %4052 = vmatprep.subr.mxu0 0.0
      %4053 = vmatpush1.msra.mxu0 %v4017
      %4054 = vmatprep.subr.mxu0 0.0
      %4055 = vmatpush1.msra.mxu0 %v4018
      %4056 = vmatprep.subr.mxu0 0.0
      %4057 = vmatpush1.msra.mxu0 %v4019
      %4058 = vmatprep.subr.mxu0 0.0
      %4059 = vmatpush1.msra.mxu0 %v4020
      %4060 = vmatprep.subr.mxu0 0.0
      %4061 = vmatpush1.msra.mxu0 %v4021
      %4062 = vmatprep.subr.mxu0 0.0
      %4063 = vmatpush1.msra.mxu0 0.0
      %4064 = vmatprep.subr.mxu0 0.0
      %4065 = vmatpush1.msra.mxu0 0.0
      %4066 = vmatprep.subr.mxu0 0.0
      %4067 = vmatpush1.msra.mxu0 0.0
      %4068 = vmatprep.subr.mxu0 0.0
      %4069 = vmatpush1.msra.mxu0 0.0
      %4070 = vmatprep.subr.mxu0 0.0
      %4071 = vmatpush1.msra.mxu0 0.0
      %4072 = vmatprep.subr.mxu0 0.0
      %4073 = vmatpush1.msra.mxu0 0.0
      %4074 = vmatprep.subr.mxu0 0.0
      %4075 = vmatpush1.msra.mxu0 0.0
      %4076 = vmatprep.subr.mxu0 0.0
      %4077 = vmatpush1.msra.mxu0 0.0
      %4078 = vmatprep.subr.mxu0 0.0
      %4079 = vmatpush1.msra.mxu0 0.0
      %4080 = vmatprep.subr.mxu0 0.0
      %4081 = vmatpush1.msra.mxu0 0.0
      %4082 = vmatprep.subr.mxu0 0.0
      %4083 = vmatpush1.msra.mxu0 0.0
      %4084 = vmatprep.subr.mxu0 0.0
      %4085 = vmatpush1.msra.mxu0 0.0
      %4086 = vmatprep.subr.mxu0 0.0
      %4087 = vmatpush1.msra.mxu0 0.0
      %4088 = vmatprep.subr.mxu0 0.0
      %4089 = vmatpush1.msra.mxu0 0.0
      %4090 = vmatprep.subr.mxu0 0.0
      %4091 = vmatpush1.msra.mxu0 0.0
      %4092 = vmatprep.subr.mxu0 0.0
      %4093 = vmatpush1.msra.mxu0 0.0
      %4094 = vmatprep.mubr.f32.mxu0 0.0
      %4095 = vmatmul.mubr.f32.gmra.mrb[0].mxu0 %v4002
      %v4096 = vpop.f32.mrb[0].mxu0
      %v4097 = vadd.f32 %v4028, %v4096
      %v4098 = vpop.f32.mrb[0].mxu0
      %4099 = vmatprep.mubr.f32.mxu0 0.0
      %4100 = vmatmul.mubr.f32.gmra.mrb[0].mxu0 %v4003
      %v4101 = vpop.f32.mrb[0].mxu0
      %v4102 = vadd.f32 %v4028, %v4101
      %v4103 = vpop.f32.mrb[0].mxu0
      %4104 = vmatprep.mubr.f32.mxu0 0.0
      %4105 = vmatmul.mubr.f32.gmra.mrb[0].mxu0 %v4004
      %v4106 = vpop.f32.mrb[0].mxu0
      %v4107 = vadd.f32 %v4028, %v4106
      %v4108 = vpop.f32.mrb[0].mxu0
      %4109 = vdwg.mxu0
      %v4110 = vmax.f32 %v4097, 0.0
      %v4111 = vmax.f32 %v4102, 0.0
      %v4112 = vmax.f32 %v4107, 0.0
      %s4113 = scalar_lea.vmem %s10, 128
      %v4114 = vld [vmem:[%s4113] sm:$0xff]
      %v4115 = vld [vmem:[%s4113 + $0x8] sm:$0xff]
      %v4116 = vld [vmem:[%s4113 + $0x10] sm:$0xff]
      %v4117 = vld [vmem:[%s4113 + $0x18] sm:$0xff]
      %v4118 = vld [vmem:[%s4113 + $0x20] sm:$0xff]
      %v4119 = vld [vmem:[%s4113 + $0x28] sm:$0xff]
      %v4120 = vld [vmem:[%s4113 + $0x30] sm:$0xff]
      %v4121 = vld [vmem:[%s4113 + $0x38] sm:$0xff]
      %v4122 = vld [vmem:[%s4113 + $0x40] sm:$0xff]
      %v4123 = vld [vmem:[%s4113 + $0x48] sm:$0xff]
      %v4124 = vld [vmem:[%s4113 + $0x50] sm:$0xff]
      %v4125 = vld [vmem:[%s4113 + $0x58] sm:$0xff]
      %v4126 = vld [vmem:[%s4113 + $0x60] sm:$0xff]
      %v4127 = vld [vmem:[%s4113 + $0x68] sm:$0xff]
      %v4128 = vld [vmem:[%s4113 + $0x70] sm:$0xff]
      %v4129 = vld [vmem:[%s4113 + $0x78] sm:$0xff]
      %s4130 = scalar_lea.vmem %s11, 1
      %v4131 = vld [vmem:[%s4130] sm:$0x1]
      %v4133 = vlaneseq
      %v4134 = vshrl.u32 %v4133, 7
      %v4135 = vsub.s32 0, %v4134
      %v4136 = vrot.slane %v4131, %v4135
      %4138 = vmatprep.subr.mxu0 0.0
      %4139 = vmatpush1.msra.mxu0 %v4114
      %4140 = vmatprep.subr.mxu0 0.0
      %4141 = vmatpush1.msra.mxu0 %v4115
      %4142 = vmatprep.subr.mxu0 0.0
      %4143 = vmatpush1.msra.mxu0 %v4116
      %4144 = vmatprep.subr.mxu0 0.0
      %4145 = vmatpush1.msra.mxu0 %v4117
      %4146 = vmatprep.subr.mxu0 0.0
      %4147 = vmatpush1.msra.mxu0 %v4118
      %4148 = vmatprep.subr.mxu0 0.0
      %4149 = vmatpush1.msra.mxu0 %v4119
      %4150 = vmatprep.subr.mxu0 0.0
      %4151 = vmatpush1.msra.mxu0 %v4120
      %4152 = vmatprep.subr.mxu0 0.0
      %4153 = vmatpush1.msra.mxu0 %v4121
      %4154 = vmatprep.subr.mxu0 0.0
      %4155 = vmatpush1.msra.mxu0 %v4122
      %4156 = vmatprep.subr.mxu0 0.0
      %4157 = vmatpush1.msra.mxu0 %v4123
      %4158 = vmatprep.subr.mxu0 0.0
      %4159 = vmatpush1.msra.mxu0 %v4124
      %4160 = vmatprep.subr.mxu0 0.0
      %4161 = vmatpush1.msra.mxu0 %v4125
      %4162 = vmatprep.subr.mxu0 0.0
      %4163 = vmatpush1.msra.mxu0 %v4126
      %4164 = vmatprep.subr.mxu0 0.0
      %4165 = vmatpush1.msra.mxu0 %v4127
      %4166 = vmatprep.subr.mxu0 0.0
      %4167 = vmatpush1.msra.mxu0 %v4128
      %4168 = vmatprep.subr.mxu0 0.0
      %4169 = vmatpush1.msra.mxu0 %v4129
      %4170 = vmatprep.subr.mxu0 0.0
      %4171 = vmatpush1.msra.mxu0 0.0
      %4172 = vmatprep.subr.mxu0 0.0
      %4173 = vmatpush1.msra.mxu0 0.0
      %4174 = vmatprep.subr.mxu0 0.0
      %4175 = vmatpush1.msra.mxu0 0.0
      %4176 = vmatprep.subr.mxu0 0.0
      %4177 = vmatpush1.msra.mxu0 0.0
      %4178 = vmatprep.subr.mxu0 0.0
      %4179 = vmatpush1.msra.mxu0 0.0
      %4180 = vmatprep.subr.mxu0 0.0
      %4181 = vmatpush1.msra.mxu0 0.0
      %4182 = vmatprep.subr.mxu0 0.0
      %4183 = vmatpush1.msra.mxu0 0.0
      %4184 = vmatprep.subr.mxu0 0.0
      %4185 = vmatpush1.msra.mxu0 0.0
      %4186 = vmatprep.subr.mxu0 0.0
      %4187 = vmatpush1.msra.mxu0 0.0
      %4188 = vmatprep.subr.mxu0 0.0
      %4189 = vmatpush1.msra.mxu0 0.0
      %4190 = vmatprep.subr.mxu0 0.0
      %4191 = vmatpush1.msra.mxu0 0.0
      %4192 = vmatprep.subr.mxu0 0.0
      %4193 = vmatpush1.msra.mxu0 0.0
      %4194 = vmatprep.subr.mxu0 0.0
      %4195 = vmatpush1.msra.mxu0 0.0
      %4196 = vmatprep.subr.mxu0 0.0
      %4197 = vmatpush1.msra.mxu0 0.0
      %4198 = vmatprep.subr.mxu0 0.0
      %4199 = vmatpush1.msra.mxu0 0.0
      %4200 = vmatprep.subr.mxu0 0.0
      %4201 = vmatpush1.msra.mxu0 0.0
      %4202 = vmatprep.mubr.f32.mxu0 0.0
      %4203 = vmatmul.mubr.f32.gmra.mrb[0].mxu0 %v4110
      %v4204 = vpop.f32.mrb[0].mxu0
      %v4205 = vadd.f32 %v4136, %v4204
      %v4206 = vpop.f32.mrb[0].mxu0
      %4207 = vmatprep.mubr.f32.mxu0 0.0
      %4208 = vmatmul.mubr.f32.gmra.mrb[0].mxu0 %v4111
      %v4209 = vpop.f32.mrb[0].mxu0
      %v4210 = vadd.f32 %v4136, %v4209
      %v4211 = vpop.f32.mrb[0].mxu0
      %4212 = vmatprep.mubr.f32.mxu0 0.0
      %4213 = vmatmul.mubr.f32.gmra.mrb[0].mxu0 %v4112
      %v4214 = vpop.f32.mrb[0].mxu0
      %v4215 = vadd.f32 %v4136, %v4214
      %v4216 = vpop.f32.mrb[0].mxu0
      %4217 = vdwg.mxu0
      %v4218 = vadd.f32 %v4002, %v4205
      %v4219 = vadd.f32 %v4003, %v4210
      %v4220 = vadd.f32 %v4004, %v4215
      %s4221 = scalar_lea.vmem %s14, 1
      %v4222 = vld [vmem:[%s4221] sm:$0x1]
      %s4223 = scalar_lea.vmem %s15, 1
      %v4224 = vld [vmem:[%s4223] sm:$0x1]
      %4225 = vadd.xlane.f32.xlu0 %v4218
      %v4226 = vpop.xlane.xlu0 %4225
      %4227 = vadd.xlane.f32.xlu0 %v4219
      %v4228 = vpop.xlane.xlu0 %4227
      %4229 = vadd.xlane.f32.xlu0 %v4220
      %v4230 = vpop.xlane.xlu0 %4229
      %v4231 = vmul.f32 %v4226, 0.03125
      %v4232 = vmul.f32 %v4228, 0.03125
      %v4233 = vmul.f32 %v4230, 0.03125
      %v4234 = vmul.f32 %v4218, %v4218
      %v4235 = vmul.f32 %v4219, %v4219
      %v4236 = vmul.f32 %v4220, %v4220
      %4237 = vadd.xlane.f32.xlu0 %v4234
      %v4238 = vpop.xlane.xlu0 %4237
      %4239 = vadd.xlane.f32.xlu0 %v4235
      %v4240 = vpop.xlane.xlu0 %4239
      %4241 = vadd.xlane.f32.xlu0 %v4236
      %v4242 = vpop.xlane.xlu0 %4241
      %v4243 = vmul.f32 %v4238, 0.03125
      %v4244 = vmul.f32 %v4240, 0.03125
      %v4245 = vmul.f32 %v4242, 0.03125
      %v4246 = vmul.f32 %v4231, %v4231
      %v4247 = vmul.f32 %v4232, %v4232
      %v4248 = vmul.f32 %v4233, %v4233
      %v4249 = vsub.f32 %v4243, %v4246
      %v4250 = vsub.f32 %v4244, %v4247
      %v4251 = vsub.f32 %v4245, %v4248
      %v4252 = vsub.f32 %v4218, %v4231
      %v4253 = vsub.f32 %v4219, %v4232
      %v4254 = vsub.f32 %v4220, %v4233
      %v4255 = vadd.f32 %v4249, 1e-05
      %v4256 = vadd.f32 %v4250, 1e-05
      %v4257 = vadd.f32 %v4251, 1e-05
      %v4258 = vrsqrt.pop %v4255
      %v4259 = vrsqrt.pop %v4256
      %v4260 = vrsqrt.pop %v4257
      %v4261 = vmul.f32 %v4252, %v4258
      %v4262 = vmul.f32 %v4253, %v4259
      %v4263 = vmul.f32 %v4254, %v4260
      %v4265 = vlaneseq
      %v4266 = vshrl.u32 %v4265, 7
      %v4267 = vsub.s32 0, %v4266
      %v4268 = vrot.slane %v4222, %v4267
      %v4270 = vmul.f32 %v4261, %v4268
      %v4271 = vmul.f32 %v4262, %v4268
      %v4272 = vmul.f32 %v4263, %v4268
      %v4274 = vlaneseq
      %v4275 = vshrl.u32 %v4274, 7
      %v4276 = vsub.s32 0, %v4275
      %v4277 = vrot.slane %v4224, %v4276
      %v4279 = vadd.f32 %v4270, %v4277
      %v4280 = vadd.f32 %v4271, %v4277
      %v4281 = vadd.f32 %v4272, %v4277
      %4282 = vst [vmem:[%s555] sm:$0xff] %v4279
      %4283 = vst [vmem:[%s555 + $0x8] sm:$0xff] %v4280
      %4284 = vst [vmem:[%s555 + $0x10] sm:$0xff] %v4281
      %p4285 = scmp.lt.s32.totalorder %s27, 1
      %s4286 = scalar_select %p4285, %s27, 1
      %s4287 = smul.addr %s4286, 3
      %s4288 = smul.addr %s4287, 8
      %s4289 = scalar_lea.vmem %s16, %s4288
      // Predicated region
      $region85: #{cross_self_attention_forward.1} parent=83 // pred_check
        %p4290 = pneg %p396
      $region86: #{cross_self_attention_forward.1} parent=83 // pred_check_branch
        %4292 = sbr.rel (%p4290) target = $region88
      $region87: #{cross_self_attention_forward.1} parent=83 // pred_region
        _
      $region88: #{cross_self_attention_forward.1} parent=83 // pred_fallthru
        _
    $region84: #{cross_self_attention_forward.1} parent=5 // pred_fallthru
      _
    %p4293 = scmp.le.s32.totalorder 2, %s22
    // Predicated region
    $region89: #{cross_self_attention_forward.1} parent=5 // pred_check
      %p4294 = pneg %p4293
    $region90: #{cross_self_attention_forward.1} parent=5 // pred_check_branch
      %4296 = sbr.rel (%p4294) target = $region92
    $region91: #{cross_self_attention_forward.1} parent=5 // pred_region
      %s4297 = ssub.s32 %s22, 2
      // Predicated region
      $region93: #{cross_self_attention_forward.1} parent=91 // pred_check
        %p4298 = pneg %p402
      $region94: #{cross_self_attention_forward.1} parent=91 // pred_check_branch
        %4300 = sbr.rel (%p4298) target = $region96
      $region95: #{cross_self_attention_forward.1} parent=91 // pred_region
        %p4301 = scmp.lt.s32.totalorder %s28, 1
        %s4302 = scalar_select %p4301, %s28, 1
        %s4303 = smul.addr %s4302, 3
        %s4304 = smul.addr %s4303, 8
        %s4305 = scalar_lea.vmem %s16, %s4304
      $region96: #{cross_self_attention_forward.1} parent=91 // pred_fallthru
        _
    $region92: #{cross_self_attention_forward.1} parent=5 // pred_fallthru
      _
  $region6: #{cross_self_attention_forward.1} parent=0 // loop_footer
    %s26 = sadd.s32 1, %s22
  $region7: #{cross_self_attention_forward.1} parent=0 // loop_footer_branch
    %21 = sbr.rel target = $region3
  $region8: #{cross_self_attention_forward.1} parent=0 // loop_exit
    _

</llo_original>
